<compile_context>
chip_gen: v5e
topology: v5e:2x2
jax: 0.10.0
libtpu: 0.0.40
codegen_flags: <defaults>
</compile_context>

<pallas_src>
import math
import jax
import jax.numpy as jnp
from jax.experimental import pallas as pl
from jax.experimental.pallas import tpu as pltpu

_MIB = 1024 * 1024


def _round_up(x, m):
    return ((x + m - 1) // m) * m


def temporal_net_kernel(
    x_ref,                                    # (3, tb, in_dim)  bf16 stacked frames
    emb_w_ref, emb_b_ref,                     # (in_dim, F) bf16, (1, F) f32
    pw_wa_ref, pw_wb_ref, pw_b_ref,           # (F, 512) bf16 x2, (1, 512) f32
    cls_w12_ref, cls_w13_ref, cls_w23_ref, cls_b_ref,   # (512, NP) bf16 x3, (1, NP) f32
    out_ref,                                  # (tb, NP) f32
):
    f32 = jnp.float32
    nf, tb, in_dim = x_ref.shape
    act_dt = x_ref.dtype                      # bf16

    # ---- Embedding: ONE [3*tb, in_dim] @ [in_dim, F] matmul over stacked frames.
    # (3, tb, K) -> (3*tb, K) is a free sublane-merge when tb % 8 == 0.
    x_all = x_ref[...].reshape(nf * tb, in_dim)
    emb_b = emb_b_ref[...]                                   # hoisted bias load
    h = jnp.dot(x_all, emb_w_ref[...], preferred_element_type=f32) + emb_b
    o_all = jnp.maximum(h, 0.0).astype(act_dt)               # [3*tb, F]
    o1 = o_all[:tb]
    o2 = o_all[tb:2 * tb]
    o3 = o_all[2 * tb:]

    # ---- Pairwise via shared partial products: 4 matmuls, no row concats.
    # Linear(concat([a, b])) == a @ Wa + b @ Wb with the weight pre-split.
    wa = pw_wa_ref[...]
    wb = pw_wb_ref[...]
    pw_b = pw_b_ref[...]                                     # hoisted bias load
    qa1 = jnp.dot(o1, wa, preferred_element_type=f32)
    qa2 = jnp.dot(o2, wa, preferred_element_type=f32)
    qb2 = jnp.dot(o2, wb, preferred_element_type=f32)
    qb3 = jnp.dot(o3, wb, preferred_element_type=f32)
    p12 = jnp.maximum(qa1 + qb2 + pw_b, 0.0).astype(act_dt)
    p13 = jnp.maximum(qa1 + qb3 + pw_b, 0.0).astype(act_dt)
    p23 = jnp.maximum(qa2 + qb3 + pw_b, 0.0).astype(act_dt)

    # ---- Classifier: concat([p12,p13,p23]) @ W.T == sum of 3 matmuls.
    # (Dropout(p=0.5) is identity in eval mode.)
    logits = (jnp.dot(p12, cls_w12_ref[...], preferred_element_type=f32)
              + jnp.dot(p13, cls_w13_ref[...], preferred_element_type=f32)
              + jnp.dot(p23, cls_w23_ref[...], preferred_element_type=f32)
              + cls_b_ref[...])
    out_ref[...] = logits                     # lane-dense [tb, 128] f32 store


def make_params(key, in_dim, feature_size, img_len, lane_pad=128):
    """Parameters matching the PyTorch module's shapes (img_len == 3).

    pairwise: Linear(2F, 512); classifier: Linear(512*pair_num, factorial(C));
    both kaiming_uniform_ (note: bias init differs from PyTorch nn.Linear
    defaults; fine for a synthetic benchmark). The embedding net is a synthetic
    Linear(in_dim, F) + ReLU. Weights are stored pre-transposed
    [in_features, out_features], cast to bf16; biases stay f32.
    emb_w's K dim is zero-padded to a multiple of 128 (lane-dense DMA);
    classifier weights/bias are zero-padded to `lane_pad` output lanes.
    """
    assert img_len == 3, "kernel is specialized for img_len == 3"
    num_classes = math.factorial(img_len)
    pair_num = img_len * (img_len - 1) // 2
    n_pad = _round_up(num_classes, lane_pad)
    in_dim_p = _round_up(in_dim, 128)
    k = jax.random.split(key, 6)

    def kaiming_uniform(kk, fan_in, shape):
        bound = math.sqrt(6.0 / fan_in)
        return jax.random.uniform(kk, shape, jnp.float32, -bound, bound)

    # embedding net: [in_dim_p, F] (zero rows for padded K), bias [1, F]
    emb_w = kaiming_uniform(k[0], in_dim, (in_dim, feature_size))
    emb_w = jnp.pad(emb_w, ((0, in_dim_p - in_dim), (0, 0)))
    emb_b = kaiming_uniform(k[1], in_dim, (1, feature_size))

    # pairwise: Linear(2F, 512) stored transposed, split into the two halves
    pw_w = kaiming_uniform(k[2], 2 * feature_size, (2 * feature_size, 512))
    pw_b = kaiming_uniform(k[3], 2 * feature_size, (1, 512))
    pw_wa, pw_wb = pw_w[:feature_size], pw_w[feature_size:]

    # classifier: Linear(512*pair_num, num_classes), transposed, lane-padded
    cls_w = kaiming_uniform(k[4], 512 * pair_num, (512 * pair_num, num_classes))
    cls_b = kaiming_uniform(k[5], 512 * pair_num, (1, num_classes))
    cls_w = jnp.pad(cls_w, ((0, 0), (0, n_pad - num_classes)))
    cls_b = jnp.pad(cls_b, ((0, 0), (0, n_pad - num_classes)))
    cls_w12, cls_w13, cls_w23 = cls_w[:512], cls_w[512:1024], cls_w[1024:1536]

    bf16 = jnp.bfloat16
    return dict(
        emb_w=emb_w.astype(bf16), emb_b=emb_b,
        pw_wa=pw_wa.astype(bf16), pw_wb=pw_wb.astype(bf16), pw_b=pw_b,
        cls_w12=cls_w12.astype(bf16), cls_w13=cls_w13.astype(bf16),
        cls_w23=cls_w23.astype(bf16), cls_b=cls_b,
        num_classes=num_classes,
    )


def _weight_vmem_bytes(params):
    return int(
        params["emb_w"].size * 2 + params["emb_b"].size * 4
        + params["pw_wa"].size * 2 + params["pw_wb"].size * 2 + params["pw_b"].size * 4
        + 3 * params["cls_w12"].size * 2 + params["cls_b"].size * 4)


def _tile_vmem_bytes(rt, in_dim_p, F, NP, weight_bytes):
    # Conservative per-grid-step VMEM estimate (weights counted double-buffered
    # in case the Buffered(1) request is unavailable and we fall back).
    x_tile = 2 * (3 * rt * in_dim_p * 2)       # double-buffered bf16 stacked frames
    out_tile = 2 * (rt * NP * 4)               # double-buffered f32 logits
    interm = rt * (6 * F * 4 + 7 * 512 * 4 + NP * 4)   # generous f32 intermediates
    return 2 * weight_bytes + x_tile + out_tile + interm


def temporal_net(x1, x2, x3, params, *, row_tile=128,
                 vmem_tile_budget_bytes=48 * _MIB,
                 vmem_limit_bytes=56 * _MIB):
    """Fused TemporalNet forward.

    Defaults are sized for v7x's 64 MiB per-TensorCore VMEM (the "parallel"
    grid axis means EACH core holds its own resident-weight copy).  On v5e/v6e
    (128 MiB physical VMEM) raise vmem_tile_budget_bytes (~88 MiB),
    vmem_limit_bytes (~100 MiB) and row_tile (e.g. 256) for larger tiles.
    """
    B = x1.shape[0]
    bf16 = jnp.bfloat16

    in_dim_p = params["emb_w"].shape[0]        # lane-padded K (multiple of 128)
    F = params["emb_w"].shape[1]
    NP = params["cls_b"].shape[1]              # lane-padded classes (128)
    num_classes = params["num_classes"]
    weight_bytes = _weight_vmem_bytes(params)

    # Batch tile: big (MXU-filling), multiple of 8, clamped so tiny batches
    # aren't over-padded, and capped by the per-core VMEM budget. When
    # B > row_tile the grid automatically has >= 2 steps so DMA overlaps compute.
    rt = max(8, (min(int(row_tile), _round_up(B, 8)) // 8) * 8)
    while rt > 8 and _tile_vmem_bytes(rt, in_dim_p, F, NP, weight_bytes) > vmem_tile_budget_bytes:
        rt -= 8
    Bp = _round_up(B, rt)

    def prep(x):
        xf = x.reshape(B, -1).astype(bf16)
        pad_rows, pad_cols = Bp - B, in_dim_p - xf.shape[1]
        if pad_rows or pad_cols:
            xf = jnp.pad(xf, ((0, pad_rows), (0, pad_cols)))
        return xf

    # Single stacked activation array -> one input DMA stream per grid step.
    x_stacked = jnp.stack([prep(x1), prep(x2), prep(x3)], axis=0)   # [3, Bp, in_dim_p]

    grid = (Bp // rt,)
    flops = int(2 * 3 * Bp * in_dim_p * F          # embedding (one stacked matmul)
                + 4 * 2 * Bp * F * 512             # pairwise (4 shared-partial matmuls)
                + 3 * 2 * Bp * 512 * NP)           # classifier (3 matmuls)
    bytes_accessed = int(3 * Bp * in_dim_p * 2 + weight_bytes + Bp * NP * 4)
    cost = pl.CostEstimate(flops=flops, transcendentals=0,
                           bytes_accessed=bytes_accessed)

    def _run(single_buffer_weights):
        if single_buffer_weights:
            # Constant-index weights are DMA'd only once; request single
            # buffering so they don't reserve 2x their VMEM footprint.
            resident = lambda shape: pl.BlockSpec(shape, lambda i: (0, 0),
                                                  pipeline_mode=pl.Buffered(1))
        else:
            resident = lambda shape: pl.BlockSpec(shape, lambda i: (0, 0))

        return pl.pallas_call(
            temporal_net_kernel,
            out_shape=jax.ShapeDtypeStruct((Bp, NP), jnp.float32),
            grid=grid,
            in_specs=[
                pl.BlockSpec((3, rt, in_dim_p), lambda i: (0, i, 0)),   # stacked x
                resident((in_dim_p, F)),       # emb_w
                resident((1, F)),              # emb_b
                resident((F, 512)),            # pw_wa
                resident((F, 512)),            # pw_wb
                resident((1, 512)),            # pw_b
                resident((512, NP)),           # cls_w12
                resident((512, NP)),           # cls_w13
                resident((512, NP)),           # cls_w23
                resident((1, NP)),             # cls_b
            ],
            out_specs=pl.BlockSpec((rt, NP), lambda i: (i, 0)),
            compiler_params=pltpu.CompilerParams(
                dimension_semantics=("parallel",),
                vmem_limit_bytes=int(vmem_limit_bytes)),
            cost_estimate=cost,
        )(x_stacked,
          params["emb_w"], params["emb_b"],
          params["pw_wa"], params["pw_wb"], params["pw_b"],
          params["cls_w12"], params["cls_w13"], params["cls_w23"],
          params["cls_b"])

    try:
        out = _run(True)
    except Exception:
        # pipeline_mode=pl.Buffered(1) not supported by this jax/libtpu build;
        # fall back to default double-buffered resident weights.
        out = _run(False)

    return out[:B, :num_classes]


def temporal_net_ref(x1, x2, x3, params):
    """Pure-JAX reference with the same dtype policy / math as the kernel."""
    f32, bf16 = jnp.float32, jnp.bfloat16
    B = x1.shape[0]
    in_dim_p = params["emb_w"].shape[0]

    def emb(x):
        xf = x.reshape(B, -1).astype(bf16)
        xf = jnp.pad(xf, ((0, 0), (0, in_dim_p - xf.shape[1])))
        h = jnp.dot(xf, params["emb_w"], preferred_element_type=f32) + params["emb_b"]
        return jnp.maximum(h, 0.0).astype(bf16)

    o1, o2, o3 = emb(x1), emb(x2), emb(x3)

    qa1 = jnp.dot(o1, params["pw_wa"], preferred_element_type=f32)
    qa2 = jnp.dot(o2, params["pw_wa"], preferred_element_type=f32)
    qb2 = jnp.dot(o2, params["pw_wb"], preferred_element_type=f32)
    qb3 = jnp.dot(o3, params["pw_wb"], preferred_element_type=f32)
    relu_c = lambda v: jnp.maximum(v + params["pw_b"], 0.0).astype(bf16)
    p12, p13, p23 = relu_c(qa1 + qb2), relu_c(qa1 + qb3), relu_c(qa2 + qb3)

    logits = (jnp.dot(p12, params["cls_w12"], preferred_element_type=f32)
              + jnp.dot(p13, params["cls_w13"], preferred_element_type=f32)
              + jnp.dot(p23, params["cls_w23"], preferred_element_type=f32)
              + params["cls_b"])
    return logits[:, :params["num_classes"]]


if __name__ == "__main__":
    # small shapes: batch=2, channels=4, spatial=16x16, feature_size=32, img_len=3
    B, C, H, W = 2, 4, 16, 16
    feature_size, img_len = 32, 3
    in_dim = C * H * W

    key = jax.random.PRNGKey(0)
    kx1, kx2, kx3, kp = jax.random.split(key, 4)
    x1 = jax.random.normal(kx1, (B, C, H, W), jnp.float32)  # NCHW
    x2 = jax.random.normal(kx2, (B, C, H, W), jnp.float32)
    x3 = jax.random.normal(kx3, (B, C, H, W), jnp.float32)

    params = make_params(kp, in_dim, feature_size, img_len)

    out = temporal_net(x1, x2, x3, params)
    out = jax.block_until_ready(out)
    assert out.shape == (B, math.factorial(img_len))

    ref = jax.block_until_ready(temporal_net_ref(x1, x2, x3, params))
    assert jnp.allclose(out, ref, atol=5e-2, rtol=5e-2), (out, ref)

    print("KERNEL_OK")
</pallas_src>

<mosaic_0001>
module attributes {stable_mosaic.version = 11 : i64} {
  func.func @temporal_net_kernel(%arg0: i32, %arg1: memref<3x8x1024xbf16, #tpu.memory_space<vmem>>, %arg2: memref<1024x32xbf16, #tpu.memory_space<vmem>>, %arg3: memref<1x32xf32, #tpu.memory_space<vmem>>, %arg4: memref<32x512xbf16, #tpu.memory_space<vmem>>, %arg5: memref<32x512xbf16, #tpu.memory_space<vmem>>, %arg6: memref<1x512xf32, #tpu.memory_space<vmem>>, %arg7: memref<512x128xbf16, #tpu.memory_space<vmem>>, %arg8: memref<512x128xbf16, #tpu.memory_space<vmem>>, %arg9: memref<512x128xbf16, #tpu.memory_space<vmem>>, %arg10: memref<1x128xf32, #tpu.memory_space<vmem>>, %arg11: memref<8x128xf32, #tpu.memory_space<vmem>>) attributes {dimension_semantics = [#tpu.dimension_semantics<parallel>], iteration_bounds = array<i64: 1>, scalar_prefetch = 0 : i64, scratch_operands = 0 : i64, tpu.core_type = #tpu.core_type<tc>, window_params = [{transform_indices = @transform_0, window_bounds = array<i64: 3, 8, 1024>}, {pipeline_mode = #tpu.pipeline_mode<synchronous>, transform_indices = @transform_1, window_bounds = array<i64: 1024, 32>}, {pipeline_mode = #tpu.pipeline_mode<synchronous>, transform_indices = @transform_2, window_bounds = array<i64: 1, 32>}, {pipeline_mode = #tpu.pipeline_mode<synchronous>, transform_indices = @transform_3, window_bounds = array<i64: 32, 512>}, {pipeline_mode = #tpu.pipeline_mode<synchronous>, transform_indices = @transform_4, window_bounds = array<i64: 32, 512>}, {pipeline_mode = #tpu.pipeline_mode<synchronous>, transform_indices = @transform_5, window_bounds = array<i64: 1, 512>}, {pipeline_mode = #tpu.pipeline_mode<synchronous>, transform_indices = @transform_6, window_bounds = array<i64: 512, 128>}, {pipeline_mode = #tpu.pipeline_mode<synchronous>, transform_indices = @transform_7, window_bounds = array<i64: 512, 128>}, {pipeline_mode = #tpu.pipeline_mode<synchronous>, transform_indices = @transform_8, window_bounds = array<i64: 512, 128>}, {pipeline_mode = #tpu.pipeline_mode<synchronous>, transform_indices = @transform_9, window_bounds = array<i64: 1, 128>}, {transform_indices = @transform_10, window_bounds = array<i64: 8, 128>}]} {
    %c0 = arith.constant 0 : index
    %c0_0 = arith.constant 0 : index
    %c0_1 = arith.constant 0 : index
    %0 = vector.load %arg1[%c0, %c0_0, %c0_1] : memref<3x8x1024xbf16, #tpu.memory_space<vmem>>, vector<3x8x1024xbf16>
    %1 = vector.shape_cast %0 : vector<3x8x1024xbf16> to vector<24x1024xbf16>
    %c0_2 = arith.constant 0 : index
    %c0_3 = arith.constant 0 : index
    %2 = vector.load %arg3[%c0_2, %c0_3] : memref<1x32xf32, #tpu.memory_space<vmem>>, vector<1x32xf32>
    %c0_4 = arith.constant 0 : index
    %c0_5 = arith.constant 0 : index
    %3 = vector.load %arg2[%c0_4, %c0_5] : memref<1024x32xbf16, #tpu.memory_space<vmem>>, vector<1024x32xbf16>
    %cst = arith.constant dense<0.000000e+00> : vector<24x32xf32>
    %4 = tpu.matmul %1, %3, %cst {dimension_numbers = #tpu.dot_dimension_numbers<[1], [0], [0], [1], [0, 0, 1, 1], [], []>} : vector<24x1024xbf16>, vector<1024x32xbf16>, vector<24x32xf32> -> vector<24x32xf32>
    %5 = vector.broadcast %2 : vector<1x32xf32> to vector<24x32xf32>
    %6 = arith.addf %4, %5 : vector<24x32xf32>
    %cst_6 = arith.constant 0.000000e+00 : f32
    %7 = vector.broadcast %cst_6 : f32 to vector<24x32xf32>
    %8 = arith.maximumf %6, %7 : vector<24x32xf32>
    %9 = arith.truncf %8 : vector<24x32xf32> to vector<24x32xbf16>
    %10 = vector.extract_strided_slice %9 {offsets = [0, 0], sizes = [8, 32], strides = [1, 1]} : vector<24x32xbf16> to vector<8x32xbf16>
    %11 = vector.extract_strided_slice %9 {offsets = [8, 0], sizes = [8, 32], strides = [1, 1]} : vector<24x32xbf16> to vector<8x32xbf16>
    %12 = vector.extract_strided_slice %9 {offsets = [16, 0], sizes = [8, 32], strides = [1, 1]} : vector<24x32xbf16> to vector<8x32xbf16>
    %c0_7 = arith.constant 0 : index
    %c0_8 = arith.constant 0 : index
    %13 = vector.load %arg4[%c0_7, %c0_8] : memref<32x512xbf16, #tpu.memory_space<vmem>>, vector<32x512xbf16>
    %c0_9 = arith.constant 0 : index
    %c0_10 = arith.constant 0 : index
    %14 = vector.load %arg5[%c0_9, %c0_10] : memref<32x512xbf16, #tpu.memory_space<vmem>>, vector<32x512xbf16>
    %c0_11 = arith.constant 0 : index
    %c0_12 = arith.constant 0 : index
    %15 = vector.load %arg6[%c0_11, %c0_12] : memref<1x512xf32, #tpu.memory_space<vmem>>, vector<1x512xf32>
    %cst_13 = arith.constant dense<0.000000e+00> : vector<8x512xf32>
    %16 = tpu.matmul %10, %13, %cst_13 {dimension_numbers = #tpu.dot_dimension_numbers<[1], [0], [0], [1], [0, 0, 1, 1], [], []>} : vector<8x32xbf16>, vector<32x512xbf16>, vector<8x512xf32> -> vector<8x512xf32>
    %cst_14 = arith.constant dense<0.000000e+00> : vector<8x512xf32>
    %17 = tpu.matmul %11, %13, %cst_14 {dimension_numbers = #tpu.dot_dimension_numbers<[1], [0], [0], [1], [0, 0, 1, 1], [], []>} : vector<8x32xbf16>, vector<32x512xbf16>, vector<8x512xf32> -> vector<8x512xf32>
    %cst_15 = arith.constant dense<0.000000e+00> : vector<8x512xf32>
    %18 = tpu.matmul %11, %14, %cst_15 {dimension_numbers = #tpu.dot_dimension_numbers<[1], [0], [0], [1], [0, 0, 1, 1], [], []>} : vector<8x32xbf16>, vector<32x512xbf16>, vector<8x512xf32> -> vector<8x512xf32>
    %cst_16 = arith.constant dense<0.000000e+00> : vector<8x512xf32>
    %19 = tpu.matmul %12, %14, %cst_16 {dimension_numbers = #tpu.dot_dimension_numbers<[1], [0], [0], [1], [0, 0, 1, 1], [], []>} : vector<8x32xbf16>, vector<32x512xbf16>, vector<8x512xf32> -> vector<8x512xf32>
    %20 = arith.addf %16, %18 : vector<8x512xf32>
    %21 = vector.broadcast %15 : vector<1x512xf32> to vector<8x512xf32>
    %22 = arith.addf %20, %21 : vector<8x512xf32>
    %cst_17 = arith.constant 0.000000e+00 : f32
    %23 = vector.broadcast %cst_17 : f32 to vector<8x512xf32>
    %24 = arith.maximumf %22, %23 : vector<8x512xf32>
    %25 = arith.truncf %24 : vector<8x512xf32> to vector<8x512xbf16>
    %26 = arith.addf %16, %19 : vector<8x512xf32>
    %27 = vector.broadcast %15 : vector<1x512xf32> to vector<8x512xf32>
    %28 = arith.addf %26, %27 : vector<8x512xf32>
    %cst_18 = arith.constant 0.000000e+00 : f32
    %29 = vector.broadcast %cst_18 : f32 to vector<8x512xf32>
    %30 = arith.maximumf %28, %29 : vector<8x512xf32>
    %31 = arith.truncf %30 : vector<8x512xf32> to vector<8x512xbf16>
    %32 = arith.addf %17, %19 : vector<8x512xf32>
    %33 = vector.broadcast %15 : vector<1x512xf32> to vector<8x512xf32>
    %34 = arith.addf %32, %33 : vector<8x512xf32>
    %cst_19 = arith.constant 0.000000e+00 : f32
    %35 = vector.broadcast %cst_19 : f32 to vector<8x512xf32>
    %36 = arith.maximumf %34, %35 : vector<8x512xf32>
    %37 = arith.truncf %36 : vector<8x512xf32> to vector<8x512xbf16>
    %c0_20 = arith.constant 0 : index
    %c0_21 = arith.constant 0 : index
    %38 = vector.load %arg7[%c0_20, %c0_21] : memref<512x128xbf16, #tpu.memory_space<vmem>>, vector<512x128xbf16>
    %cst_22 = arith.constant dense<0.000000e+00> : vector<8x128xf32>
    %39 = tpu.matmul %25, %38, %cst_22 {dimension_numbers = #tpu.dot_dimension_numbers<[1], [0], [0], [1], [0, 0, 1, 1], [], []>} : vector<8x512xbf16>, vector<512x128xbf16>, vector<8x128xf32> -> vector<8x128xf32>
    %c0_23 = arith.constant 0 : index
    %c0_24 = arith.constant 0 : index
    %40 = vector.load %arg8[%c0_23, %c0_24] : memref<512x128xbf16, #tpu.memory_space<vmem>>, vector<512x128xbf16>
    %cst_25 = arith.constant dense<0.000000e+00> : vector<8x128xf32>
    %41 = tpu.matmul %31, %40, %cst_25 {dimension_numbers = #tpu.dot_dimension_numbers<[1], [0], [0], [1], [0, 0, 1, 1], [], []>} : vector<8x512xbf16>, vector<512x128xbf16>, vector<8x128xf32> -> vector<8x128xf32>
    %42 = arith.addf %39, %41 : vector<8x128xf32>
    %c0_26 = arith.constant 0 : index
    %c0_27 = arith.constant 0 : index
    %43 = vector.load %arg9[%c0_26, %c0_27] : memref<512x128xbf16, #tpu.memory_space<vmem>>, vector<512x128xbf16>
    %cst_28 = arith.constant dense<0.000000e+00> : vector<8x128xf32>
    %44 = tpu.matmul %37, %43, %cst_28 {dimension_numbers = #tpu.dot_dimension_numbers<[1], [0], [0], [1], [0, 0, 1, 1], [], []>} : vector<8x512xbf16>, vector<512x128xbf16>, vector<8x128xf32> -> vector<8x128xf32>
    %45 = arith.addf %42, %44 : vector<8x128xf32>
    %c0_29 = arith.constant 0 : index
    %c0_30 = arith.constant 0 : index
    %46 = vector.load %arg10[%c0_29, %c0_30] : memref<1x128xf32, #tpu.memory_space<vmem>>, vector<1x128xf32>
    %47 = vector.broadcast %46 : vector<1x128xf32> to vector<8x128xf32>
    %48 = arith.addf %45, %47 : vector<8x128xf32>
    %c0_31 = arith.constant 0 : index
    %c0_32 = arith.constant 0 : index
    %49 = vector.load %arg11[%c0_31, %c0_32] : memref<8x128xf32, #tpu.memory_space<vmem>>, vector<8x128xf32>
    tpu.vector_store %arg11[%c0_31, %c0_32], %48 {strides = array<i32>} : memref<8x128xf32, #tpu.memory_space<vmem>>, vector<8x128xf32>,
    return
  }
  func.func @transform_0(%arg0: i32) -> (i32, i32, i32) {
    %c0_i32 = arith.constant 0 : i32
    %c0_i32_0 = arith.constant 0 : i32
    %c0_i32_1 = arith.constant 0 : i32
    return %c0_i32, %arg0, %c0_i32_0 : i32, i32, i32
  }
  func.func @transform_1(%arg0: i32) -> (i32, i32) {
    %c0_i32 = arith.constant 0 : i32
    %c0_i32_0 = arith.constant 0 : i32
    %c0_i32_1 = arith.constant 0 : i32
    return %c0_i32, %c0_i32_0 : i32, i32
  }
  func.func @transform_2(%arg0: i32) -> (i32, i32) {
    %c0_i32 = arith.constant 0 : i32
    %c0_i32_0 = arith.constant 0 : i32
    %c0_i32_1 = arith.constant 0 : i32
    return %c0_i32, %c0_i32_0 : i32, i32
  }
  func.func @transform_3(%arg0: i32) -> (i32, i32) {
    %c0_i32 = arith.constant 0 : i32
    %c0_i32_0 = arith.constant 0 : i32
    %c0_i32_1 = arith.constant 0 : i32
    return %c0_i32, %c0_i32_0 : i32, i32
  }
  func.func @transform_4(%arg0: i32) -> (i32, i32) {
    %c0_i32 = arith.constant 0 : i32
    %c0_i32_0 = arith.constant 0 : i32
    %c0_i32_1 = arith.constant 0 : i32
    return %c0_i32, %c0_i32_0 : i32, i32
  }
  func.func @transform_5(%arg0: i32) -> (i32, i32) {
    %c0_i32 = arith.constant 0 : i32
    %c0_i32_0 = arith.constant 0 : i32
    %c0_i32_1 = arith.constant 0 : i32
    return %c0_i32, %c0_i32_0 : i32, i32
  }
  func.func @transform_6(%arg0: i32) -> (i32, i32) {
    %c0_i32 = arith.constant 0 : i32
    %c0_i32_0 = arith.constant 0 : i32
    %c0_i32_1 = arith.constant 0 : i32
    return %c0_i32, %c0_i32_0 : i32, i32
  }
  func.func @transform_7(%arg0: i32) -> (i32, i32) {
    %c0_i32 = arith.constant 0 : i32
    %c0_i32_0 = arith.constant 0 : i32
    %c0_i32_1 = arith.constant 0 : i32
    return %c0_i32, %c0_i32_0 : i32, i32
  }
  func.func @transform_8(%arg0: i32) -> (i32, i32) {
    %c0_i32 = arith.constant 0 : i32
    %c0_i32_0 = arith.constant 0 : i32
    %c0_i32_1 = arith.constant 0 : i32
    return %c0_i32, %c0_i32_0 : i32, i32
  }
  func.func @transform_9(%arg0: i32) -> (i32, i32) {
    %c0_i32 = arith.constant 0 : i32
    %c0_i32_0 = arith.constant 0 : i32
    %c0_i32_1 = arith.constant 0 : i32
    return %c0_i32, %c0_i32_0 : i32, i32
  }
  func.func @transform_10(%arg0: i32) -> (i32, i32) {
    %c0_i32 = arith.constant 0 : i32
    %c0_i32_0 = arith.constant 0 : i32
    return %arg0, %c0_i32 : i32, i32
  }
}

module attributes {stable_mosaic.version = 11 : i64} {
  func.func @temporal_net_kernel(%arg0: i32, %arg1: memref<3x8x1024xbf16, #tpu.memory_space<vmem>>, %arg2: memref<1024x32xbf16, #tpu.memory_space<vmem>>, %arg3: memref<1x32xf32, #tpu.memory_space<vmem>>, %arg4: memref<32x512xbf16, #tpu.memory_space<vmem>>, %arg5: memref<32x512xbf16, #tpu.memory_space<vmem>>, %arg6: memref<1x512xf32, #tpu.memory_space<vmem>>, %arg7: memref<512x128xbf16, #tpu.memory_space<vmem>>, %arg8: memref<512x128xbf16, #tpu.memory_space<vmem>>, %arg9: memref<512x128xbf16, #tpu.memory_space<vmem>>, %arg10: memref<1x128xf32, #tpu.memory_space<vmem>>, %arg11: memref<8x128xf32, #tpu.memory_space<vmem>>) attributes {dimension_semantics = [#tpu.dimension_semantics<parallel>], iteration_bounds = array<i64: 1>, scalar_prefetch = 0 : i64, scratch_operands = 0 : i64, tpu.core_type = #tpu.core_type<tc>, window_params = [{transform_indices = @transform_0, window_bounds = array<i64: 3, 8, 1024>}, {pipeline_mode = #tpu.pipeline_mode<synchronous>, transform_indices = @transform_1, window_bounds = array<i64: 1024, 32>}, {pipeline_mode = #tpu.pipeline_mode<synchronous>, transform_indices = @transform_2, window_bounds = array<i64: 1, 32>}, {pipeline_mode = #tpu.pipeline_mode<synchronous>, transform_indices = @transform_3, window_bounds = array<i64: 32, 512>}, {pipeline_mode = #tpu.pipeline_mode<synchronous>, transform_indices = @transform_4, window_bounds = array<i64: 32, 512>}, {pipeline_mode = #tpu.pipeline_mode<synchronous>, transform_indices = @transform_5, window_bounds = array<i64: 1, 512>}, {pipeline_mode = #tpu.pipeline_mode<synchronous>, transform_indices = @transform_6, window_bounds = array<i64: 512, 128>}, {pipeline_mode = #tpu.pipeline_mode<synchronous>, transform_indices = @transform_7, window_bounds = array<i64: 512, 128>}, {pipeline_mode = #tpu.pipeline_mode<synchronous>, transform_indices = @transform_8, window_bounds = array<i64: 512, 128>}, {pipeline_mode = #tpu.pipeline_mode<synchronous>, transform_indices = @transform_9, window_bounds = array<i64: 1, 128>}, {transform_indices = @transform_10, window_bounds = array<i64: 8, 128>}]} {
    %c0 = arith.constant 0 : index
    %c0_0 = arith.constant 0 : index
    %c0_1 = arith.constant 0 : index
    %0 = vector.load %arg1[%c0, %c0_0, %c0_1] : memref<3x8x1024xbf16, #tpu.memory_space<vmem>>, vector<3x8x1024xbf16>
    %1 = vector.shape_cast %0 : vector<3x8x1024xbf16> to vector<24x1024xbf16>
    %c0_2 = arith.constant 0 : index
    %c0_3 = arith.constant 0 : index
    %2 = vector.load %arg3[%c0_2, %c0_3] : memref<1x32xf32, #tpu.memory_space<vmem>>, vector<1x32xf32>
    %c0_4 = arith.constant 0 : index
    %c0_5 = arith.constant 0 : index
    %3 = vector.load %arg2[%c0_4, %c0_5] : memref<1024x32xbf16, #tpu.memory_space<vmem>>, vector<1024x32xbf16>
    %cst = arith.constant dense<0.000000e+00> : vector<24x32xf32>
    %4 = tpu.matmul %1, %3, %cst {dimension_numbers = #tpu.dot_dimension_numbers<[1], [0], [0], [1], [0, 0, 1, 1], [], []>} : vector<24x1024xbf16>, vector<1024x32xbf16>, vector<24x32xf32> -> vector<24x32xf32>
    %5 = vector.broadcast %2 : vector<1x32xf32> to vector<24x32xf32>
    %6 = arith.addf %4, %5 : vector<24x32xf32>
    %cst_6 = arith.constant 0.000000e+00 : f32
    %7 = vector.broadcast %cst_6 : f32 to vector<24x32xf32>
    %8 = arith.maximumf %6, %7 : vector<24x32xf32>
    %9 = arith.truncf %8 : vector<24x32xf32> to vector<24x32xbf16>
    %10 = vector.extract_strided_slice %9 {offsets = [0, 0], sizes = [8, 32], strides = [1, 1]} : vector<24x32xbf16> to vector<8x32xbf16>
    %11 = vector.extract_strided_slice %9 {offsets = [8, 0], sizes = [8, 32], strides = [1, 1]} : vector<24x32xbf16> to vector<8x32xbf16>
    %12 = vector.extract_strided_slice %9 {offsets = [16, 0], sizes = [8, 32], strides = [1, 1]} : vector<24x32xbf16> to vector<8x32xbf16>
    %c0_7 = arith.constant 0 : index
    %c0_8 = arith.constant 0 : index
    %13 = vector.load %arg4[%c0_7, %c0_8] : memref<32x512xbf16, #tpu.memory_space<vmem>>, vector<32x512xbf16>
    %c0_9 = arith.constant 0 : index
    %c0_10 = arith.constant 0 : index
    %14 = vector.load %arg5[%c0_9, %c0_10] : memref<32x512xbf16, #tpu.memory_space<vmem>>, vector<32x512xbf16>
    %c0_11 = arith.constant 0 : index
    %c0_12 = arith.constant 0 : index
    %15 = vector.load %arg6[%c0_11, %c0_12] : memref<1x512xf32, #tpu.memory_space<vmem>>, vector<1x512xf32>
    %cst_13 = arith.constant dense<0.000000e+00> : vector<8x512xf32>
    %16 = tpu.matmul %10, %13, %cst_13 {dimension_numbers = #tpu.dot_dimension_numbers<[1], [0], [0], [1], [0, 0, 1, 1], [], []>} : vector<8x32xbf16>, vector<32x512xbf16>, vector<8x512xf32> -> vector<8x512xf32>
    %cst_14 = arith.constant dense<0.000000e+00> : vector<8x512xf32>
    %17 = tpu.matmul %11, %13, %cst_14 {dimension_numbers = #tpu.dot_dimension_numbers<[1], [0], [0], [1], [0, 0, 1, 1], [], []>} : vector<8x32xbf16>, vector<32x512xbf16>, vector<8x512xf32> -> vector<8x512xf32>
    %cst_15 = arith.constant dense<0.000000e+00> : vector<8x512xf32>
    %18 = tpu.matmul %11, %14, %cst_15 {dimension_numbers = #tpu.dot_dimension_numbers<[1], [0], [0], [1], [0, 0, 1, 1], [], []>} : vector<8x32xbf16>, vector<32x512xbf16>, vector<8x512xf32> -> vector<8x512xf32>
    %cst_16 = arith.constant dense<0.000000e+00> : vector<8x512xf32>
    %19 = tpu.matmul %12, %14, %cst_16 {dimension_numbers = #tpu.dot_dimension_numbers<[1], [0], [0], [1], [0, 0, 1, 1], [], []>} : vector<8x32xbf16>, vector<32x512xbf16>, vector<8x512xf32> -> vector<8x512xf32>
    %20 = arith.addf %16, %18 : vector<8x512xf32>
    %21 = vector.broadcast %15 : vector<1x512xf32> to vector<8x512xf32>
    %22 = arith.addf %20, %21 : vector<8x512xf32>
    %cst_17 = arith.constant 0.000000e+00 : f32
    %23 = vector.broadcast %cst_17 : f32 to vector<8x512xf32>
    %24 = arith.maximumf %22, %23 : vector<8x512xf32>
    %25 = arith.truncf %24 : vector<8x512xf32> to vector<8x512xbf16>
    %26 = arith.addf %16, %19 : vector<8x512xf32>
    %27 = vector.broadcast %15 : vector<1x512xf32> to vector<8x512xf32>
    %28 = arith.addf %26, %27 : vector<8x512xf32>
    %cst_18 = arith.constant 0.000000e+00 : f32
    %29 = vector.broadcast %cst_18 : f32 to vector<8x512xf32>
    %30 = arith.maximumf %28, %29 : vector<8x512xf32>
    %31 = arith.truncf %30 : vector<8x512xf32> to vector<8x512xbf16>
    %32 = arith.addf %17, %19 : vector<8x512xf32>
    %33 = vector.broadcast %15 : vector<1x512xf32> to vector<8x512xf32>
    %34 = arith.addf %32, %33 : vector<8x512xf32>
    %cst_19 = arith.constant 0.000000e+00 : f32
    %35 = vector.broadcast %cst_19 : f32 to vector<8x512xf32>
    %36 = arith.maximumf %34, %35 : vector<8x512xf32>
    %37 = arith.truncf %36 : vector<8x512xf32> to vector<8x512xbf16>
    %c0_20 = arith.constant 0 : index
    %c0_21 = arith.constant 0 : index
    %38 = vector.load %arg7[%c0_20, %c0_21] : memref<512x128xbf16, #tpu.memory_space<vmem>>, vector<512x128xbf16>
    %cst_22 = arith.constant dense<0.000000e+00> : vector<8x128xf32>
    %39 = tpu.matmul %25, %38, %cst_22 {dimension_numbers = #tpu.dot_dimension_numbers<[1], [0], [0], [1], [0, 0, 1, 1], [], []>} : vector<8x512xbf16>, vector<512x128xbf16>, vector<8x128xf32> -> vector<8x128xf32>
    %c0_23 = arith.constant 0 : index
    %c0_24 = arith.constant 0 : index
    %40 = vector.load %arg8[%c0_23, %c0_24] : memref<512x128xbf16, #tpu.memory_space<vmem>>, vector<512x128xbf16>
    %cst_25 = arith.constant dense<0.000000e+00> : vector<8x128xf32>
    %41 = tpu.matmul %31, %40, %cst_25 {dimension_numbers = #tpu.dot_dimension_numbers<[1], [0], [0], [1], [0, 0, 1, 1], [], []>} : vector<8x512xbf16>, vector<512x128xbf16>, vector<8x128xf32> -> vector<8x128xf32>
    %42 = arith.addf %39, %41 : vector<8x128xf32>
    %c0_26 = arith.constant 0 : index
    %c0_27 = arith.constant 0 : index
    %43 = vector.load %arg9[%c0_26, %c0_27] : memref<512x128xbf16, #tpu.memory_space<vmem>>, vector<512x128xbf16>
    %cst_28 = arith.constant dense<0.000000e+00> : vector<8x128xf32>
    %44 = tpu.matmul %37, %43, %cst_28 {dimension_numbers = #tpu.dot_dimension_numbers<[1], [0], [0], [1], [0, 0, 1, 1], [], []>} : vector<8x512xbf16>, vector<512x128xbf16>, vector<8x128xf32> -> vector<8x128xf32>
    %45 = arith.addf %42, %44 : vector<8x128xf32>
    %c0_29 = arith.constant 0 : index
    %c0_30 = arith.constant 0 : index
    %46 = vector.load %arg10[%c0_29, %c0_30] : memref<1x128xf32, #tpu.memory_space<vmem>>, vector<1x128xf32>
    %47 = vector.broadcast %46 : vector<1x128xf32> to vector<8x128xf32>
    %48 = arith.addf %45, %47 : vector<8x128xf32>
    %c0_31 = arith.constant 0 : index
    %c0_32 = arith.constant 0 : index
    %49 = vector.load %arg11[%c0_31, %c0_32] : memref<8x128xf32, #tpu.memory_space<vmem>>, vector<8x128xf32>
    tpu.vector_store %arg11[%c0_31, %c0_32], %48 {strides = array<i32>} : memref<8x128xf32, #tpu.memory_space<vmem>>, vector<8x128xf32>,
    return
  }
  func.func @transform_0(%arg0: i32) -> (i32, i32, i32) {
    %c0_i32 = arith.constant 0 : i32
    %c0_i32_0 = arith.constant 0 : i32
    %c0_i32_1 = arith.constant 0 : i32
    return %c0_i32, %arg0, %c0_i32_0 : i32, i32, i32
  }
  func.func @transform_1(%arg0: i32) -> (i32, i32) {
    %c0_i32 = arith.constant 0 : i32
    %c0_i32_0 = arith.constant 0 : i32
    %c0_i32_1 = arith.constant 0 : i32
    return %c0_i32, %c0_i32_0 : i32, i32
  }
  func.func @transform_2(%arg0: i32) -> (i32, i32) {
    %c0_i32 = arith.constant 0 : i32
    %c0_i32_0 = arith.constant 0 : i32
    %c0_i32_1 = arith.constant 0 : i32
    return %c0_i32, %c0_i32_0 : i32, i32
  }
  func.func @transform_3(%arg0: i32) -> (i32, i32) {
    %c0_i32 = arith.constant 0 : i32
    %c0_i32_0 = arith.constant 0 : i32
    %c0_i32_1 = arith.constant 0 : i32
    return %c0_i32, %c0_i32_0 : i32, i32
  }
  func.func @transform_4(%arg0: i32) -> (i32, i32) {
    %c0_i32 = arith.constant 0 : i32
    %c0_i32_0 = arith.constant 0 : i32
    %c0_i32_1 = arith.constant 0 : i32
    return %c0_i32, %c0_i32_0 : i32, i32
  }
  func.func @transform_5(%arg0: i32) -> (i32, i32) {
    %c0_i32 = arith.constant 0 : i32
    %c0_i32_0 = arith.constant 0 : i32
    %c0_i32_1 = arith.constant 0 : i32
    return %c0_i32, %c0_i32_0 : i32, i32
  }
  func.func @transform_6(%arg0: i32) -> (i32, i32) {
    %c0_i32 = arith.constant 0 : i32
    %c0_i32_0 = arith.constant 0 : i32
    %c0_i32_1 = arith.constant 0 : i32
    return %c0_i32, %c0_i32_0 : i32, i32
  }
  func.func @transform_7(%arg0: i32) -> (i32, i32) {
    %c0_i32 = arith.constant 0 : i32
    %c0_i32_0 = arith.constant 0 : i32
    %c0_i32_1 = arith.constant 0 : i32
    return %c0_i32, %c0_i32_0 : i32, i32
  }
  func.func @transform_8(%arg0: i32) -> (i32, i32) {
    %c0_i32 = arith.constant 0 : i32
    %c0_i32_0 = arith.constant 0 : i32
    %c0_i32_1 = arith.constant 0 : i32
    return %c0_i32, %c0_i32_0 : i32, i32
  }
  func.func @transform_9(%arg0: i32) -> (i32, i32) {
    %c0_i32 = arith.constant 0 : i32
    %c0_i32_0 = arith.constant 0 : i32
    %c0_i32_1 = arith.constant 0 : i32
    return %c0_i32, %c0_i32_0 : i32, i32
  }
  func.func @transform_10(%arg0: i32) -> (i32, i32) {
    %c0_i32 = arith.constant 0 : i32
    %c0_i32_0 = arith.constant 0 : i32
    return %arg0, %c0_i32 : i32, i32
  }
}

</mosaic_0001>

<llo_original>
// kernel: tpu_custom_call.1
$region0: #{tpu_custom_call.1}
  #allocation0 [shape = 'u32[]', space=smem, size = 0x4, offset = 0x4, fixed_abs, tag = 'smem constant byte address 0x4 - core index']
  #allocation1 [shape = 'u32[72,128]{1,0:T(1,128)}', space=vmem, size = 0x9000, scoped, tag = 'internal scratch']
  %s0 = inlined_call_operand.vmem [shape: bf16[3,8,1024], index: 0, kind: input, shape index: {}]
  %s1 = inlined_call_operand.vmem [shape: bf16[1024,32], index: 1, kind: input, shape index: {}]
  %s2 = inlined_call_operand.vmem [shape: f32[1,32], index: 2, kind: input, shape index: {}]
  %s3 = inlined_call_operand.hbm [shape: bf16[32,512], index: 3, kind: input, shape index: {}]
  %s4 = inlined_call_operand.hbm [shape: bf16[32,512], index: 4, kind: input, shape index: {}]
  %s5 = inlined_call_operand.vmem [shape: f32[1,512], index: 5, kind: input, shape index: {}]
  %s6 = inlined_call_operand.vmem [shape: bf16[512,128], index: 6, kind: input, shape index: {}]
  %s7 = inlined_call_operand.vmem [shape: bf16[512,128], index: 7, kind: input, shape index: {}]
  %s8 = inlined_call_operand.hbm [shape: bf16[512,128], index: 8, kind: input, shape index: {}]
  %s9 = inlined_call_operand.vmem [shape: f32[1,128], index: 9, kind: input, shape index: {}]
  %s10 = inlined_call_operand.hbm [shape: f32[8,128], index: 10, kind: output, shape index: {}]
  %s11 = sld [smem:[#allocation0]]
  $region62: #{tpu_custom_call.1} parent=0
    _
  %s13 = ssub.s32 1, %s11
  %s14 = scalar_select 0, %s13, %s11
  $region1: #{tpu_custom_call.1} parent=0
    #allocation2 [shape = 'u8[32768]{0}', space=vmem, size = 0x8000, scoped, tag = 'input window, operand 3, single buffered']
    #allocation3 [shape = 's32[1]{0}', space=sflag, size = 0x4, scoped, tag = 'scoped memory for tpu_custom_call.1']
    #allocation4 [shape = 's32[1]{0}', space=sflag, size = 0x4, scoped, tag = 'scoped memory for tpu_custom_call.1']
    #allocation5 [shape = 'u8[32768]{0}', space=vmem, size = 0x8000, scoped, tag = 'input window, operand 4, single buffered']
    #allocation6 [shape = 's32[1]{0}', space=sflag, size = 0x4, scoped, tag = 'scoped memory for tpu_custom_call.1']
    #allocation7 [shape = 'u8[131072]{0}', space=vmem, size = 0x20000, scoped, tag = 'input window, operand 8, single buffered']
    #allocation8 [shape = 'u8[4096]{0}', space=vmem, size = 0x1000, scoped, tag = 'output window, operand 0, single buffered']
    %15 = vsyncpa [#allocation3], 0
    %16 = vsyncpa [#allocation6], 0
    %17 = vsyncpa [#allocation4], 0
    // Predicated region
    $region2: #{tpu_custom_call.1} parent=1 // pred_check
      _
    $region3: #{tpu_custom_call.1} parent=1 // pred_check_branch
      %19 = sbr.rel (0) target = $region5
    $region4: #{tpu_custom_call.1} parent=1 // pred_region
      _
    $region5: #{tpu_custom_call.1} parent=1 // pred_fallthru
      _
    // Predicated region
    $region6: #{tpu_custom_call.1} parent=1 // pred_check
      _
    $region7: #{tpu_custom_call.1} parent=1 // pred_check_branch
      %21 = sbr.rel (0) target = $region9
    $region8: #{tpu_custom_call.1} parent=1 // pred_region
      _
    $region9: #{tpu_custom_call.1} parent=1 // pred_fallthru
      _
    // Predicated region
    $region10: #{tpu_custom_call.1} parent=1 // pred_check
      _
    $region11: #{tpu_custom_call.1} parent=1 // pred_check_branch
      %23 = sbr.rel (0) target = $region13
    $region12: #{tpu_custom_call.1} parent=1 // pred_region
      _
    $region13: #{tpu_custom_call.1} parent=1 // pred_fallthru
      _
    // Predicated region
    $region14: #{tpu_custom_call.1} parent=1 // pred_check
      _
    $region15: #{tpu_custom_call.1} parent=1 // pred_check_branch
      %25 = sbr.rel (0) target = $region17
    $region16: #{tpu_custom_call.1} parent=1 // pred_region
      %27 = vsyncadd [#allocation3], 0
      %s28 = sshll.u32 %s3, 4
      %s29 = int_to_ptr.hbm [resolvable:$true] %s28
      %s30 = sshll.u32 [#allocation2], 4
      %s31 = int_to_ptr.vmem [resolvable:$true] %s30
      %36 = dma.hbm_to_vmem [thread:$0]  %s29, 1024, %s31, [#allocation3], 256, 256, 16
    $region17: #{tpu_custom_call.1} parent=1 // pred_fallthru
      _
    // Predicated region
    $region18: #{tpu_custom_call.1} parent=1 // pred_check
      _
    $region19: #{tpu_custom_call.1} parent=1 // pred_check_branch
      %38 = sbr.rel (0) target = $region21
    $region20: #{tpu_custom_call.1} parent=1 // pred_region
      %40 = vsyncadd [#allocation6], 0
      %s41 = sshll.u32 %s4, 4
      %s42 = int_to_ptr.hbm [resolvable:$true] %s41
      %s43 = sshll.u32 [#allocation5], 4
      %s44 = int_to_ptr.vmem [resolvable:$true] %s43
      %49 = dma.hbm_to_vmem [thread:$0]  %s42, 1024, %s44, [#allocation6], 256, 256, 16
    $region21: #{tpu_custom_call.1} parent=1 // pred_fallthru
      _
    // Predicated region
    $region22: #{tpu_custom_call.1} parent=1 // pred_check
      _
    $region23: #{tpu_custom_call.1} parent=1 // pred_check_branch
      %51 = sbr.rel (0) target = $region25
    $region24: #{tpu_custom_call.1} parent=1 // pred_region
      _
    $region25: #{tpu_custom_call.1} parent=1 // pred_fallthru
      _
    // Predicated region
    $region26: #{tpu_custom_call.1} parent=1 // pred_check
      _
    $region27: #{tpu_custom_call.1} parent=1 // pred_check_branch
      %53 = sbr.rel (0) target = $region29
    $region28: #{tpu_custom_call.1} parent=1 // pred_region
      _
    $region29: #{tpu_custom_call.1} parent=1 // pred_fallthru
      _
    // Predicated region
    $region30: #{tpu_custom_call.1} parent=1 // pred_check
      _
    $region31: #{tpu_custom_call.1} parent=1 // pred_check_branch
      %55 = sbr.rel (0) target = $region33
    $region32: #{tpu_custom_call.1} parent=1 // pred_region
      _
    $region33: #{tpu_custom_call.1} parent=1 // pred_fallthru
      _
    // Predicated region
    $region34: #{tpu_custom_call.1} parent=1 // pred_check
      _
    $region35: #{tpu_custom_call.1} parent=1 // pred_check_branch
      %57 = sbr.rel (0) target = $region37
    $region36: #{tpu_custom_call.1} parent=1 // pred_region
      %59 = vsyncadd [#allocation6], 0
      %s60 = sshll.u32 %s8, 4
      %s61 = int_to_ptr.hbm [resolvable:$true] %s60
      %s62 = sshll.u32 [#allocation7], 4
      %s63 = int_to_ptr.vmem [resolvable:$true] %s62
      %68 = dma.hbm_to_vmem [thread:$0]  %s61, 4096, %s63, [#allocation6], 64, 64, 4
    $region37: #{tpu_custom_call.1} parent=1 // pred_fallthru
      _
    // Predicated region
    $region38: #{tpu_custom_call.1} parent=1 // pred_check
      _
    $region39: #{tpu_custom_call.1} parent=1 // pred_check_branch
      %70 = sbr.rel (0) target = $region41
    $region40: #{tpu_custom_call.1} parent=1 // pred_region
      _
    $region41: #{tpu_custom_call.1} parent=1 // pred_fallthru
      _
    // Predicated region
    $region42: #{tpu_custom_call.1} parent=1 // pred_check
      _
    $region43: #{tpu_custom_call.1} parent=1 // pred_check_branch
      %72 = sbr.rel (0) target = $region45
    $region44: #{tpu_custom_call.1} parent=1 // pred_region
      %74 = dma.done [#allocation3], 1024
    $region45: #{tpu_custom_call.1} parent=1 // pred_fallthru
      _
    // Predicated region
    $region46: #{tpu_custom_call.1} parent=1 // pred_check
      _
    $region47: #{tpu_custom_call.1} parent=1 // pred_check_branch
      %76 = sbr.rel (0) target = $region49
    $region48: #{tpu_custom_call.1} parent=1 // pred_region
      %78 = dma.done [#allocation6], 1024
    $region49: #{tpu_custom_call.1} parent=1 // pred_fallthru
      _
    // Predicated region
    $region50: #{tpu_custom_call.1} parent=1 // pred_check
      _
    $region51: #{tpu_custom_call.1} parent=1 // pred_check_branch
      %80 = sbr.rel (0) target = $region53
    $region52: #{tpu_custom_call.1} parent=1 // pred_region
      %82 = dma.done [#allocation6], 4096
    $region53: #{tpu_custom_call.1} parent=1 // pred_fallthru
      _
    %v84 = vld [vmem:[%s0] sm:$0xff]
    %v85 = vld [vmem:[%s0 + $0x8] sm:$0xff]
    %v86 = vld [vmem:[%s0 + $0x10] sm:$0xff]
    %v87 = vld [vmem:[%s0 + $0x18] sm:$0xff]
    %v88 = vld [vmem:[%s0 + $0x20] sm:$0xff]
    %v89 = vld [vmem:[%s0 + $0x28] sm:$0xff]
    %v90 = vld [vmem:[%s0 + $0x30] sm:$0xff]
    %v91 = vld [vmem:[%s0 + $0x38] sm:$0xff]
    %v92 = vld [vmem:[%s0 + $0x40] sm:$0xff]
    %v93 = vld [vmem:[%s0 + $0x48] sm:$0xff]
    %v94 = vld [vmem:[%s0 + $0x50] sm:$0xff]
    %v95 = vld [vmem:[%s0 + $0x58] sm:$0xff]
    %v96 = vld [vmem:[%s2] sm:$0x1]
    %v97 = vld [vmem:[%s1] sm:$0xf]
    %v98 = vld [vmem:[%s1 + $0x4] sm:$0xf]
    %v99 = vld [vmem:[%s1 + $0x8] sm:$0xf]
    %v100 = vld [vmem:[%s1 + $0xc] sm:$0xf]
    %v101 = vld [vmem:[%s1 + $0x10] sm:$0xf]
    %v102 = vld [vmem:[%s1 + $0x14] sm:$0xf]
    %v103 = vld [vmem:[%s1 + $0x18] sm:$0xf]
    %v104 = vld [vmem:[%s1 + $0x1c] sm:$0xf]
    %v105 = vld [vmem:[%s1 + $0x20] sm:$0xf]
    %v106 = vld [vmem:[%s1 + $0x24] sm:$0xf]
    %v107 = vld [vmem:[%s1 + $0x28] sm:$0xf]
    %v108 = vld [vmem:[%s1 + $0x2c] sm:$0xf]
    %v109 = vld [vmem:[%s1 + $0x30] sm:$0xf]
    %v110 = vld [vmem:[%s1 + $0x34] sm:$0xf]
    %v111 = vld [vmem:[%s1 + $0x38] sm:$0xf]
    %v112 = vld [vmem:[%s1 + $0x3c] sm:$0xf]
    %v113 = vld [vmem:[%s1 + $0x40] sm:$0xf]
    %v114 = vld [vmem:[%s1 + $0x44] sm:$0xf]
    %v115 = vld [vmem:[%s1 + $0x48] sm:$0xf]
    %v116 = vld [vmem:[%s1 + $0x4c] sm:$0xf]
    %v117 = vld [vmem:[%s1 + $0x50] sm:$0xf]
    %v118 = vld [vmem:[%s1 + $0x54] sm:$0xf]
    %v119 = vld [vmem:[%s1 + $0x58] sm:$0xf]
    %v120 = vld [vmem:[%s1 + $0x5c] sm:$0xf]
    %v121 = vld [vmem:[%s1 + $0x60] sm:$0xf]
    %v122 = vld [vmem:[%s1 + $0x64] sm:$0xf]
    %v123 = vld [vmem:[%s1 + $0x68] sm:$0xf]
    %v124 = vld [vmem:[%s1 + $0x6c] sm:$0xf]
    %v125 = vld [vmem:[%s1 + $0x70] sm:$0xf]
    %v126 = vld [vmem:[%s1 + $0x74] sm:$0xf]
    %v127 = vld [vmem:[%s1 + $0x78] sm:$0xf]
    %v128 = vld [vmem:[%s1 + $0x7c] sm:$0xf]
    %v129 = vld [vmem:[%s1 + $0x80] sm:$0xf]
    %v130 = vld [vmem:[%s1 + $0x84] sm:$0xf]
    %v131 = vld [vmem:[%s1 + $0x88] sm:$0xf]
    %v132 = vld [vmem:[%s1 + $0x8c] sm:$0xf]
    %v133 = vld [vmem:[%s1 + $0x90] sm:$0xf]
    %v134 = vld [vmem:[%s1 + $0x94] sm:$0xf]
    %v135 = vld [vmem:[%s1 + $0x98] sm:$0xf]
    %v136 = vld [vmem:[%s1 + $0x9c] sm:$0xf]
    %v137 = vld [vmem:[%s1 + $0xa0] sm:$0xf]
    %v138 = vld [vmem:[%s1 + $0xa4] sm:$0xf]
    %v139 = vld [vmem:[%s1 + $0xa8] sm:$0xf]
    %v140 = vld [vmem:[%s1 + $0xac] sm:$0xf]
    %v141 = vld [vmem:[%s1 + $0xb0] sm:$0xf]
    %v142 = vld [vmem:[%s1 + $0xb4] sm:$0xf]
    %v143 = vld [vmem:[%s1 + $0xb8] sm:$0xf]
    %v144 = vld [vmem:[%s1 + $0xbc] sm:$0xf]
    %v145 = vld [vmem:[%s1 + $0xc0] sm:$0xf]
    %v146 = vld [vmem:[%s1 + $0xc4] sm:$0xf]
    %v147 = vld [vmem:[%s1 + $0xc8] sm:$0xf]
    %v148 = vld [vmem:[%s1 + $0xcc] sm:$0xf]
    %v149 = vld [vmem:[%s1 + $0xd0] sm:$0xf]
    %v150 = vld [vmem:[%s1 + $0xd4] sm:$0xf]
    %v151 = vld [vmem:[%s1 + $0xd8] sm:$0xf]
    %v152 = vld [vmem:[%s1 + $0xdc] sm:$0xf]
    %v153 = vld [vmem:[%s1 + $0xe0] sm:$0xf]
    %v154 = vld [vmem:[%s1 + $0xe4] sm:$0xf]
    %v155 = vld [vmem:[%s1 + $0xe8] sm:$0xf]
    %v156 = vld [vmem:[%s1 + $0xec] sm:$0xf]
    %v157 = vld [vmem:[%s1 + $0xf0] sm:$0xf]
    %v158 = vld [vmem:[%s1 + $0xf4] sm:$0xf]
    %v159 = vld [vmem:[%s1 + $0xf8] sm:$0xf]
    %v160 = vld [vmem:[%s1 + $0xfc] sm:$0xf]
    %v161 = vld [vmem:[%s1 + $0x100] sm:$0xf]
    %v162 = vld [vmem:[%s1 + $0x104] sm:$0xf]
    %v163 = vld [vmem:[%s1 + $0x108] sm:$0xf]
    %v164 = vld [vmem:[%s1 + $0x10c] sm:$0xf]
    %v165 = vld [vmem:[%s1 + $0x110] sm:$0xf]
    %v166 = vld [vmem:[%s1 + $0x114] sm:$0xf]
    %v167 = vld [vmem:[%s1 + $0x118] sm:$0xf]
    %v168 = vld [vmem:[%s1 + $0x11c] sm:$0xf]
    %v169 = vld [vmem:[%s1 + $0x120] sm:$0xf]
    %v170 = vld [vmem:[%s1 + $0x124] sm:$0xf]
    %v171 = vld [vmem:[%s1 + $0x128] sm:$0xf]
    %v172 = vld [vmem:[%s1 + $0x12c] sm:$0xf]
    %v173 = vld [vmem:[%s1 + $0x130] sm:$0xf]
    %v174 = vld [vmem:[%s1 + $0x134] sm:$0xf]
    %v175 = vld [vmem:[%s1 + $0x138] sm:$0xf]
    %v176 = vld [vmem:[%s1 + $0x13c] sm:$0xf]
    %v177 = vld [vmem:[%s1 + $0x140] sm:$0xf]
    %v178 = vld [vmem:[%s1 + $0x144] sm:$0xf]
    %v179 = vld [vmem:[%s1 + $0x148] sm:$0xf]
    %v180 = vld [vmem:[%s1 + $0x14c] sm:$0xf]
    %v181 = vld [vmem:[%s1 + $0x150] sm:$0xf]
    %v182 = vld [vmem:[%s1 + $0x154] sm:$0xf]
    %v183 = vld [vmem:[%s1 + $0x158] sm:$0xf]
    %v184 = vld [vmem:[%s1 + $0x15c] sm:$0xf]
    %v185 = vld [vmem:[%s1 + $0x160] sm:$0xf]
    %v186 = vld [vmem:[%s1 + $0x164] sm:$0xf]
    %v187 = vld [vmem:[%s1 + $0x168] sm:$0xf]
    %v188 = vld [vmem:[%s1 + $0x16c] sm:$0xf]
    %v189 = vld [vmem:[%s1 + $0x170] sm:$0xf]
    %v190 = vld [vmem:[%s1 + $0x174] sm:$0xf]
    %v191 = vld [vmem:[%s1 + $0x178] sm:$0xf]
    %v192 = vld [vmem:[%s1 + $0x17c] sm:$0xf]
    %v193 = vld [vmem:[%s1 + $0x180] sm:$0xf]
    %v194 = vld [vmem:[%s1 + $0x184] sm:$0xf]
    %v195 = vld [vmem:[%s1 + $0x188] sm:$0xf]
    %v196 = vld [vmem:[%s1 + $0x18c] sm:$0xf]
    %v197 = vld [vmem:[%s1 + $0x190] sm:$0xf]
    %v198 = vld [vmem:[%s1 + $0x194] sm:$0xf]
    %v199 = vld [vmem:[%s1 + $0x198] sm:$0xf]
    %v200 = vld [vmem:[%s1 + $0x19c] sm:$0xf]
    %v201 = vld [vmem:[%s1 + $0x1a0] sm:$0xf]
    %v202 = vld [vmem:[%s1 + $0x1a4] sm:$0xf]
    %v203 = vld [vmem:[%s1 + $0x1a8] sm:$0xf]
    %v204 = vld [vmem:[%s1 + $0x1ac] sm:$0xf]
    %v205 = vld [vmem:[%s1 + $0x1b0] sm:$0xf]
    %v206 = vld [vmem:[%s1 + $0x1b4] sm:$0xf]
    %v207 = vld [vmem:[%s1 + $0x1b8] sm:$0xf]
    %v208 = vld [vmem:[%s1 + $0x1bc] sm:$0xf]
    %v209 = vld [vmem:[%s1 + $0x1c0] sm:$0xf]
    %v210 = vld [vmem:[%s1 + $0x1c4] sm:$0xf]
    %v211 = vld [vmem:[%s1 + $0x1c8] sm:$0xf]
    %v212 = vld [vmem:[%s1 + $0x1cc] sm:$0xf]
    %v213 = vld [vmem:[%s1 + $0x1d0] sm:$0xf]
    %v214 = vld [vmem:[%s1 + $0x1d4] sm:$0xf]
    %v215 = vld [vmem:[%s1 + $0x1d8] sm:$0xf]
    %v216 = vld [vmem:[%s1 + $0x1dc] sm:$0xf]
    %v217 = vld [vmem:[%s1 + $0x1e0] sm:$0xf]
    %v218 = vld [vmem:[%s1 + $0x1e4] sm:$0xf]
    %v219 = vld [vmem:[%s1 + $0x1e8] sm:$0xf]
    %v220 = vld [vmem:[%s1 + $0x1ec] sm:$0xf]
    %v221 = vld [vmem:[%s1 + $0x1f0] sm:$0xf]
    %v222 = vld [vmem:[%s1 + $0x1f4] sm:$0xf]
    %v223 = vld [vmem:[%s1 + $0x1f8] sm:$0xf]
    %v224 = vld [vmem:[%s1 + $0x1fc] sm:$0xf]
    %v226 = vperm.slane %v96, 0
    %v240 = vunpack.c.l.b16 %v84
    %v241 = vunpack.c.h.b16 %v84
    %v242 = vunpack.c.l.b16 %v85
    %v243 = vunpack.c.h.b16 %v85
    %v244 = vunpack.c.l.b16 %v86
    %v245 = vunpack.c.h.b16 %v86
    %v246 = vunpack.c.l.b16 %v87
    %v247 = vunpack.c.h.b16 %v87
    %v248 = vunpack.c.l.b16 %v88
    %v249 = vunpack.c.h.b16 %v88
    %v250 = vunpack.c.l.b16 %v89
    %v251 = vunpack.c.h.b16 %v89
    %v252 = vunpack.c.l.b16 %v90
    %v253 = vunpack.c.h.b16 %v90
    %v254 = vunpack.c.l.b16 %v91
    %v255 = vunpack.c.h.b16 %v91
    %v256 = vunpack.c.l.b16 %v92
    %v257 = vunpack.c.h.b16 %v92
    %v258 = vunpack.c.l.b16 %v93
    %v259 = vunpack.c.h.b16 %v93
    %v260 = vunpack.c.l.b16 %v94
    %v261 = vunpack.c.h.b16 %v94
    %v262 = vunpack.c.l.b16 %v95
    %v263 = vunpack.c.h.b16 %v95
    %v264 = vpack.c.b16 %v248, %v240
    %v265 = vpack.c.b16 %v249, %v241
    %v266 = vpack.c.b16 %v250, %v242
    %v267 = vpack.c.b16 %v251, %v243
    %v268 = vpack.c.b16 %v252, %v244
    %v269 = vpack.c.b16 %v253, %v245
    %v270 = vpack.c.b16 %v254, %v246
    %v271 = vpack.c.b16 %v255, %v247
    %v272 = vpack.c.b16 %v256, %v256
    %v273 = vpack.c.b16 %v257, %v257
    %v274 = vpack.c.b16 %v258, %v258
    %v275 = vpack.c.b16 %v259, %v259
    %v276 = vpack.c.b16 %v260, %v260
    %v277 = vpack.c.b16 %v261, %v261
    %v278 = vpack.c.b16 %v262, %v262
    %v279 = vpack.c.b16 %v263, %v263
    %v424 = vunpack.c.l.b16 %v97
    %v425 = vunpack.c.l.b16 %v98
    %v426 = vunpack.c.l.b16 %v99
    %v427 = vunpack.c.l.b16 %v100
    %v428 = vunpack.c.l.b16 %v101
    %v429 = vunpack.c.l.b16 %v102
    %v430 = vunpack.c.l.b16 %v103
    %v431 = vunpack.c.l.b16 %v104
    %v432 = vunpack.c.l.b16 %v105
    %v433 = vunpack.c.l.b16 %v106
    %v434 = vunpack.c.l.b16 %v107
    %v435 = vunpack.c.l.b16 %v108
    %v436 = vunpack.c.l.b16 %v109
    %v437 = vunpack.c.l.b16 %v110
    %v438 = vunpack.c.l.b16 %v111
    %v439 = vunpack.c.l.b16 %v112
    %v440 = vunpack.c.l.b16 %v113
    %v441 = vunpack.c.l.b16 %v114
    %v442 = vunpack.c.l.b16 %v115
    %v443 = vunpack.c.l.b16 %v116
    %v444 = vunpack.c.l.b16 %v117
    %v445 = vunpack.c.l.b16 %v118
    %v446 = vunpack.c.l.b16 %v119
    %v447 = vunpack.c.l.b16 %v120
    %v448 = vunpack.c.l.b16 %v121
    %v449 = vunpack.c.l.b16 %v122
    %v450 = vunpack.c.l.b16 %v123
    %v451 = vunpack.c.l.b16 %v124
    %v452 = vunpack.c.l.b16 %v125
    %v453 = vunpack.c.l.b16 %v126
    %v454 = vunpack.c.l.b16 %v127
    %v455 = vunpack.c.l.b16 %v128
    %v456 = vunpack.c.l.b16 %v129
    %v457 = vunpack.c.l.b16 %v130
    %v458 = vunpack.c.l.b16 %v131
    %v459 = vunpack.c.l.b16 %v132
    %v460 = vunpack.c.l.b16 %v133
    %v461 = vunpack.c.l.b16 %v134
    %v462 = vunpack.c.l.b16 %v135
    %v463 = vunpack.c.l.b16 %v136
    %v464 = vunpack.c.l.b16 %v137
    %v465 = vunpack.c.l.b16 %v138
    %v466 = vunpack.c.l.b16 %v139
    %v467 = vunpack.c.l.b16 %v140
    %v468 = vunpack.c.l.b16 %v141
    %v469 = vunpack.c.l.b16 %v142
    %v470 = vunpack.c.l.b16 %v143
    %v471 = vunpack.c.l.b16 %v144
    %v472 = vunpack.c.l.b16 %v145
    %v473 = vunpack.c.l.b16 %v146
    %v474 = vunpack.c.l.b16 %v147
    %v475 = vunpack.c.l.b16 %v148
    %v476 = vunpack.c.l.b16 %v149
    %v477 = vunpack.c.l.b16 %v150
    %v478 = vunpack.c.l.b16 %v151
    %v479 = vunpack.c.l.b16 %v152
    %v480 = vunpack.c.l.b16 %v153
    %v481 = vunpack.c.l.b16 %v154
    %v482 = vunpack.c.l.b16 %v155
    %v483 = vunpack.c.l.b16 %v156
    %v484 = vunpack.c.l.b16 %v157
    %v485 = vunpack.c.l.b16 %v158
    %v486 = vunpack.c.l.b16 %v159
    %v487 = vunpack.c.l.b16 %v160
    %v488 = vunpack.c.l.b16 %v161
    %v489 = vunpack.c.l.b16 %v162
    %v490 = vunpack.c.l.b16 %v163
    %v491 = vunpack.c.l.b16 %v164
    %v492 = vunpack.c.l.b16 %v165
    %v493 = vunpack.c.l.b16 %v166
    %v494 = vunpack.c.l.b16 %v167
    %v495 = vunpack.c.l.b16 %v168
    %v496 = vunpack.c.l.b16 %v169
    %v497 = vunpack.c.l.b16 %v170
    %v498 = vunpack.c.l.b16 %v171
    %v499 = vunpack.c.l.b16 %v172
    %v500 = vunpack.c.l.b16 %v173
    %v501 = vunpack.c.l.b16 %v174
    %v502 = vunpack.c.l.b16 %v175
    %v503 = vunpack.c.l.b16 %v176
    %v504 = vunpack.c.l.b16 %v177
    %v505 = vunpack.c.l.b16 %v178
    %v506 = vunpack.c.l.b16 %v179
    %v507 = vunpack.c.l.b16 %v180
    %v508 = vunpack.c.l.b16 %v181
    %v509 = vunpack.c.l.b16 %v182
    %v510 = vunpack.c.l.b16 %v183
    %v511 = vunpack.c.l.b16 %v184
    %v512 = vunpack.c.l.b16 %v185
    %v513 = vunpack.c.l.b16 %v186
    %v514 = vunpack.c.l.b16 %v187
    %v515 = vunpack.c.l.b16 %v188
    %v516 = vunpack.c.l.b16 %v189
    %v517 = vunpack.c.l.b16 %v190
    %v518 = vunpack.c.l.b16 %v191
    %v519 = vunpack.c.l.b16 %v192
    %v520 = vunpack.c.l.b16 %v193
    %v521 = vunpack.c.l.b16 %v194
    %v522 = vunpack.c.l.b16 %v195
    %v523 = vunpack.c.l.b16 %v196
    %v524 = vunpack.c.l.b16 %v197
    %v525 = vunpack.c.l.b16 %v198
    %v526 = vunpack.c.l.b16 %v199
    %v527 = vunpack.c.l.b16 %v200
    %v528 = vunpack.c.l.b16 %v201
    %v529 = vunpack.c.l.b16 %v202
    %v530 = vunpack.c.l.b16 %v203
    %v531 = vunpack.c.l.b16 %v204
    %v532 = vunpack.c.l.b16 %v205
    %v533 = vunpack.c.l.b16 %v206
    %v534 = vunpack.c.l.b16 %v207
    %v535 = vunpack.c.l.b16 %v208
    %v536 = vunpack.c.l.b16 %v209
    %v537 = vunpack.c.l.b16 %v210
    %v538 = vunpack.c.l.b16 %v211
    %v539 = vunpack.c.l.b16 %v212
    %v540 = vunpack.c.l.b16 %v213
    %v541 = vunpack.c.l.b16 %v214
    %v542 = vunpack.c.l.b16 %v215
    %v543 = vunpack.c.l.b16 %v216
    %v544 = vunpack.c.l.b16 %v217
    %v545 = vunpack.c.l.b16 %v218
    %v546 = vunpack.c.l.b16 %v219
    %v547 = vunpack.c.l.b16 %v220
    %v548 = vunpack.c.l.b16 %v221
    %v549 = vunpack.c.l.b16 %v222
    %v550 = vunpack.c.l.b16 %v223
    %v551 = vunpack.c.l.b16 %v224
    %v552 = vpack.c.b16 %v425, %v424
    %v553 = vpack.c.b16 %v427, %v426
    %v554 = vpack.c.b16 %v429, %v428
    %v555 = vpack.c.b16 %v431, %v430
    %v556 = vpack.c.b16 %v433, %v432
    %v557 = vpack.c.b16 %v435, %v434
    %v558 = vpack.c.b16 %v437, %v436
    %v559 = vpack.c.b16 %v439, %v438
    %v560 = vpack.c.b16 %v441, %v440
    %v561 = vpack.c.b16 %v443, %v442
    %v562 = vpack.c.b16 %v445, %v444
    %v563 = vpack.c.b16 %v447, %v446
    %v564 = vpack.c.b16 %v449, %v448
    %v565 = vpack.c.b16 %v451, %v450
    %v566 = vpack.c.b16 %v453, %v452
    %v567 = vpack.c.b16 %v455, %v454
    %v568 = vpack.c.b16 %v457, %v456
    %v569 = vpack.c.b16 %v459, %v458
    %v570 = vpack.c.b16 %v461, %v460
    %v571 = vpack.c.b16 %v463, %v462
    %v572 = vpack.c.b16 %v465, %v464
    %v573 = vpack.c.b16 %v467, %v466
    %v574 = vpack.c.b16 %v469, %v468
    %v575 = vpack.c.b16 %v471, %v470
    %v576 = vpack.c.b16 %v473, %v472
    %v577 = vpack.c.b16 %v475, %v474
    %v578 = vpack.c.b16 %v477, %v476
    %v579 = vpack.c.b16 %v479, %v478
    %v580 = vpack.c.b16 %v481, %v480
    %v581 = vpack.c.b16 %v483, %v482
    %v582 = vpack.c.b16 %v485, %v484
    %v583 = vpack.c.b16 %v487, %v486
    %v584 = vpack.c.b16 %v489, %v488
    %v585 = vpack.c.b16 %v491, %v490
    %v586 = vpack.c.b16 %v493, %v492
    %v587 = vpack.c.b16 %v495, %v494
    %v588 = vpack.c.b16 %v497, %v496
    %v589 = vpack.c.b16 %v499, %v498
    %v590 = vpack.c.b16 %v501, %v500
    %v591 = vpack.c.b16 %v503, %v502
    %v592 = vpack.c.b16 %v505, %v504
    %v593 = vpack.c.b16 %v507, %v506
    %v594 = vpack.c.b16 %v509, %v508
    %v595 = vpack.c.b16 %v511, %v510
    %v596 = vpack.c.b16 %v513, %v512
    %v597 = vpack.c.b16 %v515, %v514
    %v598 = vpack.c.b16 %v517, %v516
    %v599 = vpack.c.b16 %v519, %v518
    %v600 = vpack.c.b16 %v521, %v520
    %v601 = vpack.c.b16 %v523, %v522
    %v602 = vpack.c.b16 %v525, %v524
    %v603 = vpack.c.b16 %v527, %v526
    %v604 = vpack.c.b16 %v529, %v528
    %v605 = vpack.c.b16 %v531, %v530
    %v606 = vpack.c.b16 %v533, %v532
    %v607 = vpack.c.b16 %v535, %v534
    %v608 = vpack.c.b16 %v537, %v536
    %v609 = vpack.c.b16 %v539, %v538
    %v610 = vpack.c.b16 %v541, %v540
    %v611 = vpack.c.b16 %v543, %v542
    %v612 = vpack.c.b16 %v545, %v544
    %v613 = vpack.c.b16 %v547, %v546
    %v614 = vpack.c.b16 %v549, %v548
    %v615 = vpack.c.b16 %v551, %v550
    %680 = vmatpush.bf16.msra.mxu0 %v559
    %681 = vmatpush.bf16.msra.mxu0 %v558
    %682 = vmatpush.bf16.msra.mxu0 %v557
    %683 = vmatpush.bf16.msra.mxu0 %v556
    %684 = vmatpush.bf16.msra.mxu0 %v555
    %685 = vmatpush.bf16.msra.mxu0 %v554
    %686 = vmatpush.bf16.msra.mxu0 %v553
    %687 = vmatpush.bf16.msra.mxu0 %v552
    %688 = vmatmul.bf16.gmra.mxu0 %v264
    %v689 = vpop.f32.mrf.mxu0
    %v690 = vadd.f32 %v226, %v689
    %v691 = vpop.f32.mrf.mxu0
    %v692 = vadd.f32 %v226, %v691
    %693 = vmatmul.bf16.gmra.mxu0 %v272
    %v694 = vpop.f32.mrf.mxu0
    %v695 = vadd.f32 %v226, %v694
    %v696 = vpop.f32.mrf.mxu0
    %697 = vdwg.mxu0
    %698 = vmatpush.bf16.msra.mxu0 %v567
    %699 = vmatpush.bf16.msra.mxu0 %v566
    %700 = vmatpush.bf16.msra.mxu0 %v565
    %701 = vmatpush.bf16.msra.mxu0 %v564
    %702 = vmatpush.bf16.msra.mxu0 %v563
    %703 = vmatpush.bf16.msra.mxu0 %v562
    %704 = vmatpush.bf16.msra.mxu0 %v561
    %705 = vmatpush.bf16.msra.mxu0 %v560
    %706 = vmatmul.bf16.gmra.mxu0 %v265
    %v707 = vpop.f32.mrf.mxu0
    %v708 = vadd.f32 %v690, %v707
    %v709 = vpop.f32.mrf.mxu0
    %v710 = vadd.f32 %v692, %v709
    %711 = vmatmul.bf16.gmra.mxu0 %v273
    %v712 = vpop.f32.mrf.mxu0
    %v713 = vadd.f32 %v695, %v712
    %v714 = vpop.f32.mrf.mxu0
    %715 = vdwg.mxu0
    %716 = vmatpush.bf16.msra.mxu0 %v575
    %717 = vmatpush.bf16.msra.mxu0 %v574
    %718 = vmatpush.bf16.msra.mxu0 %v573
    %719 = vmatpush.bf16.msra.mxu0 %v572
    %720 = vmatpush.bf16.msra.mxu0 %v571
    %721 = vmatpush.bf16.msra.mxu0 %v570
    %722 = vmatpush.bf16.msra.mxu0 %v569
    %723 = vmatpush.bf16.msra.mxu0 %v568
    %724 = vmatmul.bf16.gmra.mxu0 %v266
    %v725 = vpop.f32.mrf.mxu0
    %v726 = vadd.f32 %v708, %v725
    %v727 = vpop.f32.mrf.mxu0
    %v728 = vadd.f32 %v710, %v727
    %729 = vmatmul.bf16.gmra.mxu0 %v274
    %v730 = vpop.f32.mrf.mxu0
    %v731 = vadd.f32 %v713, %v730
    %v732 = vpop.f32.mrf.mxu0
    %733 = vdwg.mxu0
    %734 = vmatpush.bf16.msra.mxu0 %v583
    %735 = vmatpush.bf16.msra.mxu0 %v582
    %736 = vmatpush.bf16.msra.mxu0 %v581
    %737 = vmatpush.bf16.msra.mxu0 %v580
    %738 = vmatpush.bf16.msra.mxu0 %v579
    %739 = vmatpush.bf16.msra.mxu0 %v578
    %740 = vmatpush.bf16.msra.mxu0 %v577
    %741 = vmatpush.bf16.msra.mxu0 %v576
    %742 = vmatmul.bf16.gmra.mxu0 %v267
    %v743 = vpop.f32.mrf.mxu0
    %v744 = vadd.f32 %v726, %v743
    %v745 = vpop.f32.mrf.mxu0
    %v746 = vadd.f32 %v728, %v745
    %747 = vmatmul.bf16.gmra.mxu0 %v275
    %v748 = vpop.f32.mrf.mxu0
    %v749 = vadd.f32 %v731, %v748
    %v750 = vpop.f32.mrf.mxu0
    %751 = vdwg.mxu0
    %752 = vmatpush.bf16.msra.mxu0 %v591
    %753 = vmatpush.bf16.msra.mxu0 %v590
    %754 = vmatpush.bf16.msra.mxu0 %v589
    %755 = vmatpush.bf16.msra.mxu0 %v588
    %756 = vmatpush.bf16.msra.mxu0 %v587
    %757 = vmatpush.bf16.msra.mxu0 %v586
    %758 = vmatpush.bf16.msra.mxu0 %v585
    %759 = vmatpush.bf16.msra.mxu0 %v584
    %760 = vmatmul.bf16.gmra.mxu0 %v268
    %v761 = vpop.f32.mrf.mxu0
    %v762 = vadd.f32 %v744, %v761
    %v763 = vpop.f32.mrf.mxu0
    %v764 = vadd.f32 %v746, %v763
    %765 = vmatmul.bf16.gmra.mxu0 %v276
    %v766 = vpop.f32.mrf.mxu0
    %v767 = vadd.f32 %v749, %v766
    %v768 = vpop.f32.mrf.mxu0
    %769 = vdwg.mxu0
    %770 = vmatpush.bf16.msra.mxu0 %v599
    %771 = vmatpush.bf16.msra.mxu0 %v598
    %772 = vmatpush.bf16.msra.mxu0 %v597
    %773 = vmatpush.bf16.msra.mxu0 %v596
    %774 = vmatpush.bf16.msra.mxu0 %v595
    %775 = vmatpush.bf16.msra.mxu0 %v594
    %776 = vmatpush.bf16.msra.mxu0 %v593
    %777 = vmatpush.bf16.msra.mxu0 %v592
    %778 = vmatmul.bf16.gmra.mxu0 %v269
    %v779 = vpop.f32.mrf.mxu0
    %v780 = vadd.f32 %v762, %v779
    %v781 = vpop.f32.mrf.mxu0
    %v782 = vadd.f32 %v764, %v781
    %783 = vmatmul.bf16.gmra.mxu0 %v277
    %v784 = vpop.f32.mrf.mxu0
    %v785 = vadd.f32 %v767, %v784
    %v786 = vpop.f32.mrf.mxu0
    %787 = vdwg.mxu0
    %788 = vmatpush.bf16.msra.mxu0 %v607
    %789 = vmatpush.bf16.msra.mxu0 %v606
    %790 = vmatpush.bf16.msra.mxu0 %v605
    %791 = vmatpush.bf16.msra.mxu0 %v604
    %792 = vmatpush.bf16.msra.mxu0 %v603
    %793 = vmatpush.bf16.msra.mxu0 %v602
    %794 = vmatpush.bf16.msra.mxu0 %v601
    %795 = vmatpush.bf16.msra.mxu0 %v600
    %796 = vmatmul.bf16.gmra.mxu0 %v270
    %v797 = vpop.f32.mrf.mxu0
    %v798 = vadd.f32 %v780, %v797
    %v799 = vpop.f32.mrf.mxu0
    %v800 = vadd.f32 %v782, %v799
    %801 = vmatmul.bf16.gmra.mxu0 %v278
    %v802 = vpop.f32.mrf.mxu0
    %v803 = vadd.f32 %v785, %v802
    %v804 = vpop.f32.mrf.mxu0
    %805 = vdwg.mxu0
    %806 = vmatpush.bf16.msra.mxu0 %v615
    %807 = vmatpush.bf16.msra.mxu0 %v614
    %808 = vmatpush.bf16.msra.mxu0 %v613
    %809 = vmatpush.bf16.msra.mxu0 %v612
    %810 = vmatpush.bf16.msra.mxu0 %v611
    %811 = vmatpush.bf16.msra.mxu0 %v610
    %812 = vmatpush.bf16.msra.mxu0 %v609
    %813 = vmatpush.bf16.msra.mxu0 %v608
    %814 = vmatmul.bf16.gmra.mxu0 %v271
    %v815 = vpop.f32.mrf.mxu0
    %v816 = vadd.f32 %v798, %v815
    %v817 = vpop.f32.mrf.mxu0
    %v818 = vadd.f32 %v800, %v817
    %819 = vmatmul.bf16.gmra.mxu0 %v279
    %v820 = vpop.f32.mrf.mxu0
    %v821 = vadd.f32 %v803, %v820
    %v822 = vpop.f32.mrf.mxu0
    %823 = vdwg.mxu0
    %v824 = vmax.f32 %v816, 0.0
    %v825 = vmax.f32 %v818, 0.0
    %v826 = vmax.f32 %v821, 0.0
    %v827 = vpack.c.bf16 %v824, %v824
    %v828 = vpack.c.bf16 %v825, %v825
    %v829 = vpack.c.bf16 %v826, %v826
    %v830 = vld [vmem:[#allocation2] sm:$0xff]
    %v831 = vld [vmem:[#allocation2 + $0x8] sm:$0xff]
    %v832 = vld [vmem:[#allocation2 + $0x10] sm:$0xff]
    %v833 = vld [vmem:[#allocation2 + $0x18] sm:$0xff]
    %v834 = vld [vmem:[#allocation2 + $0x20] sm:$0xff]
    %v835 = vld [vmem:[#allocation2 + $0x28] sm:$0xff]
    %v836 = vld [vmem:[#allocation2 + $0x30] sm:$0xff]
    %v837 = vld [vmem:[#allocation2 + $0x38] sm:$0xff]
    %v838 = vld [vmem:[#allocation5] sm:$0xff]
    %v839 = vld [vmem:[#allocation5 + $0x8] sm:$0xff]
    %v840 = vld [vmem:[#allocation5 + $0x10] sm:$0xff]
    %v841 = vld [vmem:[#allocation5 + $0x18] sm:$0xff]
    %v842 = vld [vmem:[#allocation5 + $0x20] sm:$0xff]
    %v843 = vld [vmem:[#allocation5 + $0x28] sm:$0xff]
    %v844 = vld [vmem:[#allocation5 + $0x30] sm:$0xff]
    %v845 = vld [vmem:[#allocation5 + $0x38] sm:$0xff]
    %v846 = vld [vmem:[%s5] sm:$0xf]
    %v855 = vunpack.c.l.b16 %v830
    %v856 = vunpack.c.h.b16 %v830
    %v857 = vunpack.c.l.b16 %v831
    %v858 = vunpack.c.h.b16 %v831
    %v859 = vunpack.c.l.b16 %v832
    %v860 = vunpack.c.h.b16 %v832
    %v861 = vunpack.c.l.b16 %v833
    %v862 = vunpack.c.h.b16 %v833
    %v863 = vunpack.c.l.b16 %v834
    %v864 = vunpack.c.h.b16 %v834
    %v865 = vunpack.c.l.b16 %v835
    %v866 = vunpack.c.h.b16 %v835
    %v867 = vunpack.c.l.b16 %v836
    %v868 = vunpack.c.h.b16 %v836
    %v869 = vunpack.c.l.b16 %v837
    %v870 = vunpack.c.h.b16 %v837
    %v871 = vpack.c.b16 %v859, %v855
    %v872 = vpack.c.b16 %v860, %v856
    %v873 = vpack.c.b16 %v861, %v857
    %v874 = vpack.c.b16 %v862, %v858
    %v875 = vpack.c.b16 %v867, %v863
    %v876 = vpack.c.b16 %v868, %v864
    %v877 = vpack.c.b16 %v869, %v865
    %v878 = vpack.c.b16 %v870, %v866
    %vm887 = vcmask 261120
    %v889 = vsel %vm887, %v827, 0
    %891 = vmatpush.bf16.msra.mxu0 0
    %892 = vmatpush.bf16.msra.mxu0 0
    %893 = vmatpush.bf16.msra.mxu0 0
    %894 = vmatpush.bf16.msra.mxu0 0
    %895 = vmatpush.bf16.msra.mxu0 0
    %896 = vmatpush.bf16.msra.mxu0 0
    %897 = vmatpush.bf16.msra.mxu0 %v875
    %898 = vmatpush.bf16.msra.mxu0 %v871
    %899 = vmatmul.bf16.gmra.mxu0 %v889
    %v900 = vpop.f32.mrf.mxu0
    %v901 = vadd.f32 0.0, %v900
    %v902 = vpop.f32.mrf.mxu0
    %903 = vdwg.mxu0
    %904 = vmatpush.bf16.msra.mxu0 0
    %905 = vmatpush.bf16.msra.mxu0 0
    %906 = vmatpush.bf16.msra.mxu0 0
    %907 = vmatpush.bf16.msra.mxu0 0
    %908 = vmatpush.bf16.msra.mxu0 0
    %909 = vmatpush.bf16.msra.mxu0 0
    %910 = vmatpush.bf16.msra.mxu0 %v876
    %911 = vmatpush.bf16.msra.mxu0 %v872
    %912 = vmatmul.bf16.gmra.mxu0 %v889
    %v913 = vpop.f32.mrf.mxu0
    %v914 = vadd.f32 0.0, %v913
    %v915 = vpop.f32.mrf.mxu0
    %916 = vdwg.mxu0
    %917 = vmatpush.bf16.msra.mxu0 0
    %918 = vmatpush.bf16.msra.mxu0 0
    %919 = vmatpush.bf16.msra.mxu0 0
    %920 = vmatpush.bf16.msra.mxu0 0
    %921 = vmatpush.bf16.msra.mxu0 0
    %922 = vmatpush.bf16.msra.mxu0 0
    %923 = vmatpush.bf16.msra.mxu0 %v877
    %924 = vmatpush.bf16.msra.mxu0 %v873
    %925 = vmatmul.bf16.gmra.mxu0 %v889
    %v926 = vpop.f32.mrf.mxu0
    %v927 = vadd.f32 0.0, %v926
    %v928 = vpop.f32.mrf.mxu0
    %929 = vdwg.mxu0
    %930 = vmatpush.bf16.msra.mxu0 0
    %931 = vmatpush.bf16.msra.mxu0 0
    %932 = vmatpush.bf16.msra.mxu0 0
    %933 = vmatpush.bf16.msra.mxu0 0
    %934 = vmatpush.bf16.msra.mxu0 0
    %935 = vmatpush.bf16.msra.mxu0 0
    %936 = vmatpush.bf16.msra.mxu0 %v878
    %937 = vmatpush.bf16.msra.mxu0 %v874
    %938 = vmatmul.bf16.gmra.mxu0 %v889
    %v939 = vpop.f32.mrf.mxu0
    %v940 = vadd.f32 0.0, %v939
    %v941 = vpop.f32.mrf.mxu0
    %942 = vdwg.mxu0
    %v951 = vunpack.c.l.b16 %v838
    %v952 = vunpack.c.h.b16 %v838
    %v953 = vunpack.c.l.b16 %v839
    %v954 = vunpack.c.h.b16 %v839
    %v955 = vunpack.c.l.b16 %v840
    %v956 = vunpack.c.h.b16 %v840
    %v957 = vunpack.c.l.b16 %v841
    %v958 = vunpack.c.h.b16 %v841
    %v959 = vunpack.c.l.b16 %v842
    %v960 = vunpack.c.h.b16 %v842
    %v961 = vunpack.c.l.b16 %v843
    %v962 = vunpack.c.h.b16 %v843
    %v963 = vunpack.c.l.b16 %v844
    %v964 = vunpack.c.h.b16 %v844
    %v965 = vunpack.c.l.b16 %v845
    %v966 = vunpack.c.h.b16 %v845
    %v967 = vpack.c.b16 %v955, %v951
    %v968 = vpack.c.b16 %v956, %v952
    %v969 = vpack.c.b16 %v957, %v953
    %v970 = vpack.c.b16 %v958, %v954
    %v971 = vpack.c.b16 %v963, %v959
    %v972 = vpack.c.b16 %v964, %v960
    %v973 = vpack.c.b16 %v965, %v961
    %v974 = vpack.c.b16 %v966, %v962
    %v984 = vsel %vm887, %v828, 0
    %986 = vmatpush.bf16.msra.mxu0 0
    %987 = vmatpush.bf16.msra.mxu0 0
    %988 = vmatpush.bf16.msra.mxu0 0
    %989 = vmatpush.bf16.msra.mxu0 0
    %990 = vmatpush.bf16.msra.mxu0 0
    %991 = vmatpush.bf16.msra.mxu0 0
    %992 = vmatpush.bf16.msra.mxu0 %v971
    %993 = vmatpush.bf16.msra.mxu0 %v967
    %994 = vmatmul.bf16.gmra.mxu0 %v984
    %v995 = vpop.f32.mrf.mxu0
    %v996 = vadd.f32 0.0, %v995
    %v997 = vpop.f32.mrf.mxu0
    %998 = vdwg.mxu0
    %999 = vmatpush.bf16.msra.mxu0 0
    %1000 = vmatpush.bf16.msra.mxu0 0
    %1001 = vmatpush.bf16.msra.mxu0 0
    %1002 = vmatpush.bf16.msra.mxu0 0
    %1003 = vmatpush.bf16.msra.mxu0 0
    %1004 = vmatpush.bf16.msra.mxu0 0
    %1005 = vmatpush.bf16.msra.mxu0 %v972
    %1006 = vmatpush.bf16.msra.mxu0 %v968
    %1007 = vmatmul.bf16.gmra.mxu0 %v984
    %v1008 = vpop.f32.mrf.mxu0
    %v1009 = vadd.f32 0.0, %v1008
    %v1010 = vpop.f32.mrf.mxu0
    %1011 = vdwg.mxu0
    %1012 = vmatpush.bf16.msra.mxu0 0
    %1013 = vmatpush.bf16.msra.mxu0 0
    %1014 = vmatpush.bf16.msra.mxu0 0
    %1015 = vmatpush.bf16.msra.mxu0 0
    %1016 = vmatpush.bf16.msra.mxu0 0
    %1017 = vmatpush.bf16.msra.mxu0 0
    %1018 = vmatpush.bf16.msra.mxu0 %v973
    %1019 = vmatpush.bf16.msra.mxu0 %v969
    %1020 = vmatmul.bf16.gmra.mxu0 %v984
    %v1021 = vpop.f32.mrf.mxu0
    %v1022 = vadd.f32 0.0, %v1021
    %v1023 = vpop.f32.mrf.mxu0
    %1024 = vdwg.mxu0
    %1025 = vmatpush.bf16.msra.mxu0 0
    %1026 = vmatpush.bf16.msra.mxu0 0
    %1027 = vmatpush.bf16.msra.mxu0 0
    %1028 = vmatpush.bf16.msra.mxu0 0
    %1029 = vmatpush.bf16.msra.mxu0 0
    %1030 = vmatpush.bf16.msra.mxu0 0
    %1031 = vmatpush.bf16.msra.mxu0 %v974
    %1032 = vmatpush.bf16.msra.mxu0 %v970
    %1033 = vmatmul.bf16.gmra.mxu0 %v984
    %v1034 = vpop.f32.mrf.mxu0
    %v1035 = vadd.f32 0.0, %v1034
    %v1036 = vpop.f32.mrf.mxu0
    %1037 = vdwg.mxu0
    %v1039 = vsel %vm887, %v829, 0
    %1041 = vmatpush.bf16.msra.mxu0 0
    %1042 = vmatpush.bf16.msra.mxu0 0
    %1043 = vmatpush.bf16.msra.mxu0 0
    %1044 = vmatpush.bf16.msra.mxu0 0
    %1045 = vmatpush.bf16.msra.mxu0 0
    %1046 = vmatpush.bf16.msra.mxu0 0
    %1047 = vmatpush.bf16.msra.mxu0 %v971
    %1048 = vmatpush.bf16.msra.mxu0 %v967
    %1049 = vmatmul.bf16.gmra.mxu0 %v1039
    %v1050 = vpop.f32.mrf.mxu0
    %v1051 = vadd.f32 0.0, %v1050
    %v1052 = vpop.f32.mrf.mxu0
    %1053 = vdwg.mxu0
    %1054 = vmatpush.bf16.msra.mxu0 0
    %1055 = vmatpush.bf16.msra.mxu0 0
    %1056 = vmatpush.bf16.msra.mxu0 0
    %1057 = vmatpush.bf16.msra.mxu0 0
    %1058 = vmatpush.bf16.msra.mxu0 0
    %1059 = vmatpush.bf16.msra.mxu0 0
    %1060 = vmatpush.bf16.msra.mxu0 %v972
    %1061 = vmatpush.bf16.msra.mxu0 %v968
    %1062 = vmatmul.bf16.gmra.mxu0 %v1039
    %v1063 = vpop.f32.mrf.mxu0
    %v1064 = vadd.f32 0.0, %v1063
    %v1065 = vpop.f32.mrf.mxu0
    %1066 = vdwg.mxu0
    %1067 = vmatpush.bf16.msra.mxu0 0
    %1068 = vmatpush.bf16.msra.mxu0 0
    %1069 = vmatpush.bf16.msra.mxu0 0
    %1070 = vmatpush.bf16.msra.mxu0 0
    %1071 = vmatpush.bf16.msra.mxu0 0
    %1072 = vmatpush.bf16.msra.mxu0 0
    %1073 = vmatpush.bf16.msra.mxu0 %v973
    %1074 = vmatpush.bf16.msra.mxu0 %v969
    %1075 = vmatmul.bf16.gmra.mxu0 %v1039
    %v1076 = vpop.f32.mrf.mxu0
    %v1077 = vadd.f32 0.0, %v1076
    %v1078 = vpop.f32.mrf.mxu0
    %1079 = vdwg.mxu0
    %1080 = vmatpush.bf16.msra.mxu0 0
    %1081 = vmatpush.bf16.msra.mxu0 0
    %1082 = vmatpush.bf16.msra.mxu0 0
    %1083 = vmatpush.bf16.msra.mxu0 0
    %1084 = vmatpush.bf16.msra.mxu0 0
    %1085 = vmatpush.bf16.msra.mxu0 0
    %1086 = vmatpush.bf16.msra.mxu0 %v974
    %1087 = vmatpush.bf16.msra.mxu0 %v970
    %1088 = vmatmul.bf16.gmra.mxu0 %v1039
    %v1089 = vpop.f32.mrf.mxu0
    %v1090 = vadd.f32 0.0, %v1089
    %v1091 = vpop.f32.mrf.mxu0
    %1092 = vdwg.mxu0
    %v1093 = vadd.f32 %v901, %v996
    %v1094 = vadd.f32 %v914, %v1009
    %v1095 = vadd.f32 %v927, %v1022
    %v1096 = vadd.f32 %v940, %v1035
    %v1098 = vperm.slane %v846, 0
    %v1099 = vperm.slane %v846, 1
    %v1100 = vperm.slane %v846, 2
    %v1101 = vperm.slane %v846, 3
    %v1106 = vadd.f32 %v1093, %v1098
    %v1107 = vadd.f32 %v1094, %v1099
    %v1108 = vadd.f32 %v1095, %v1100
    %v1109 = vadd.f32 %v1096, %v1101
    %v1110 = vmax.f32 %v1106, 0.0
    %v1111 = vmax.f32 %v1107, 0.0
    %v1112 = vmax.f32 %v1108, 0.0
    %v1113 = vmax.f32 %v1109, 0.0
    %v1114 = vpack.c.bf16 %v1110, %v1110
    %v1115 = vpack.c.bf16 %v1111, %v1111
    %v1116 = vpack.c.bf16 %v1112, %v1112
    %v1117 = vpack.c.bf16 %v1113, %v1113
    %v1118 = vadd.f32 %v901, %v1051
    %v1119 = vadd.f32 %v914, %v1064
    %v1120 = vadd.f32 %v927, %v1077
    %v1121 = vadd.f32 %v940, %v1090
    %v1122 = vadd.f32 %v1118, %v1098
    %v1123 = vadd.f32 %v1119, %v1099
    %v1124 = vadd.f32 %v1120, %v1100
    %v1125 = vadd.f32 %v1121, %v1101
    %v1126 = vmax.f32 %v1122, 0.0
    %v1127 = vmax.f32 %v1123, 0.0
    %v1128 = vmax.f32 %v1124, 0.0
    %v1129 = vmax.f32 %v1125, 0.0
    %v1130 = vpack.c.bf16 %v1126, %v1126
    %v1131 = vpack.c.bf16 %v1127, %v1127
    %v1132 = vpack.c.bf16 %v1128, %v1128
    %v1133 = vpack.c.bf16 %v1129, %v1129
    %1134 = vmatpush.bf16.msra.mxu0 0
    %1135 = vmatpush.bf16.msra.mxu0 0
    %1136 = vmatpush.bf16.msra.mxu0 0
    %1137 = vmatpush.bf16.msra.mxu0 0
    %1138 = vmatpush.bf16.msra.mxu0 0
    %1139 = vmatpush.bf16.msra.mxu0 0
    %1140 = vmatpush.bf16.msra.mxu0 %v875
    %1141 = vmatpush.bf16.msra.mxu0 %v871
    %1142 = vmatmul.bf16.gmra.mxu0 %v984
    %v1143 = vpop.f32.mrf.mxu0
    %v1144 = vadd.f32 %v1051, %v1143
    %v1145 = vpop.f32.mrf.mxu0
    %1146 = vdwg.mxu0
    %1147 = vmatpush.bf16.msra.mxu0 0
    %1148 = vmatpush.bf16.msra.mxu0 0
    %1149 = vmatpush.bf16.msra.mxu0 0
    %1150 = vmatpush.bf16.msra.mxu0 0
    %1151 = vmatpush.bf16.msra.mxu0 0
    %1152 = vmatpush.bf16.msra.mxu0 0
    %1153 = vmatpush.bf16.msra.mxu0 %v876
    %1154 = vmatpush.bf16.msra.mxu0 %v872
    %1155 = vmatmul.bf16.gmra.mxu0 %v984
    %v1156 = vpop.f32.mrf.mxu0
    %v1157 = vadd.f32 %v1064, %v1156
    %v1158 = vpop.f32.mrf.mxu0
    %1159 = vdwg.mxu0
    %1160 = vmatpush.bf16.msra.mxu0 0
    %1161 = vmatpush.bf16.msra.mxu0 0
    %1162 = vmatpush.bf16.msra.mxu0 0
    %1163 = vmatpush.bf16.msra.mxu0 0
    %1164 = vmatpush.bf16.msra.mxu0 0
    %1165 = vmatpush.bf16.msra.mxu0 0
    %1166 = vmatpush.bf16.msra.mxu0 %v877
    %1167 = vmatpush.bf16.msra.mxu0 %v873
    %1168 = vmatmul.bf16.gmra.mxu0 %v984
    %v1169 = vpop.f32.mrf.mxu0
    %v1170 = vadd.f32 %v1077, %v1169
    %v1171 = vpop.f32.mrf.mxu0
    %1172 = vdwg.mxu0
    %1173 = vmatpush.bf16.msra.mxu0 0
    %1174 = vmatpush.bf16.msra.mxu0 0
    %1175 = vmatpush.bf16.msra.mxu0 0
    %1176 = vmatpush.bf16.msra.mxu0 0
    %1177 = vmatpush.bf16.msra.mxu0 0
    %1178 = vmatpush.bf16.msra.mxu0 0
    %1179 = vmatpush.bf16.msra.mxu0 %v878
    %1180 = vmatpush.bf16.msra.mxu0 %v874
    %1181 = vmatmul.bf16.gmra.mxu0 %v984
    %v1182 = vpop.f32.mrf.mxu0
    %v1183 = vadd.f32 %v1090, %v1182
    %v1184 = vpop.f32.mrf.mxu0
    %1185 = vdwg.mxu0
    %v1186 = vadd.f32 %v1144, %v1098
    %v1187 = vadd.f32 %v1157, %v1099
    %v1188 = vadd.f32 %v1170, %v1100
    %v1189 = vadd.f32 %v1183, %v1101
    %v1190 = vmax.f32 %v1186, 0.0
    %v1191 = vmax.f32 %v1187, 0.0
    %v1192 = vmax.f32 %v1188, 0.0
    %v1193 = vmax.f32 %v1189, 0.0
    %v1194 = vpack.c.bf16 %v1190, %v1190
    %v1195 = vpack.c.bf16 %v1191, %v1191
    %v1196 = vpack.c.bf16 %v1192, %v1192
    %v1197 = vpack.c.bf16 %v1193, %v1193
    %v1198 = vld [vmem:[%s6] sm:$0xf]
    %v1199 = vld [vmem:[%s6 + $0x4] sm:$0xf]
    %v1200 = vld [vmem:[%s6 + $0x8] sm:$0xf]
    %v1201 = vld [vmem:[%s6 + $0xc] sm:$0xf]
    %v1202 = vld [vmem:[%s6 + $0x10] sm:$0xf]
    %v1203 = vld [vmem:[%s6 + $0x14] sm:$0xf]
    %v1204 = vld [vmem:[%s6 + $0x18] sm:$0xf]
    %v1205 = vld [vmem:[%s6 + $0x1c] sm:$0xf]
    %v1206 = vld [vmem:[%s6 + $0x20] sm:$0xf]
    %v1207 = vld [vmem:[%s6 + $0x24] sm:$0xf]
    %v1208 = vld [vmem:[%s6 + $0x28] sm:$0xf]
    %v1209 = vld [vmem:[%s6 + $0x2c] sm:$0xf]
    %v1210 = vld [vmem:[%s6 + $0x30] sm:$0xf]
    %v1211 = vld [vmem:[%s6 + $0x34] sm:$0xf]
    %v1212 = vld [vmem:[%s6 + $0x38] sm:$0xf]
    %v1213 = vld [vmem:[%s6 + $0x3c] sm:$0xf]
    %v1214 = vld [vmem:[%s6 + $0x40] sm:$0xf]
    %v1215 = vld [vmem:[%s6 + $0x44] sm:$0xf]
    %v1216 = vld [vmem:[%s6 + $0x48] sm:$0xf]
    %v1217 = vld [vmem:[%s6 + $0x4c] sm:$0xf]
    %v1218 = vld [vmem:[%s6 + $0x50] sm:$0xf]
    %v1219 = vld [vmem:[%s6 + $0x54] sm:$0xf]
    %v1220 = vld [vmem:[%s6 + $0x58] sm:$0xf]
    %v1221 = vld [vmem:[%s6 + $0x5c] sm:$0xf]
    %v1222 = vld [vmem:[%s6 + $0x60] sm:$0xf]
    %v1223 = vld [vmem:[%s6 + $0x64] sm:$0xf]
    %v1224 = vld [vmem:[%s6 + $0x68] sm:$0xf]
    %v1225 = vld [vmem:[%s6 + $0x6c] sm:$0xf]
    %v1226 = vld [vmem:[%s6 + $0x70] sm:$0xf]
    %v1227 = vld [vmem:[%s6 + $0x74] sm:$0xf]
    %v1228 = vld [vmem:[%s6 + $0x78] sm:$0xf]
    %v1229 = vld [vmem:[%s6 + $0x7c] sm:$0xf]
    %v1230 = vld [vmem:[%s6 + $0x80] sm:$0xf]
    %v1231 = vld [vmem:[%s6 + $0x84] sm:$0xf]
    %v1232 = vld [vmem:[%s6 + $0x88] sm:$0xf]
    %v1233 = vld [vmem:[%s6 + $0x8c] sm:$0xf]
    %v1234 = vld [vmem:[%s6 + $0x90] sm:$0xf]
    %v1235 = vld [vmem:[%s6 + $0x94] sm:$0xf]
    %v1236 = vld [vmem:[%s6 + $0x98] sm:$0xf]
    %v1237 = vld [vmem:[%s6 + $0x9c] sm:$0xf]
    %v1238 = vld [vmem:[%s6 + $0xa0] sm:$0xf]
    %v1239 = vld [vmem:[%s6 + $0xa4] sm:$0xf]
    %v1240 = vld [vmem:[%s6 + $0xa8] sm:$0xf]
    %v1241 = vld [vmem:[%s6 + $0xac] sm:$0xf]
    %v1242 = vld [vmem:[%s6 + $0xb0] sm:$0xf]
    %v1243 = vld [vmem:[%s6 + $0xb4] sm:$0xf]
    %v1244 = vld [vmem:[%s6 + $0xb8] sm:$0xf]
    %v1245 = vld [vmem:[%s6 + $0xbc] sm:$0xf]
    %v1246 = vld [vmem:[%s6 + $0xc0] sm:$0xf]
    %v1247 = vld [vmem:[%s6 + $0xc4] sm:$0xf]
    %v1248 = vld [vmem:[%s6 + $0xc8] sm:$0xf]
    %v1249 = vld [vmem:[%s6 + $0xcc] sm:$0xf]
    %v1250 = vld [vmem:[%s6 + $0xd0] sm:$0xf]
    %v1251 = vld [vmem:[%s6 + $0xd4] sm:$0xf]
    %v1252 = vld [vmem:[%s6 + $0xd8] sm:$0xf]
    %v1253 = vld [vmem:[%s6 + $0xdc] sm:$0xf]
    %v1254 = vld [vmem:[%s6 + $0xe0] sm:$0xf]
    %v1255 = vld [vmem:[%s6 + $0xe4] sm:$0xf]
    %v1256 = vld [vmem:[%s6 + $0xe8] sm:$0xf]
    %v1257 = vld [vmem:[%s6 + $0xec] sm:$0xf]
    %v1258 = vld [vmem:[%s6 + $0xf0] sm:$0xf]
    %v1259 = vld [vmem:[%s6 + $0xf4] sm:$0xf]
    %v1260 = vld [vmem:[%s6 + $0xf8] sm:$0xf]
    %v1261 = vld [vmem:[%s6 + $0xfc] sm:$0xf]
    %v1262 = vld [vmem:[%s7] sm:$0xf]
    %v1263 = vld [vmem:[%s7 + $0x4] sm:$0xf]
    %v1264 = vld [vmem:[%s7 + $0x8] sm:$0xf]
    %v1265 = vld [vmem:[%s7 + $0xc] sm:$0xf]
    %v1266 = vld [vmem:[%s7 + $0x10] sm:$0xf]
    %v1267 = vld [vmem:[%s7 + $0x14] sm:$0xf]
    %v1268 = vld [vmem:[%s7 + $0x18] sm:$0xf]
    %v1269 = vld [vmem:[%s7 + $0x1c] sm:$0xf]
    %v1270 = vld [vmem:[%s7 + $0x20] sm:$0xf]
    %v1271 = vld [vmem:[%s7 + $0x24] sm:$0xf]
    %v1272 = vld [vmem:[%s7 + $0x28] sm:$0xf]
    %v1273 = vld [vmem:[%s7 + $0x2c] sm:$0xf]
    %v1274 = vld [vmem:[%s7 + $0x30] sm:$0xf]
    %v1275 = vld [vmem:[%s7 + $0x34] sm:$0xf]
    %v1276 = vld [vmem:[%s7 + $0x38] sm:$0xf]
    %v1277 = vld [vmem:[%s7 + $0x3c] sm:$0xf]
    %v1278 = vld [vmem:[%s7 + $0x40] sm:$0xf]
    %v1279 = vld [vmem:[%s7 + $0x44] sm:$0xf]
    %v1280 = vld [vmem:[%s7 + $0x48] sm:$0xf]
    %v1281 = vld [vmem:[%s7 + $0x4c] sm:$0xf]
    %v1282 = vld [vmem:[%s7 + $0x50] sm:$0xf]
    %v1283 = vld [vmem:[%s7 + $0x54] sm:$0xf]
    %v1284 = vld [vmem:[%s7 + $0x58] sm:$0xf]
    %v1285 = vld [vmem:[%s7 + $0x5c] sm:$0xf]
    %v1286 = vld [vmem:[%s7 + $0x60] sm:$0xf]
    %v1287 = vld [vmem:[%s7 + $0x64] sm:$0xf]
    %v1288 = vld [vmem:[%s7 + $0x68] sm:$0xf]
    %v1289 = vld [vmem:[%s7 + $0x6c] sm:$0xf]
    %v1290 = vld [vmem:[%s7 + $0x70] sm:$0xf]
    %v1291 = vld [vmem:[%s7 + $0x74] sm:$0xf]
    %v1292 = vld [vmem:[%s7 + $0x78] sm:$0xf]
    %v1293 = vld [vmem:[%s7 + $0x7c] sm:$0xf]
    %v1294 = vld [vmem:[%s7 + $0x80] sm:$0xf]
    %v1295 = vld [vmem:[%s7 + $0x84] sm:$0xf]
    %v1296 = vld [vmem:[%s7 + $0x88] sm:$0xf]
    %v1297 = vld [vmem:[%s7 + $0x8c] sm:$0xf]
    %v1298 = vld [vmem:[%s7 + $0x90] sm:$0xf]
    %v1299 = vld [vmem:[%s7 + $0x94] sm:$0xf]
    %v1300 = vld [vmem:[%s7 + $0x98] sm:$0xf]
    %v1301 = vld [vmem:[%s7 + $0x9c] sm:$0xf]
    %v1302 = vld [vmem:[%s7 + $0xa0] sm:$0xf]
    %v1303 = vld [vmem:[%s7 + $0xa4] sm:$0xf]
    %v1304 = vld [vmem:[%s7 + $0xa8] sm:$0xf]
    %v1305 = vld [vmem:[%s7 + $0xac] sm:$0xf]
    %v1306 = vld [vmem:[%s7 + $0xb0] sm:$0xf]
    %v1307 = vld [vmem:[%s7 + $0xb4] sm:$0xf]
    %v1308 = vld [vmem:[%s7 + $0xb8] sm:$0xf]
    %v1309 = vld [vmem:[%s7 + $0xbc] sm:$0xf]
    %v1310 = vld [vmem:[%s7 + $0xc0] sm:$0xf]
    %v1311 = vld [vmem:[%s7 + $0xc4] sm:$0xf]
    %v1312 = vld [vmem:[%s7 + $0xc8] sm:$0xf]
    %v1313 = vld [vmem:[%s7 + $0xcc] sm:$0xf]
    %v1314 = vld [vmem:[%s7 + $0xd0] sm:$0xf]
    %v1315 = vld [vmem:[%s7 + $0xd4] sm:$0xf]
    %v1316 = vld [vmem:[%s7 + $0xd8] sm:$0xf]
    %v1317 = vld [vmem:[%s7 + $0xdc] sm:$0xf]
    %v1318 = vld [vmem:[%s7 + $0xe0] sm:$0xf]
    %v1319 = vld [vmem:[%s7 + $0xe4] sm:$0xf]
    %v1320 = vld [vmem:[%s7 + $0xe8] sm:$0xf]
    %v1321 = vld [vmem:[%s7 + $0xec] sm:$0xf]
    %v1322 = vld [vmem:[%s7 + $0xf0] sm:$0xf]
    %v1323 = vld [vmem:[%s7 + $0xf4] sm:$0xf]
    %v1324 = vld [vmem:[%s7 + $0xf8] sm:$0xf]
    %v1325 = vld [vmem:[%s7 + $0xfc] sm:$0xf]
    %v1390 = vunpack.c.l.b16 %v1262
    %v1391 = vunpack.c.l.b16 %v1263
    %v1392 = vunpack.c.l.b16 %v1264
    %v1393 = vunpack.c.l.b16 %v1265
    %v1394 = vunpack.c.l.b16 %v1266
    %v1395 = vunpack.c.l.b16 %v1267
    %v1396 = vunpack.c.l.b16 %v1268
    %v1397 = vunpack.c.l.b16 %v1269
    %v1398 = vunpack.c.l.b16 %v1270
    %v1399 = vunpack.c.l.b16 %v1271
    %v1400 = vunpack.c.l.b16 %v1272
    %v1401 = vunpack.c.l.b16 %v1273
    %v1402 = vunpack.c.l.b16 %v1274
    %v1403 = vunpack.c.l.b16 %v1275
    %v1404 = vunpack.c.l.b16 %v1276
    %v1405 = vunpack.c.l.b16 %v1277
    %v1406 = vunpack.c.l.b16 %v1278
    %v1407 = vunpack.c.l.b16 %v1279
    %v1408 = vunpack.c.l.b16 %v1280
    %v1409 = vunpack.c.l.b16 %v1281
    %v1410 = vunpack.c.l.b16 %v1282
    %v1411 = vunpack.c.l.b16 %v1283
    %v1412 = vunpack.c.l.b16 %v1284
    %v1413 = vunpack.c.l.b16 %v1285
    %v1414 = vunpack.c.l.b16 %v1286
    %v1415 = vunpack.c.l.b16 %v1287
    %v1416 = vunpack.c.l.b16 %v1288
    %v1417 = vunpack.c.l.b16 %v1289
    %v1418 = vunpack.c.l.b16 %v1290
    %v1419 = vunpack.c.l.b16 %v1291
    %v1420 = vunpack.c.l.b16 %v1292
    %v1421 = vunpack.c.l.b16 %v1293
    %v1422 = vunpack.c.l.b16 %v1294
    %v1423 = vunpack.c.l.b16 %v1295
    %v1424 = vunpack.c.l.b16 %v1296
    %v1425 = vunpack.c.l.b16 %v1297
    %v1426 = vunpack.c.l.b16 %v1298
    %v1427 = vunpack.c.l.b16 %v1299
    %v1428 = vunpack.c.l.b16 %v1300
    %v1429 = vunpack.c.l.b16 %v1301
    %v1430 = vunpack.c.l.b16 %v1302
    %v1431 = vunpack.c.l.b16 %v1303
    %v1432 = vunpack.c.l.b16 %v1304
    %v1433 = vunpack.c.l.b16 %v1305
    %v1434 = vunpack.c.l.b16 %v1306
    %v1435 = vunpack.c.l.b16 %v1307
    %v1436 = vunpack.c.l.b16 %v1308
    %v1437 = vunpack.c.l.b16 %v1309
    %v1438 = vunpack.c.l.b16 %v1310
    %v1439 = vunpack.c.l.b16 %v1311
    %v1440 = vunpack.c.l.b16 %v1312
    %v1441 = vunpack.c.l.b16 %v1313
    %v1442 = vunpack.c.l.b16 %v1314
    %v1443 = vunpack.c.l.b16 %v1315
    %v1444 = vunpack.c.l.b16 %v1316
    %v1445 = vunpack.c.l.b16 %v1317
    %v1446 = vunpack.c.l.b16 %v1318
    %v1447 = vunpack.c.l.b16 %v1319
    %v1448 = vunpack.c.l.b16 %v1320
    %v1449 = vunpack.c.l.b16 %v1321
    %v1450 = vunpack.c.l.b16 %v1322
    %v1451 = vunpack.c.l.b16 %v1323
    %v1452 = vunpack.c.l.b16 %v1324
    %v1453 = vunpack.c.l.b16 %v1325
    %v1454 = vpack.c.b16 %v1391, %v1390
    %v1455 = vpack.c.b16 %v1393, %v1392
    %v1456 = vpack.c.b16 %v1395, %v1394
    %v1457 = vpack.c.b16 %v1397, %v1396
    %v1458 = vpack.c.b16 %v1399, %v1398
    %v1459 = vpack.c.b16 %v1401, %v1400
    %v1460 = vpack.c.b16 %v1403, %v1402
    %v1461 = vpack.c.b16 %v1405, %v1404
    %v1462 = vpack.c.b16 %v1407, %v1406
    %v1463 = vpack.c.b16 %v1409, %v1408
    %v1464 = vpack.c.b16 %v1411, %v1410
    %v1465 = vpack.c.b16 %v1413, %v1412
    %v1466 = vpack.c.b16 %v1415, %v1414
    %v1467 = vpack.c.b16 %v1417, %v1416
    %v1468 = vpack.c.b16 %v1419, %v1418
    %v1469 = vpack.c.b16 %v1421, %v1420
    %v1470 = vpack.c.b16 %v1423, %v1422
    %v1471 = vpack.c.b16 %v1425, %v1424
    %v1472 = vpack.c.b16 %v1427, %v1426
    %v1473 = vpack.c.b16 %v1429, %v1428
    %v1474 = vpack.c.b16 %v1431, %v1430
    %v1475 = vpack.c.b16 %v1433, %v1432
    %v1476 = vpack.c.b16 %v1435, %v1434
    %v1477 = vpack.c.b16 %v1437, %v1436
    %v1478 = vpack.c.b16 %v1439, %v1438
    %v1479 = vpack.c.b16 %v1441, %v1440
    %v1480 = vpack.c.b16 %v1443, %v1442
    %v1481 = vpack.c.b16 %v1445, %v1444
    %v1482 = vpack.c.b16 %v1447, %v1446
    %v1483 = vpack.c.b16 %v1449, %v1448
    %v1484 = vpack.c.b16 %v1451, %v1450
    %v1485 = vpack.c.b16 %v1453, %v1452
    %1518 = vmatpush.bf16.msra.mxu0 %v1461
    %1519 = vmatpush.bf16.msra.mxu0 %v1460
    %1520 = vmatpush.bf16.msra.mxu0 %v1459
    %1521 = vmatpush.bf16.msra.mxu0 %v1458
    %1522 = vmatpush.bf16.msra.mxu0 %v1457
    %1523 = vmatpush.bf16.msra.mxu0 %v1456
    %1524 = vmatpush.bf16.msra.mxu0 %v1455
    %1525 = vmatpush.bf16.msra.mxu0 %v1454
    %1526 = vmatmul.bf16.gmra.mxu0 %v1130
    %v1527 = vpop.f32.mrf.mxu0
    %v1528 = vadd.f32 0.0, %v1527
    %v1529 = vpop.f32.mrf.mxu0
    %1530 = vdwg.mxu0
    %1531 = vmatpush.bf16.msra.mxu0 %v1469
    %1532 = vmatpush.bf16.msra.mxu0 %v1468
    %1533 = vmatpush.bf16.msra.mxu0 %v1467
    %1534 = vmatpush.bf16.msra.mxu0 %v1466
    %1535 = vmatpush.bf16.msra.mxu0 %v1465
    %1536 = vmatpush.bf16.msra.mxu0 %v1464
    %1537 = vmatpush.bf16.msra.mxu0 %v1463
    %1538 = vmatpush.bf16.msra.mxu0 %v1462
    %1539 = vmatmul.bf16.gmra.mxu0 %v1131
    %v1540 = vpop.f32.mrf.mxu0
    %v1541 = vadd.f32 %v1528, %v1540
    %v1542 = vpop.f32.mrf.mxu0
    %1543 = vdwg.mxu0
    %1544 = vmatpush.bf16.msra.mxu0 %v1477
    %1545 = vmatpush.bf16.msra.mxu0 %v1476
    %1546 = vmatpush.bf16.msra.mxu0 %v1475
    %1547 = vmatpush.bf16.msra.mxu0 %v1474
    %1548 = vmatpush.bf16.msra.mxu0 %v1473
    %1549 = vmatpush.bf16.msra.mxu0 %v1472
    %1550 = vmatpush.bf16.msra.mxu0 %v1471
    %1551 = vmatpush.bf16.msra.mxu0 %v1470
    %1552 = vmatmul.bf16.gmra.mxu0 %v1132
    %v1553 = vpop.f32.mrf.mxu0
    %v1554 = vadd.f32 %v1541, %v1553
    %v1555 = vpop.f32.mrf.mxu0
    %1556 = vdwg.mxu0
    %1557 = vmatpush.bf16.msra.mxu0 %v1485
    %1558 = vmatpush.bf16.msra.mxu0 %v1484
    %1559 = vmatpush.bf16.msra.mxu0 %v1483
    %1560 = vmatpush.bf16.msra.mxu0 %v1482
    %1561 = vmatpush.bf16.msra.mxu0 %v1481
    %1562 = vmatpush.bf16.msra.mxu0 %v1480
    %1563 = vmatpush.bf16.msra.mxu0 %v1479
    %1564 = vmatpush.bf16.msra.mxu0 %v1478
    %1565 = vmatmul.bf16.gmra.mxu0 %v1133
    %v1566 = vpop.f32.mrf.mxu0
    %v1567 = vadd.f32 %v1554, %v1566
    %v1568 = vpop.f32.mrf.mxu0
    %1569 = vdwg.mxu0
    %v1634 = vunpack.c.l.b16 %v1198
    %v1635 = vunpack.c.l.b16 %v1199
    %v1636 = vunpack.c.l.b16 %v1200
    %v1637 = vunpack.c.l.b16 %v1201
    %v1638 = vunpack.c.l.b16 %v1202
    %v1639 = vunpack.c.l.b16 %v1203
    %v1640 = vunpack.c.l.b16 %v1204
    %v1641 = vunpack.c.l.b16 %v1205
    %v1642 = vunpack.c.l.b16 %v1206
    %v1643 = vunpack.c.l.b16 %v1207
    %v1644 = vunpack.c.l.b16 %v1208
    %v1645 = vunpack.c.l.b16 %v1209
    %v1646 = vunpack.c.l.b16 %v1210
    %v1647 = vunpack.c.l.b16 %v1211
    %v1648 = vunpack.c.l.b16 %v1212
    %v1649 = vunpack.c.l.b16 %v1213
    %v1650 = vunpack.c.l.b16 %v1214
    %v1651 = vunpack.c.l.b16 %v1215
    %v1652 = vunpack.c.l.b16 %v1216
    %v1653 = vunpack.c.l.b16 %v1217
    %v1654 = vunpack.c.l.b16 %v1218
    %v1655 = vunpack.c.l.b16 %v1219
    %v1656 = vunpack.c.l.b16 %v1220
    %v1657 = vunpack.c.l.b16 %v1221
    %v1658 = vunpack.c.l.b16 %v1222
    %v1659 = vunpack.c.l.b16 %v1223
    %v1660 = vunpack.c.l.b16 %v1224
    %v1661 = vunpack.c.l.b16 %v1225
    %v1662 = vunpack.c.l.b16 %v1226
    %v1663 = vunpack.c.l.b16 %v1227
    %v1664 = vunpack.c.l.b16 %v1228
    %v1665 = vunpack.c.l.b16 %v1229
    %v1666 = vunpack.c.l.b16 %v1230
    %v1667 = vunpack.c.l.b16 %v1231
    %v1668 = vunpack.c.l.b16 %v1232
    %v1669 = vunpack.c.l.b16 %v1233
    %v1670 = vunpack.c.l.b16 %v1234
    %v1671 = vunpack.c.l.b16 %v1235
    %v1672 = vunpack.c.l.b16 %v1236
    %v1673 = vunpack.c.l.b16 %v1237
    %v1674 = vunpack.c.l.b16 %v1238
    %v1675 = vunpack.c.l.b16 %v1239
    %v1676 = vunpack.c.l.b16 %v1240
    %v1677 = vunpack.c.l.b16 %v1241
    %v1678 = vunpack.c.l.b16 %v1242
    %v1679 = vunpack.c.l.b16 %v1243
    %v1680 = vunpack.c.l.b16 %v1244
    %v1681 = vunpack.c.l.b16 %v1245
    %v1682 = vunpack.c.l.b16 %v1246
    %v1683 = vunpack.c.l.b16 %v1247
    %v1684 = vunpack.c.l.b16 %v1248
    %v1685 = vunpack.c.l.b16 %v1249
    %v1686 = vunpack.c.l.b16 %v1250
    %v1687 = vunpack.c.l.b16 %v1251
    %v1688 = vunpack.c.l.b16 %v1252
    %v1689 = vunpack.c.l.b16 %v1253
    %v1690 = vunpack.c.l.b16 %v1254
    %v1691 = vunpack.c.l.b16 %v1255
    %v1692 = vunpack.c.l.b16 %v1256
    %v1693 = vunpack.c.l.b16 %v1257
    %v1694 = vunpack.c.l.b16 %v1258
    %v1695 = vunpack.c.l.b16 %v1259
    %v1696 = vunpack.c.l.b16 %v1260
    %v1697 = vunpack.c.l.b16 %v1261
    %v1698 = vpack.c.b16 %v1635, %v1634
    %v1699 = vpack.c.b16 %v1637, %v1636
    %v1700 = vpack.c.b16 %v1639, %v1638
    %v1701 = vpack.c.b16 %v1641, %v1640
    %v1702 = vpack.c.b16 %v1643, %v1642
    %v1703 = vpack.c.b16 %v1645, %v1644
    %v1704 = vpack.c.b16 %v1647, %v1646
    %v1705 = vpack.c.b16 %v1649, %v1648
    %v1706 = vpack.c.b16 %v1651, %v1650
    %v1707 = vpack.c.b16 %v1653, %v1652
    %v1708 = vpack.c.b16 %v1655, %v1654
    %v1709 = vpack.c.b16 %v1657, %v1656
    %v1710 = vpack.c.b16 %v1659, %v1658
    %v1711 = vpack.c.b16 %v1661, %v1660
    %v1712 = vpack.c.b16 %v1663, %v1662
    %v1713 = vpack.c.b16 %v1665, %v1664
    %v1714 = vpack.c.b16 %v1667, %v1666
    %v1715 = vpack.c.b16 %v1669, %v1668
    %v1716 = vpack.c.b16 %v1671, %v1670
    %v1717 = vpack.c.b16 %v1673, %v1672
    %v1718 = vpack.c.b16 %v1675, %v1674
    %v1719 = vpack.c.b16 %v1677, %v1676
    %v1720 = vpack.c.b16 %v1679, %v1678
    %v1721 = vpack.c.b16 %v1681, %v1680
    %v1722 = vpack.c.b16 %v1683, %v1682
    %v1723 = vpack.c.b16 %v1685, %v1684
    %v1724 = vpack.c.b16 %v1687, %v1686
    %v1725 = vpack.c.b16 %v1689, %v1688
    %v1726 = vpack.c.b16 %v1691, %v1690
    %v1727 = vpack.c.b16 %v1693, %v1692
    %v1728 = vpack.c.b16 %v1695, %v1694
    %v1729 = vpack.c.b16 %v1697, %v1696
    %1762 = vmatpush.bf16.msra.mxu0 %v1705
    %1763 = vmatpush.bf16.msra.mxu0 %v1704
    %1764 = vmatpush.bf16.msra.mxu0 %v1703
    %1765 = vmatpush.bf16.msra.mxu0 %v1702
    %1766 = vmatpush.bf16.msra.mxu0 %v1701
    %1767 = vmatpush.bf16.msra.mxu0 %v1700
    %1768 = vmatpush.bf16.msra.mxu0 %v1699
    %1769 = vmatpush.bf16.msra.mxu0 %v1698
    %1770 = vmatmul.bf16.gmra.mxu0 %v1114
    %v1771 = vpop.f32.mrf.mxu0
    %v1772 = vadd.f32 %v1567, %v1771
    %v1773 = vpop.f32.mrf.mxu0
    %1774 = vdwg.mxu0
    %1775 = vmatpush.bf16.msra.mxu0 %v1713
    %1776 = vmatpush.bf16.msra.mxu0 %v1712
    %1777 = vmatpush.bf16.msra.mxu0 %v1711
    %1778 = vmatpush.bf16.msra.mxu0 %v1710
    %1779 = vmatpush.bf16.msra.mxu0 %v1709
    %1780 = vmatpush.bf16.msra.mxu0 %v1708
    %1781 = vmatpush.bf16.msra.mxu0 %v1707
    %1782 = vmatpush.bf16.msra.mxu0 %v1706
    %1783 = vmatmul.bf16.gmra.mxu0 %v1115
    %v1784 = vpop.f32.mrf.mxu0
    %v1785 = vadd.f32 %v1772, %v1784
    %v1786 = vpop.f32.mrf.mxu0
    %1787 = vdwg.mxu0
    %1788 = vmatpush.bf16.msra.mxu0 %v1721
    %1789 = vmatpush.bf16.msra.mxu0 %v1720
    %1790 = vmatpush.bf16.msra.mxu0 %v1719
    %1791 = vmatpush.bf16.msra.mxu0 %v1718
    %1792 = vmatpush.bf16.msra.mxu0 %v1717
    %1793 = vmatpush.bf16.msra.mxu0 %v1716
    %1794 = vmatpush.bf16.msra.mxu0 %v1715
    %1795 = vmatpush.bf16.msra.mxu0 %v1714
    %1796 = vmatmul.bf16.gmra.mxu0 %v1116
    %v1797 = vpop.f32.mrf.mxu0
    %v1798 = vadd.f32 %v1785, %v1797
    %v1799 = vpop.f32.mrf.mxu0
    %1800 = vdwg.mxu0
    %1801 = vmatpush.bf16.msra.mxu0 %v1729
    %1802 = vmatpush.bf16.msra.mxu0 %v1728
    %1803 = vmatpush.bf16.msra.mxu0 %v1727
    %1804 = vmatpush.bf16.msra.mxu0 %v1726
    %1805 = vmatpush.bf16.msra.mxu0 %v1725
    %1806 = vmatpush.bf16.msra.mxu0 %v1724
    %1807 = vmatpush.bf16.msra.mxu0 %v1723
    %1808 = vmatpush.bf16.msra.mxu0 %v1722
    %1809 = vmatmul.bf16.gmra.mxu0 %v1117
    %v1810 = vpop.f32.mrf.mxu0
    %v1811 = vadd.f32 %v1798, %v1810
    %v1812 = vpop.f32.mrf.mxu0
    %1813 = vdwg.mxu0
    %v1814 = vld [vmem:[#allocation7] sm:$0xf]
    %v1815 = vld [vmem:[#allocation7 + $0x4] sm:$0xf]
    %v1816 = vld [vmem:[#allocation7 + $0x8] sm:$0xf]
    %v1817 = vld [vmem:[#allocation7 + $0xc] sm:$0xf]
    %v1818 = vld [vmem:[#allocation7 + $0x10] sm:$0xf]
    %v1819 = vld [vmem:[#allocation7 + $0x14] sm:$0xf]
    %v1820 = vld [vmem:[#allocation7 + $0x18] sm:$0xf]
    %v1821 = vld [vmem:[#allocation7 + $0x1c] sm:$0xf]
    %v1822 = vld [vmem:[#allocation7 + $0x20] sm:$0xf]
    %v1823 = vld [vmem:[#allocation7 + $0x24] sm:$0xf]
    %v1824 = vld [vmem:[#allocation7 + $0x28] sm:$0xf]
    %v1825 = vld [vmem:[#allocation7 + $0x2c] sm:$0xf]
    %v1826 = vld [vmem:[#allocation7 + $0x30] sm:$0xf]
    %v1827 = vld [vmem:[#allocation7 + $0x34] sm:$0xf]
    %v1828 = vld [vmem:[#allocation7 + $0x38] sm:$0xf]
    %v1829 = vld [vmem:[#allocation7 + $0x3c] sm:$0xf]
    %v1830 = vld [vmem:[#allocation7 + $0x40] sm:$0xf]
    %v1831 = vld [vmem:[#allocation7 + $0x44] sm:$0xf]
    %v1832 = vld [vmem:[#allocation7 + $0x48] sm:$0xf]
    %v1833 = vld [vmem:[#allocation7 + $0x4c] sm:$0xf]
    %v1834 = vld [vmem:[#allocation7 + $0x50] sm:$0xf]
    %v1835 = vld [vmem:[#allocation7 + $0x54] sm:$0xf]
    %v1836 = vld [vmem:[#allocation7 + $0x58] sm:$0xf]
    %v1837 = vld [vmem:[#allocation7 + $0x5c] sm:$0xf]
    %v1838 = vld [vmem:[#allocation7 + $0x60] sm:$0xf]
    %v1839 = vld [vmem:[#allocation7 + $0x64] sm:$0xf]
    %v1840 = vld [vmem:[#allocation7 + $0x68] sm:$0xf]
    %v1841 = vld [vmem:[#allocation7 + $0x6c] sm:$0xf]
    %v1842 = vld [vmem:[#allocation7 + $0x70] sm:$0xf]
    %v1843 = vld [vmem:[#allocation7 + $0x74] sm:$0xf]
    %v1844 = vld [vmem:[#allocation7 + $0x78] sm:$0xf]
    %v1845 = vld [vmem:[#allocation7 + $0x7c] sm:$0xf]
    %v1846 = vld [vmem:[#allocation7 + $0x80] sm:$0xf]
    %v1847 = vld [vmem:[#allocation7 + $0x84] sm:$0xf]
    %v1848 = vld [vmem:[#allocation7 + $0x88] sm:$0xf]
    %v1849 = vld [vmem:[#allocation7 + $0x8c] sm:$0xf]
    %v1850 = vld [vmem:[#allocation7 + $0x90] sm:$0xf]
    %v1851 = vld [vmem:[#allocation7 + $0x94] sm:$0xf]
    %v1852 = vld [vmem:[#allocation7 + $0x98] sm:$0xf]
    %v1853 = vld [vmem:[#allocation7 + $0x9c] sm:$0xf]
    %v1854 = vld [vmem:[#allocation7 + $0xa0] sm:$0xf]
    %v1855 = vld [vmem:[#allocation7 + $0xa4] sm:$0xf]
    %v1856 = vld [vmem:[#allocation7 + $0xa8] sm:$0xf]
    %v1857 = vld [vmem:[#allocation7 + $0xac] sm:$0xf]
    %v1858 = vld [vmem:[#allocation7 + $0xb0] sm:$0xf]
    %v1859 = vld [vmem:[#allocation7 + $0xb4] sm:$0xf]
    %v1860 = vld [vmem:[#allocation7 + $0xb8] sm:$0xf]
    %v1861 = vld [vmem:[#allocation7 + $0xbc] sm:$0xf]
    %v1862 = vld [vmem:[#allocation7 + $0xc0] sm:$0xf]
    %v1863 = vld [vmem:[#allocation7 + $0xc4] sm:$0xf]
    %v1864 = vld [vmem:[#allocation7 + $0xc8] sm:$0xf]
    %v1865 = vld [vmem:[#allocation7 + $0xcc] sm:$0xf]
    %v1866 = vld [vmem:[#allocation7 + $0xd0] sm:$0xf]
    %v1867 = vld [vmem:[#allocation7 + $0xd4] sm:$0xf]
    %v1868 = vld [vmem:[#allocation7 + $0xd8] sm:$0xf]
    %v1869 = vld [vmem:[#allocation7 + $0xdc] sm:$0xf]
    %v1870 = vld [vmem:[#allocation7 + $0xe0] sm:$0xf]
    %v1871 = vld [vmem:[#allocation7 + $0xe4] sm:$0xf]
    %v1872 = vld [vmem:[#allocation7 + $0xe8] sm:$0xf]
    %v1873 = vld [vmem:[#allocation7 + $0xec] sm:$0xf]
    %v1874 = vld [vmem:[#allocation7 + $0xf0] sm:$0xf]
    %v1875 = vld [vmem:[#allocation7 + $0xf4] sm:$0xf]
    %v1876 = vld [vmem:[#allocation7 + $0xf8] sm:$0xf]
    %v1877 = vld [vmem:[#allocation7 + $0xfc] sm:$0xf]
    %v1942 = vunpack.c.l.b16 %v1814
    %v1943 = vunpack.c.l.b16 %v1815
    %v1944 = vunpack.c.l.b16 %v1816
    %v1945 = vunpack.c.l.b16 %v1817
    %v1946 = vunpack.c.l.b16 %v1818
    %v1947 = vunpack.c.l.b16 %v1819
    %v1948 = vunpack.c.l.b16 %v1820
    %v1949 = vunpack.c.l.b16 %v1821
    %v1950 = vunpack.c.l.b16 %v1822
    %v1951 = vunpack.c.l.b16 %v1823
    %v1952 = vunpack.c.l.b16 %v1824
    %v1953 = vunpack.c.l.b16 %v1825
    %v1954 = vunpack.c.l.b16 %v1826
    %v1955 = vunpack.c.l.b16 %v1827
    %v1956 = vunpack.c.l.b16 %v1828
    %v1957 = vunpack.c.l.b16 %v1829
    %v1958 = vunpack.c.l.b16 %v1830
    %v1959 = vunpack.c.l.b16 %v1831
    %v1960 = vunpack.c.l.b16 %v1832
    %v1961 = vunpack.c.l.b16 %v1833
    %v1962 = vunpack.c.l.b16 %v1834
    %v1963 = vunpack.c.l.b16 %v1835
    %v1964 = vunpack.c.l.b16 %v1836
    %v1965 = vunpack.c.l.b16 %v1837
    %v1966 = vunpack.c.l.b16 %v1838
    %v1967 = vunpack.c.l.b16 %v1839
    %v1968 = vunpack.c.l.b16 %v1840
    %v1969 = vunpack.c.l.b16 %v1841
    %v1970 = vunpack.c.l.b16 %v1842
    %v1971 = vunpack.c.l.b16 %v1843
    %v1972 = vunpack.c.l.b16 %v1844
    %v1973 = vunpack.c.l.b16 %v1845
    %v1974 = vunpack.c.l.b16 %v1846
    %v1975 = vunpack.c.l.b16 %v1847
    %v1976 = vunpack.c.l.b16 %v1848
    %v1977 = vunpack.c.l.b16 %v1849
    %v1978 = vunpack.c.l.b16 %v1850
    %v1979 = vunpack.c.l.b16 %v1851
    %v1980 = vunpack.c.l.b16 %v1852
    %v1981 = vunpack.c.l.b16 %v1853
    %v1982 = vunpack.c.l.b16 %v1854
    %v1983 = vunpack.c.l.b16 %v1855
    %v1984 = vunpack.c.l.b16 %v1856
    %v1985 = vunpack.c.l.b16 %v1857
    %v1986 = vunpack.c.l.b16 %v1858
    %v1987 = vunpack.c.l.b16 %v1859
    %v1988 = vunpack.c.l.b16 %v1860
    %v1989 = vunpack.c.l.b16 %v1861
    %v1990 = vunpack.c.l.b16 %v1862
    %v1991 = vunpack.c.l.b16 %v1863
    %v1992 = vunpack.c.l.b16 %v1864
    %v1993 = vunpack.c.l.b16 %v1865
    %v1994 = vunpack.c.l.b16 %v1866
    %v1995 = vunpack.c.l.b16 %v1867
    %v1996 = vunpack.c.l.b16 %v1868
    %v1997 = vunpack.c.l.b16 %v1869
    %v1998 = vunpack.c.l.b16 %v1870
    %v1999 = vunpack.c.l.b16 %v1871
    %v2000 = vunpack.c.l.b16 %v1872
    %v2001 = vunpack.c.l.b16 %v1873
    %v2002 = vunpack.c.l.b16 %v1874
    %v2003 = vunpack.c.l.b16 %v1875
    %v2004 = vunpack.c.l.b16 %v1876
    %v2005 = vunpack.c.l.b16 %v1877
    %v2006 = vpack.c.b16 %v1943, %v1942
    %v2007 = vpack.c.b16 %v1945, %v1944
    %v2008 = vpack.c.b16 %v1947, %v1946
    %v2009 = vpack.c.b16 %v1949, %v1948
    %v2010 = vpack.c.b16 %v1951, %v1950
    %v2011 = vpack.c.b16 %v1953, %v1952
    %v2012 = vpack.c.b16 %v1955, %v1954
    %v2013 = vpack.c.b16 %v1957, %v1956
    %v2014 = vpack.c.b16 %v1959, %v1958
    %v2015 = vpack.c.b16 %v1961, %v1960
    %v2016 = vpack.c.b16 %v1963, %v1962
    %v2017 = vpack.c.b16 %v1965, %v1964
    %v2018 = vpack.c.b16 %v1967, %v1966
    %v2019 = vpack.c.b16 %v1969, %v1968
    %v2020 = vpack.c.b16 %v1971, %v1970
    %v2021 = vpack.c.b16 %v1973, %v1972
    %v2022 = vpack.c.b16 %v1975, %v1974
    %v2023 = vpack.c.b16 %v1977, %v1976
    %v2024 = vpack.c.b16 %v1979, %v1978
    %v2025 = vpack.c.b16 %v1981, %v1980
    %v2026 = vpack.c.b16 %v1983, %v1982
    %v2027 = vpack.c.b16 %v1985, %v1984
    %v2028 = vpack.c.b16 %v1987, %v1986
    %v2029 = vpack.c.b16 %v1989, %v1988
    %v2030 = vpack.c.b16 %v1991, %v1990
    %v2031 = vpack.c.b16 %v1993, %v1992
    %v2032 = vpack.c.b16 %v1995, %v1994
    %v2033 = vpack.c.b16 %v1997, %v1996
    %v2034 = vpack.c.b16 %v1999, %v1998
    %v2035 = vpack.c.b16 %v2001, %v2000
    %v2036 = vpack.c.b16 %v2003, %v2002
    %v2037 = vpack.c.b16 %v2005, %v2004
    %2070 = vmatpush.bf16.msra.mxu0 %v2013
    %2071 = vmatpush.bf16.msra.mxu0 %v2012
    %2072 = vmatpush.bf16.msra.mxu0 %v2011
    %2073 = vmatpush.bf16.msra.mxu0 %v2010
    %2074 = vmatpush.bf16.msra.mxu0 %v2009
    %2075 = vmatpush.bf16.msra.mxu0 %v2008
    %2076 = vmatpush.bf16.msra.mxu0 %v2007
    %2077 = vmatpush.bf16.msra.mxu0 %v2006
    %2078 = vmatmul.bf16.gmra.mxu0 %v1194
    %v2079 = vpop.f32.mrf.mxu0
    %v2080 = vadd.f32 0.0, %v2079
    %v2081 = vpop.f32.mrf.mxu0
    %2082 = vdwg.mxu0
    %2083 = vmatpush.bf16.msra.mxu0 %v2021
    %2084 = vmatpush.bf16.msra.mxu0 %v2020
    %2085 = vmatpush.bf16.msra.mxu0 %v2019
    %2086 = vmatpush.bf16.msra.mxu0 %v2018
    %2087 = vmatpush.bf16.msra.mxu0 %v2017
    %2088 = vmatpush.bf16.msra.mxu0 %v2016
    %2089 = vmatpush.bf16.msra.mxu0 %v2015
    %2090 = vmatpush.bf16.msra.mxu0 %v2014
    %2091 = vmatmul.bf16.gmra.mxu0 %v1195
    %v2092 = vpop.f32.mrf.mxu0
    %v2093 = vadd.f32 %v2080, %v2092
    %v2094 = vpop.f32.mrf.mxu0
    %2095 = vdwg.mxu0
    %2096 = vmatpush.bf16.msra.mxu0 %v2029
    %2097 = vmatpush.bf16.msra.mxu0 %v2028
    %2098 = vmatpush.bf16.msra.mxu0 %v2027
    %2099 = vmatpush.bf16.msra.mxu0 %v2026
    %2100 = vmatpush.bf16.msra.mxu0 %v2025
    %2101 = vmatpush.bf16.msra.mxu0 %v2024
    %2102 = vmatpush.bf16.msra.mxu0 %v2023
    %2103 = vmatpush.bf16.msra.mxu0 %v2022
    %2104 = vmatmul.bf16.gmra.mxu0 %v1196
    %v2105 = vpop.f32.mrf.mxu0
    %v2106 = vadd.f32 %v2093, %v2105
    %v2107 = vpop.f32.mrf.mxu0
    %2108 = vdwg.mxu0
    %2109 = vmatpush.bf16.msra.mxu0 %v2037
    %2110 = vmatpush.bf16.msra.mxu0 %v2036
    %2111 = vmatpush.bf16.msra.mxu0 %v2035
    %2112 = vmatpush.bf16.msra.mxu0 %v2034
    %2113 = vmatpush.bf16.msra.mxu0 %v2033
    %2114 = vmatpush.bf16.msra.mxu0 %v2032
    %2115 = vmatpush.bf16.msra.mxu0 %v2031
    %2116 = vmatpush.bf16.msra.mxu0 %v2030
    %2117 = vmatmul.bf16.gmra.mxu0 %v1197
    %v2118 = vpop.f32.mrf.mxu0
    %v2119 = vadd.f32 %v2106, %v2118
    %v2120 = vpop.f32.mrf.mxu0
    %2121 = vdwg.mxu0
    %v2122 = vadd.f32 %v1811, %v2119
    %v2123 = vld [vmem:[%s9] sm:$0x1]
    %v2125 = vperm.slane %v2123, 0
    %v2127 = vadd.f32 %v2122, %v2125
    %2128 = vst [vmem:[#allocation8] sm:$0xff] %v2127
    // Predicated region
    $region54: #{tpu_custom_call.1} parent=1 // pred_check
      _
    $region55: #{tpu_custom_call.1} parent=1 // pred_check_branch
      %2130 = sbr.rel (0) target = $region57
    $region56: #{tpu_custom_call.1} parent=1 // pred_region
      %2132 = vsyncadd [#allocation4], 0
      %s2134 = sshll.u32 [#allocation8], 4
      %s2135 = int_to_ptr.vmem [resolvable:$true] %s2134
      %s2136 = sshll.u32 %s10, 4
      %s2137 = int_to_ptr.hbm [resolvable:$true] %s2136
      %2139 = dma.vmem_to_hbm [thread:$0]  %s2135, 128, %s2137, [#allocation4]
    $region57: #{tpu_custom_call.1} parent=1 // pred_fallthru
      _
    // Predicated region
    $region58: #{tpu_custom_call.1} parent=1 // pred_check
      _
    $region59: #{tpu_custom_call.1} parent=1 // pred_check_branch
      %2141 = sbr.rel (0) target = $region61
    $region60: #{tpu_custom_call.1} parent=1 // pred_region
      %2143 = dma.done [#allocation4], 128
    $region61: #{tpu_custom_call.1} parent=1 // pred_fallthru
      _
    %2144 = vsyncpa [#allocation3], 1
    %2145 = vsyncpa [#allocation6], 1
    %2146 = vsyncpa [#allocation4], 1

// kernel: tpu_custom_call.1
$region0: #{tpu_custom_call.1}
  #allocation0 [shape = 'u32[]', space=smem, size = 0x4, offset = 0x4, fixed_abs, tag = 'smem constant byte address 0x4 - core index']
  #allocation1 [shape = 'u32[72,128]{1,0:T(1,128)}', space=vmem, size = 0x9000, scoped, tag = 'internal scratch']
  %s0 = inlined_call_operand.vmem [shape: bf16[3,8,1024], index: 0, kind: input, shape index: {}]
  %s1 = inlined_call_operand.vmem [shape: bf16[1024,32], index: 1, kind: input, shape index: {}]
  %s2 = inlined_call_operand.vmem [shape: f32[1,32], index: 2, kind: input, shape index: {}]
  %s3 = inlined_call_operand.hbm [shape: bf16[32,512], index: 3, kind: input, shape index: {}]
  %s4 = inlined_call_operand.hbm [shape: bf16[32,512], index: 4, kind: input, shape index: {}]
  %s5 = inlined_call_operand.vmem [shape: f32[1,512], index: 5, kind: input, shape index: {}]
  %s6 = inlined_call_operand.vmem [shape: bf16[512,128], index: 6, kind: input, shape index: {}]
  %s7 = inlined_call_operand.vmem [shape: bf16[512,128], index: 7, kind: input, shape index: {}]
  %s8 = inlined_call_operand.hbm [shape: bf16[512,128], index: 8, kind: input, shape index: {}]
  %s9 = inlined_call_operand.vmem [shape: f32[1,128], index: 9, kind: input, shape index: {}]
  %s10 = inlined_call_operand.hbm [shape: f32[8,128], index: 10, kind: output, shape index: {}]
  %s11 = sld [smem:[#allocation0]]
  $region62: #{tpu_custom_call.1} parent=0
    _
  %s13 = ssub.s32 1, %s11
  %s14 = scalar_select 0, %s13, %s11
  $region1: #{tpu_custom_call.1} parent=0
    #allocation2 [shape = 'u8[32768]{0}', space=vmem, size = 0x8000, scoped, tag = 'input window, operand 3, single buffered']
    #allocation3 [shape = 's32[1]{0}', space=sflag, size = 0x4, scoped, tag = 'scoped memory for tpu_custom_call.1']
    #allocation4 [shape = 's32[1]{0}', space=sflag, size = 0x4, scoped, tag = 'scoped memory for tpu_custom_call.1']
    #allocation5 [shape = 'u8[32768]{0}', space=vmem, size = 0x8000, scoped, tag = 'input window, operand 4, single buffered']
    #allocation6 [shape = 's32[1]{0}', space=sflag, size = 0x4, scoped, tag = 'scoped memory for tpu_custom_call.1']
    #allocation7 [shape = 'u8[131072]{0}', space=vmem, size = 0x20000, scoped, tag = 'input window, operand 8, single buffered']
    #allocation8 [shape = 'u8[4096]{0}', space=vmem, size = 0x1000, scoped, tag = 'output window, operand 0, single buffered']
    %15 = vsyncpa [#allocation3], 0
    %16 = vsyncpa [#allocation6], 0
    %17 = vsyncpa [#allocation4], 0
    // Predicated region
    $region2: #{tpu_custom_call.1} parent=1 // pred_check
      _
    $region3: #{tpu_custom_call.1} parent=1 // pred_check_branch
      %19 = sbr.rel (0) target = $region5
    $region4: #{tpu_custom_call.1} parent=1 // pred_region
      _
    $region5: #{tpu_custom_call.1} parent=1 // pred_fallthru
      _
    // Predicated region
    $region6: #{tpu_custom_call.1} parent=1 // pred_check
      _
    $region7: #{tpu_custom_call.1} parent=1 // pred_check_branch
      %21 = sbr.rel (0) target = $region9
    $region8: #{tpu_custom_call.1} parent=1 // pred_region
      _
    $region9: #{tpu_custom_call.1} parent=1 // pred_fallthru
      _
    // Predicated region
    $region10: #{tpu_custom_call.1} parent=1 // pred_check
      _
    $region11: #{tpu_custom_call.1} parent=1 // pred_check_branch
      %23 = sbr.rel (0) target = $region13
    $region12: #{tpu_custom_call.1} parent=1 // pred_region
      _
    $region13: #{tpu_custom_call.1} parent=1 // pred_fallthru
      _
    // Predicated region
    $region14: #{tpu_custom_call.1} parent=1 // pred_check
      _
    $region15: #{tpu_custom_call.1} parent=1 // pred_check_branch
      %25 = sbr.rel (0) target = $region17
    $region16: #{tpu_custom_call.1} parent=1 // pred_region
      %27 = vsyncadd [#allocation3], 0
      %s28 = sshll.u32 %s3, 4
      %s29 = int_to_ptr.hbm [resolvable:$true] %s28
      %s30 = sshll.u32 [#allocation2], 4
      %s31 = int_to_ptr.vmem [resolvable:$true] %s30
      %36 = dma.hbm_to_vmem [thread:$0]  %s29, 1024, %s31, [#allocation3], 256, 256, 16
    $region17: #{tpu_custom_call.1} parent=1 // pred_fallthru
      _
    // Predicated region
    $region18: #{tpu_custom_call.1} parent=1 // pred_check
      _
    $region19: #{tpu_custom_call.1} parent=1 // pred_check_branch
      %38 = sbr.rel (0) target = $region21
    $region20: #{tpu_custom_call.1} parent=1 // pred_region
      %40 = vsyncadd [#allocation6], 0
      %s41 = sshll.u32 %s4, 4
      %s42 = int_to_ptr.hbm [resolvable:$true] %s41
      %s43 = sshll.u32 [#allocation5], 4
      %s44 = int_to_ptr.vmem [resolvable:$true] %s43
      %49 = dma.hbm_to_vmem [thread:$0]  %s42, 1024, %s44, [#allocation6], 256, 256, 16
    $region21: #{tpu_custom_call.1} parent=1 // pred_fallthru
      _
    // Predicated region
    $region22: #{tpu_custom_call.1} parent=1 // pred_check
      _
    $region23: #{tpu_custom_call.1} parent=1 // pred_check_branch
      %51 = sbr.rel (0) target = $region25
    $region24: #{tpu_custom_call.1} parent=1 // pred_region
      _
    $region25: #{tpu_custom_call.1} parent=1 // pred_fallthru
      _
    // Predicated region
    $region26: #{tpu_custom_call.1} parent=1 // pred_check
      _
    $region27: #{tpu_custom_call.1} parent=1 // pred_check_branch
      %53 = sbr.rel (0) target = $region29
    $region28: #{tpu_custom_call.1} parent=1 // pred_region
      _
    $region29: #{tpu_custom_call.1} parent=1 // pred_fallthru
      _
    // Predicated region
    $region30: #{tpu_custom_call.1} parent=1 // pred_check
      _
    $region31: #{tpu_custom_call.1} parent=1 // pred_check_branch
      %55 = sbr.rel (0) target = $region33
    $region32: #{tpu_custom_call.1} parent=1 // pred_region
      _
    $region33: #{tpu_custom_call.1} parent=1 // pred_fallthru
      _
    // Predicated region
    $region34: #{tpu_custom_call.1} parent=1 // pred_check
      _
    $region35: #{tpu_custom_call.1} parent=1 // pred_check_branch
      %57 = sbr.rel (0) target = $region37
    $region36: #{tpu_custom_call.1} parent=1 // pred_region
      %59 = vsyncadd [#allocation6], 0
      %s60 = sshll.u32 %s8, 4
      %s61 = int_to_ptr.hbm [resolvable:$true] %s60
      %s62 = sshll.u32 [#allocation7], 4
      %s63 = int_to_ptr.vmem [resolvable:$true] %s62
      %68 = dma.hbm_to_vmem [thread:$0]  %s61, 4096, %s63, [#allocation6], 64, 64, 4
    $region37: #{tpu_custom_call.1} parent=1 // pred_fallthru
      _
    // Predicated region
    $region38: #{tpu_custom_call.1} parent=1 // pred_check
      _
    $region39: #{tpu_custom_call.1} parent=1 // pred_check_branch
      %70 = sbr.rel (0) target = $region41
    $region40: #{tpu_custom_call.1} parent=1 // pred_region
      _
    $region41: #{tpu_custom_call.1} parent=1 // pred_fallthru
      _
    // Predicated region
    $region42: #{tpu_custom_call.1} parent=1 // pred_check
      _
    $region43: #{tpu_custom_call.1} parent=1 // pred_check_branch
      %72 = sbr.rel (0) target = $region45
    $region44: #{tpu_custom_call.1} parent=1 // pred_region
      %74 = dma.done [#allocation3], 1024
    $region45: #{tpu_custom_call.1} parent=1 // pred_fallthru
      _
    // Predicated region
    $region46: #{tpu_custom_call.1} parent=1 // pred_check
      _
    $region47: #{tpu_custom_call.1} parent=1 // pred_check_branch
      %76 = sbr.rel (0) target = $region49
    $region48: #{tpu_custom_call.1} parent=1 // pred_region
      %78 = dma.done [#allocation6], 1024
    $region49: #{tpu_custom_call.1} parent=1 // pred_fallthru
      _
    // Predicated region
    $region50: #{tpu_custom_call.1} parent=1 // pred_check
      _
    $region51: #{tpu_custom_call.1} parent=1 // pred_check_branch
      %80 = sbr.rel (0) target = $region53
    $region52: #{tpu_custom_call.1} parent=1 // pred_region
      %82 = dma.done [#allocation6], 4096
    $region53: #{tpu_custom_call.1} parent=1 // pred_fallthru
      _
    %v84 = vld [vmem:[%s0] sm:$0xff]
    %v85 = vld [vmem:[%s0 + $0x8] sm:$0xff]
    %v86 = vld [vmem:[%s0 + $0x10] sm:$0xff]
    %v87 = vld [vmem:[%s0 + $0x18] sm:$0xff]
    %v88 = vld [vmem:[%s0 + $0x20] sm:$0xff]
    %v89 = vld [vmem:[%s0 + $0x28] sm:$0xff]
    %v90 = vld [vmem:[%s0 + $0x30] sm:$0xff]
    %v91 = vld [vmem:[%s0 + $0x38] sm:$0xff]
    %v92 = vld [vmem:[%s0 + $0x40] sm:$0xff]
    %v93 = vld [vmem:[%s0 + $0x48] sm:$0xff]
    %v94 = vld [vmem:[%s0 + $0x50] sm:$0xff]
    %v95 = vld [vmem:[%s0 + $0x58] sm:$0xff]
    %v96 = vld [vmem:[%s2] sm:$0x1]
    %v97 = vld [vmem:[%s1] sm:$0xf]
    %v98 = vld [vmem:[%s1 + $0x4] sm:$0xf]
    %v99 = vld [vmem:[%s1 + $0x8] sm:$0xf]
    %v100 = vld [vmem:[%s1 + $0xc] sm:$0xf]
    %v101 = vld [vmem:[%s1 + $0x10] sm:$0xf]
    %v102 = vld [vmem:[%s1 + $0x14] sm:$0xf]
    %v103 = vld [vmem:[%s1 + $0x18] sm:$0xf]
    %v104 = vld [vmem:[%s1 + $0x1c] sm:$0xf]
    %v105 = vld [vmem:[%s1 + $0x20] sm:$0xf]
    %v106 = vld [vmem:[%s1 + $0x24] sm:$0xf]
    %v107 = vld [vmem:[%s1 + $0x28] sm:$0xf]
    %v108 = vld [vmem:[%s1 + $0x2c] sm:$0xf]
    %v109 = vld [vmem:[%s1 + $0x30] sm:$0xf]
    %v110 = vld [vmem:[%s1 + $0x34] sm:$0xf]
    %v111 = vld [vmem:[%s1 + $0x38] sm:$0xf]
    %v112 = vld [vmem:[%s1 + $0x3c] sm:$0xf]
    %v113 = vld [vmem:[%s1 + $0x40] sm:$0xf]
    %v114 = vld [vmem:[%s1 + $0x44] sm:$0xf]
    %v115 = vld [vmem:[%s1 + $0x48] sm:$0xf]
    %v116 = vld [vmem:[%s1 + $0x4c] sm:$0xf]
    %v117 = vld [vmem:[%s1 + $0x50] sm:$0xf]
    %v118 = vld [vmem:[%s1 + $0x54] sm:$0xf]
    %v119 = vld [vmem:[%s1 + $0x58] sm:$0xf]
    %v120 = vld [vmem:[%s1 + $0x5c] sm:$0xf]
    %v121 = vld [vmem:[%s1 + $0x60] sm:$0xf]
    %v122 = vld [vmem:[%s1 + $0x64] sm:$0xf]
    %v123 = vld [vmem:[%s1 + $0x68] sm:$0xf]
    %v124 = vld [vmem:[%s1 + $0x6c] sm:$0xf]
    %v125 = vld [vmem:[%s1 + $0x70] sm:$0xf]
    %v126 = vld [vmem:[%s1 + $0x74] sm:$0xf]
    %v127 = vld [vmem:[%s1 + $0x78] sm:$0xf]
    %v128 = vld [vmem:[%s1 + $0x7c] sm:$0xf]
    %v129 = vld [vmem:[%s1 + $0x80] sm:$0xf]
    %v130 = vld [vmem:[%s1 + $0x84] sm:$0xf]
    %v131 = vld [vmem:[%s1 + $0x88] sm:$0xf]
    %v132 = vld [vmem:[%s1 + $0x8c] sm:$0xf]
    %v133 = vld [vmem:[%s1 + $0x90] sm:$0xf]
    %v134 = vld [vmem:[%s1 + $0x94] sm:$0xf]
    %v135 = vld [vmem:[%s1 + $0x98] sm:$0xf]
    %v136 = vld [vmem:[%s1 + $0x9c] sm:$0xf]
    %v137 = vld [vmem:[%s1 + $0xa0] sm:$0xf]
    %v138 = vld [vmem:[%s1 + $0xa4] sm:$0xf]
    %v139 = vld [vmem:[%s1 + $0xa8] sm:$0xf]
    %v140 = vld [vmem:[%s1 + $0xac] sm:$0xf]
    %v141 = vld [vmem:[%s1 + $0xb0] sm:$0xf]
    %v142 = vld [vmem:[%s1 + $0xb4] sm:$0xf]
    %v143 = vld [vmem:[%s1 + $0xb8] sm:$0xf]
    %v144 = vld [vmem:[%s1 + $0xbc] sm:$0xf]
    %v145 = vld [vmem:[%s1 + $0xc0] sm:$0xf]
    %v146 = vld [vmem:[%s1 + $0xc4] sm:$0xf]
    %v147 = vld [vmem:[%s1 + $0xc8] sm:$0xf]
    %v148 = vld [vmem:[%s1 + $0xcc] sm:$0xf]
    %v149 = vld [vmem:[%s1 + $0xd0] sm:$0xf]
    %v150 = vld [vmem:[%s1 + $0xd4] sm:$0xf]
    %v151 = vld [vmem:[%s1 + $0xd8] sm:$0xf]
    %v152 = vld [vmem:[%s1 + $0xdc] sm:$0xf]
    %v153 = vld [vmem:[%s1 + $0xe0] sm:$0xf]
    %v154 = vld [vmem:[%s1 + $0xe4] sm:$0xf]
    %v155 = vld [vmem:[%s1 + $0xe8] sm:$0xf]
    %v156 = vld [vmem:[%s1 + $0xec] sm:$0xf]
    %v157 = vld [vmem:[%s1 + $0xf0] sm:$0xf]
    %v158 = vld [vmem:[%s1 + $0xf4] sm:$0xf]
    %v159 = vld [vmem:[%s1 + $0xf8] sm:$0xf]
    %v160 = vld [vmem:[%s1 + $0xfc] sm:$0xf]
    %v161 = vld [vmem:[%s1 + $0x100] sm:$0xf]
    %v162 = vld [vmem:[%s1 + $0x104] sm:$0xf]
    %v163 = vld [vmem:[%s1 + $0x108] sm:$0xf]
    %v164 = vld [vmem:[%s1 + $0x10c] sm:$0xf]
    %v165 = vld [vmem:[%s1 + $0x110] sm:$0xf]
    %v166 = vld [vmem:[%s1 + $0x114] sm:$0xf]
    %v167 = vld [vmem:[%s1 + $0x118] sm:$0xf]
    %v168 = vld [vmem:[%s1 + $0x11c] sm:$0xf]
    %v169 = vld [vmem:[%s1 + $0x120] sm:$0xf]
    %v170 = vld [vmem:[%s1 + $0x124] sm:$0xf]
    %v171 = vld [vmem:[%s1 + $0x128] sm:$0xf]
    %v172 = vld [vmem:[%s1 + $0x12c] sm:$0xf]
    %v173 = vld [vmem:[%s1 + $0x130] sm:$0xf]
    %v174 = vld [vmem:[%s1 + $0x134] sm:$0xf]
    %v175 = vld [vmem:[%s1 + $0x138] sm:$0xf]
    %v176 = vld [vmem:[%s1 + $0x13c] sm:$0xf]
    %v177 = vld [vmem:[%s1 + $0x140] sm:$0xf]
    %v178 = vld [vmem:[%s1 + $0x144] sm:$0xf]
    %v179 = vld [vmem:[%s1 + $0x148] sm:$0xf]
    %v180 = vld [vmem:[%s1 + $0x14c] sm:$0xf]
    %v181 = vld [vmem:[%s1 + $0x150] sm:$0xf]
    %v182 = vld [vmem:[%s1 + $0x154] sm:$0xf]
    %v183 = vld [vmem:[%s1 + $0x158] sm:$0xf]
    %v184 = vld [vmem:[%s1 + $0x15c] sm:$0xf]
    %v185 = vld [vmem:[%s1 + $0x160] sm:$0xf]
    %v186 = vld [vmem:[%s1 + $0x164] sm:$0xf]
    %v187 = vld [vmem:[%s1 + $0x168] sm:$0xf]
    %v188 = vld [vmem:[%s1 + $0x16c] sm:$0xf]
    %v189 = vld [vmem:[%s1 + $0x170] sm:$0xf]
    %v190 = vld [vmem:[%s1 + $0x174] sm:$0xf]
    %v191 = vld [vmem:[%s1 + $0x178] sm:$0xf]
    %v192 = vld [vmem:[%s1 + $0x17c] sm:$0xf]
    %v193 = vld [vmem:[%s1 + $0x180] sm:$0xf]
    %v194 = vld [vmem:[%s1 + $0x184] sm:$0xf]
    %v195 = vld [vmem:[%s1 + $0x188] sm:$0xf]
    %v196 = vld [vmem:[%s1 + $0x18c] sm:$0xf]
    %v197 = vld [vmem:[%s1 + $0x190] sm:$0xf]
    %v198 = vld [vmem:[%s1 + $0x194] sm:$0xf]
    %v199 = vld [vmem:[%s1 + $0x198] sm:$0xf]
    %v200 = vld [vmem:[%s1 + $0x19c] sm:$0xf]
    %v201 = vld [vmem:[%s1 + $0x1a0] sm:$0xf]
    %v202 = vld [vmem:[%s1 + $0x1a4] sm:$0xf]
    %v203 = vld [vmem:[%s1 + $0x1a8] sm:$0xf]
    %v204 = vld [vmem:[%s1 + $0x1ac] sm:$0xf]
    %v205 = vld [vmem:[%s1 + $0x1b0] sm:$0xf]
    %v206 = vld [vmem:[%s1 + $0x1b4] sm:$0xf]
    %v207 = vld [vmem:[%s1 + $0x1b8] sm:$0xf]
    %v208 = vld [vmem:[%s1 + $0x1bc] sm:$0xf]
    %v209 = vld [vmem:[%s1 + $0x1c0] sm:$0xf]
    %v210 = vld [vmem:[%s1 + $0x1c4] sm:$0xf]
    %v211 = vld [vmem:[%s1 + $0x1c8] sm:$0xf]
    %v212 = vld [vmem:[%s1 + $0x1cc] sm:$0xf]
    %v213 = vld [vmem:[%s1 + $0x1d0] sm:$0xf]
    %v214 = vld [vmem:[%s1 + $0x1d4] sm:$0xf]
    %v215 = vld [vmem:[%s1 + $0x1d8] sm:$0xf]
    %v216 = vld [vmem:[%s1 + $0x1dc] sm:$0xf]
    %v217 = vld [vmem:[%s1 + $0x1e0] sm:$0xf]
    %v218 = vld [vmem:[%s1 + $0x1e4] sm:$0xf]
    %v219 = vld [vmem:[%s1 + $0x1e8] sm:$0xf]
    %v220 = vld [vmem:[%s1 + $0x1ec] sm:$0xf]
    %v221 = vld [vmem:[%s1 + $0x1f0] sm:$0xf]
    %v222 = vld [vmem:[%s1 + $0x1f4] sm:$0xf]
    %v223 = vld [vmem:[%s1 + $0x1f8] sm:$0xf]
    %v224 = vld [vmem:[%s1 + $0x1fc] sm:$0xf]
    %v226 = vperm.slane %v96, 0
    %v240 = vunpack.c.l.b16 %v84
    %v241 = vunpack.c.h.b16 %v84
    %v242 = vunpack.c.l.b16 %v85
    %v243 = vunpack.c.h.b16 %v85
    %v244 = vunpack.c.l.b16 %v86
    %v245 = vunpack.c.h.b16 %v86
    %v246 = vunpack.c.l.b16 %v87
    %v247 = vunpack.c.h.b16 %v87
    %v248 = vunpack.c.l.b16 %v88
    %v249 = vunpack.c.h.b16 %v88
    %v250 = vunpack.c.l.b16 %v89
    %v251 = vunpack.c.h.b16 %v89
    %v252 = vunpack.c.l.b16 %v90
    %v253 = vunpack.c.h.b16 %v90
    %v254 = vunpack.c.l.b16 %v91
    %v255 = vunpack.c.h.b16 %v91
    %v256 = vunpack.c.l.b16 %v92
    %v257 = vunpack.c.h.b16 %v92
    %v258 = vunpack.c.l.b16 %v93
    %v259 = vunpack.c.h.b16 %v93
    %v260 = vunpack.c.l.b16 %v94
    %v261 = vunpack.c.h.b16 %v94
    %v262 = vunpack.c.l.b16 %v95
    %v263 = vunpack.c.h.b16 %v95
    %v264 = vpack.c.b16 %v248, %v240
    %v265 = vpack.c.b16 %v249, %v241
    %v266 = vpack.c.b16 %v250, %v242
    %v267 = vpack.c.b16 %v251, %v243
    %v268 = vpack.c.b16 %v252, %v244
    %v269 = vpack.c.b16 %v253, %v245
    %v270 = vpack.c.b16 %v254, %v246
    %v271 = vpack.c.b16 %v255, %v247
    %v272 = vpack.c.b16 %v256, %v256
    %v273 = vpack.c.b16 %v257, %v257
    %v274 = vpack.c.b16 %v258, %v258
    %v275 = vpack.c.b16 %v259, %v259
    %v276 = vpack.c.b16 %v260, %v260
    %v277 = vpack.c.b16 %v261, %v261
    %v278 = vpack.c.b16 %v262, %v262
    %v279 = vpack.c.b16 %v263, %v263
    %v424 = vunpack.c.l.b16 %v97
    %v425 = vunpack.c.l.b16 %v98
    %v426 = vunpack.c.l.b16 %v99
    %v427 = vunpack.c.l.b16 %v100
    %v428 = vunpack.c.l.b16 %v101
    %v429 = vunpack.c.l.b16 %v102
    %v430 = vunpack.c.l.b16 %v103
    %v431 = vunpack.c.l.b16 %v104
    %v432 = vunpack.c.l.b16 %v105
    %v433 = vunpack.c.l.b16 %v106
    %v434 = vunpack.c.l.b16 %v107
    %v435 = vunpack.c.l.b16 %v108
    %v436 = vunpack.c.l.b16 %v109
    %v437 = vunpack.c.l.b16 %v110
    %v438 = vunpack.c.l.b16 %v111
    %v439 = vunpack.c.l.b16 %v112
    %v440 = vunpack.c.l.b16 %v113
    %v441 = vunpack.c.l.b16 %v114
    %v442 = vunpack.c.l.b16 %v115
    %v443 = vunpack.c.l.b16 %v116
    %v444 = vunpack.c.l.b16 %v117
    %v445 = vunpack.c.l.b16 %v118
    %v446 = vunpack.c.l.b16 %v119
    %v447 = vunpack.c.l.b16 %v120
    %v448 = vunpack.c.l.b16 %v121
    %v449 = vunpack.c.l.b16 %v122
    %v450 = vunpack.c.l.b16 %v123
    %v451 = vunpack.c.l.b16 %v124
    %v452 = vunpack.c.l.b16 %v125
    %v453 = vunpack.c.l.b16 %v126
    %v454 = vunpack.c.l.b16 %v127
    %v455 = vunpack.c.l.b16 %v128
    %v456 = vunpack.c.l.b16 %v129
    %v457 = vunpack.c.l.b16 %v130
    %v458 = vunpack.c.l.b16 %v131
    %v459 = vunpack.c.l.b16 %v132
    %v460 = vunpack.c.l.b16 %v133
    %v461 = vunpack.c.l.b16 %v134
    %v462 = vunpack.c.l.b16 %v135
    %v463 = vunpack.c.l.b16 %v136
    %v464 = vunpack.c.l.b16 %v137
    %v465 = vunpack.c.l.b16 %v138
    %v466 = vunpack.c.l.b16 %v139
    %v467 = vunpack.c.l.b16 %v140
    %v468 = vunpack.c.l.b16 %v141
    %v469 = vunpack.c.l.b16 %v142
    %v470 = vunpack.c.l.b16 %v143
    %v471 = vunpack.c.l.b16 %v144
    %v472 = vunpack.c.l.b16 %v145
    %v473 = vunpack.c.l.b16 %v146
    %v474 = vunpack.c.l.b16 %v147
    %v475 = vunpack.c.l.b16 %v148
    %v476 = vunpack.c.l.b16 %v149
    %v477 = vunpack.c.l.b16 %v150
    %v478 = vunpack.c.l.b16 %v151
    %v479 = vunpack.c.l.b16 %v152
    %v480 = vunpack.c.l.b16 %v153
    %v481 = vunpack.c.l.b16 %v154
    %v482 = vunpack.c.l.b16 %v155
    %v483 = vunpack.c.l.b16 %v156
    %v484 = vunpack.c.l.b16 %v157
    %v485 = vunpack.c.l.b16 %v158
    %v486 = vunpack.c.l.b16 %v159
    %v487 = vunpack.c.l.b16 %v160
    %v488 = vunpack.c.l.b16 %v161
    %v489 = vunpack.c.l.b16 %v162
    %v490 = vunpack.c.l.b16 %v163
    %v491 = vunpack.c.l.b16 %v164
    %v492 = vunpack.c.l.b16 %v165
    %v493 = vunpack.c.l.b16 %v166
    %v494 = vunpack.c.l.b16 %v167
    %v495 = vunpack.c.l.b16 %v168
    %v496 = vunpack.c.l.b16 %v169
    %v497 = vunpack.c.l.b16 %v170
    %v498 = vunpack.c.l.b16 %v171
    %v499 = vunpack.c.l.b16 %v172
    %v500 = vunpack.c.l.b16 %v173
    %v501 = vunpack.c.l.b16 %v174
    %v502 = vunpack.c.l.b16 %v175
    %v503 = vunpack.c.l.b16 %v176
    %v504 = vunpack.c.l.b16 %v177
    %v505 = vunpack.c.l.b16 %v178
    %v506 = vunpack.c.l.b16 %v179
    %v507 = vunpack.c.l.b16 %v180
    %v508 = vunpack.c.l.b16 %v181
    %v509 = vunpack.c.l.b16 %v182
    %v510 = vunpack.c.l.b16 %v183
    %v511 = vunpack.c.l.b16 %v184
    %v512 = vunpack.c.l.b16 %v185
    %v513 = vunpack.c.l.b16 %v186
    %v514 = vunpack.c.l.b16 %v187
    %v515 = vunpack.c.l.b16 %v188
    %v516 = vunpack.c.l.b16 %v189
    %v517 = vunpack.c.l.b16 %v190
    %v518 = vunpack.c.l.b16 %v191
    %v519 = vunpack.c.l.b16 %v192
    %v520 = vunpack.c.l.b16 %v193
    %v521 = vunpack.c.l.b16 %v194
    %v522 = vunpack.c.l.b16 %v195
    %v523 = vunpack.c.l.b16 %v196
    %v524 = vunpack.c.l.b16 %v197
    %v525 = vunpack.c.l.b16 %v198
    %v526 = vunpack.c.l.b16 %v199
    %v527 = vunpack.c.l.b16 %v200
    %v528 = vunpack.c.l.b16 %v201
    %v529 = vunpack.c.l.b16 %v202
    %v530 = vunpack.c.l.b16 %v203
    %v531 = vunpack.c.l.b16 %v204
    %v532 = vunpack.c.l.b16 %v205
    %v533 = vunpack.c.l.b16 %v206
    %v534 = vunpack.c.l.b16 %v207
    %v535 = vunpack.c.l.b16 %v208
    %v536 = vunpack.c.l.b16 %v209
    %v537 = vunpack.c.l.b16 %v210
    %v538 = vunpack.c.l.b16 %v211
    %v539 = vunpack.c.l.b16 %v212
    %v540 = vunpack.c.l.b16 %v213
    %v541 = vunpack.c.l.b16 %v214
    %v542 = vunpack.c.l.b16 %v215
    %v543 = vunpack.c.l.b16 %v216
    %v544 = vunpack.c.l.b16 %v217
    %v545 = vunpack.c.l.b16 %v218
    %v546 = vunpack.c.l.b16 %v219
    %v547 = vunpack.c.l.b16 %v220
    %v548 = vunpack.c.l.b16 %v221
    %v549 = vunpack.c.l.b16 %v222
    %v550 = vunpack.c.l.b16 %v223
    %v551 = vunpack.c.l.b16 %v224
    %v552 = vpack.c.b16 %v425, %v424
    %v553 = vpack.c.b16 %v427, %v426
    %v554 = vpack.c.b16 %v429, %v428
    %v555 = vpack.c.b16 %v431, %v430
    %v556 = vpack.c.b16 %v433, %v432
    %v557 = vpack.c.b16 %v435, %v434
    %v558 = vpack.c.b16 %v437, %v436
    %v559 = vpack.c.b16 %v439, %v438
    %v560 = vpack.c.b16 %v441, %v440
    %v561 = vpack.c.b16 %v443, %v442
    %v562 = vpack.c.b16 %v445, %v444
    %v563 = vpack.c.b16 %v447, %v446
    %v564 = vpack.c.b16 %v449, %v448
    %v565 = vpack.c.b16 %v451, %v450
    %v566 = vpack.c.b16 %v453, %v452
    %v567 = vpack.c.b16 %v455, %v454
    %v568 = vpack.c.b16 %v457, %v456
    %v569 = vpack.c.b16 %v459, %v458
    %v570 = vpack.c.b16 %v461, %v460
    %v571 = vpack.c.b16 %v463, %v462
    %v572 = vpack.c.b16 %v465, %v464
    %v573 = vpack.c.b16 %v467, %v466
    %v574 = vpack.c.b16 %v469, %v468
    %v575 = vpack.c.b16 %v471, %v470
    %v576 = vpack.c.b16 %v473, %v472
    %v577 = vpack.c.b16 %v475, %v474
    %v578 = vpack.c.b16 %v477, %v476
    %v579 = vpack.c.b16 %v479, %v478
    %v580 = vpack.c.b16 %v481, %v480
    %v581 = vpack.c.b16 %v483, %v482
    %v582 = vpack.c.b16 %v485, %v484
    %v583 = vpack.c.b16 %v487, %v486
    %v584 = vpack.c.b16 %v489, %v488
    %v585 = vpack.c.b16 %v491, %v490
    %v586 = vpack.c.b16 %v493, %v492
    %v587 = vpack.c.b16 %v495, %v494
    %v588 = vpack.c.b16 %v497, %v496
    %v589 = vpack.c.b16 %v499, %v498
    %v590 = vpack.c.b16 %v501, %v500
    %v591 = vpack.c.b16 %v503, %v502
    %v592 = vpack.c.b16 %v505, %v504
    %v593 = vpack.c.b16 %v507, %v506
    %v594 = vpack.c.b16 %v509, %v508
    %v595 = vpack.c.b16 %v511, %v510
    %v596 = vpack.c.b16 %v513, %v512
    %v597 = vpack.c.b16 %v515, %v514
    %v598 = vpack.c.b16 %v517, %v516
    %v599 = vpack.c.b16 %v519, %v518
    %v600 = vpack.c.b16 %v521, %v520
    %v601 = vpack.c.b16 %v523, %v522
    %v602 = vpack.c.b16 %v525, %v524
    %v603 = vpack.c.b16 %v527, %v526
    %v604 = vpack.c.b16 %v529, %v528
    %v605 = vpack.c.b16 %v531, %v530
    %v606 = vpack.c.b16 %v533, %v532
    %v607 = vpack.c.b16 %v535, %v534
    %v608 = vpack.c.b16 %v537, %v536
    %v609 = vpack.c.b16 %v539, %v538
    %v610 = vpack.c.b16 %v541, %v540
    %v611 = vpack.c.b16 %v543, %v542
    %v612 = vpack.c.b16 %v545, %v544
    %v613 = vpack.c.b16 %v547, %v546
    %v614 = vpack.c.b16 %v549, %v548
    %v615 = vpack.c.b16 %v551, %v550
    %680 = vmatpush.bf16.msra.mxu0 %v559
    %681 = vmatpush.bf16.msra.mxu0 %v558
    %682 = vmatpush.bf16.msra.mxu0 %v557
    %683 = vmatpush.bf16.msra.mxu0 %v556
    %684 = vmatpush.bf16.msra.mxu0 %v555
    %685 = vmatpush.bf16.msra.mxu0 %v554
    %686 = vmatpush.bf16.msra.mxu0 %v553
    %687 = vmatpush.bf16.msra.mxu0 %v552
    %688 = vmatmul.bf16.gmra.mxu0 %v264
    %v689 = vpop.f32.mrf.mxu0
    %v690 = vadd.f32 %v226, %v689
    %v691 = vpop.f32.mrf.mxu0
    %v692 = vadd.f32 %v226, %v691
    %693 = vmatmul.bf16.gmra.mxu0 %v272
    %v694 = vpop.f32.mrf.mxu0
    %v695 = vadd.f32 %v226, %v694
    %v696 = vpop.f32.mrf.mxu0
    %697 = vdwg.mxu0
    %698 = vmatpush.bf16.msra.mxu0 %v567
    %699 = vmatpush.bf16.msra.mxu0 %v566
    %700 = vmatpush.bf16.msra.mxu0 %v565
    %701 = vmatpush.bf16.msra.mxu0 %v564
    %702 = vmatpush.bf16.msra.mxu0 %v563
    %703 = vmatpush.bf16.msra.mxu0 %v562
    %704 = vmatpush.bf16.msra.mxu0 %v561
    %705 = vmatpush.bf16.msra.mxu0 %v560
    %706 = vmatmul.bf16.gmra.mxu0 %v265
    %v707 = vpop.f32.mrf.mxu0
    %v708 = vadd.f32 %v690, %v707
    %v709 = vpop.f32.mrf.mxu0
    %v710 = vadd.f32 %v692, %v709
    %711 = vmatmul.bf16.gmra.mxu0 %v273
    %v712 = vpop.f32.mrf.mxu0
    %v713 = vadd.f32 %v695, %v712
    %v714 = vpop.f32.mrf.mxu0
    %715 = vdwg.mxu0
    %716 = vmatpush.bf16.msra.mxu0 %v575
    %717 = vmatpush.bf16.msra.mxu0 %v574
    %718 = vmatpush.bf16.msra.mxu0 %v573
    %719 = vmatpush.bf16.msra.mxu0 %v572
    %720 = vmatpush.bf16.msra.mxu0 %v571
    %721 = vmatpush.bf16.msra.mxu0 %v570
    %722 = vmatpush.bf16.msra.mxu0 %v569
    %723 = vmatpush.bf16.msra.mxu0 %v568
    %724 = vmatmul.bf16.gmra.mxu0 %v266
    %v725 = vpop.f32.mrf.mxu0
    %v726 = vadd.f32 %v708, %v725
    %v727 = vpop.f32.mrf.mxu0
    %v728 = vadd.f32 %v710, %v727
    %729 = vmatmul.bf16.gmra.mxu0 %v274
    %v730 = vpop.f32.mrf.mxu0
    %v731 = vadd.f32 %v713, %v730
    %v732 = vpop.f32.mrf.mxu0
    %733 = vdwg.mxu0
    %734 = vmatpush.bf16.msra.mxu0 %v583
    %735 = vmatpush.bf16.msra.mxu0 %v582
    %736 = vmatpush.bf16.msra.mxu0 %v581
    %737 = vmatpush.bf16.msra.mxu0 %v580
    %738 = vmatpush.bf16.msra.mxu0 %v579
    %739 = vmatpush.bf16.msra.mxu0 %v578
    %740 = vmatpush.bf16.msra.mxu0 %v577
    %741 = vmatpush.bf16.msra.mxu0 %v576
    %742 = vmatmul.bf16.gmra.mxu0 %v267
    %v743 = vpop.f32.mrf.mxu0
    %v744 = vadd.f32 %v726, %v743
    %v745 = vpop.f32.mrf.mxu0
    %v746 = vadd.f32 %v728, %v745
    %747 = vmatmul.bf16.gmra.mxu0 %v275
    %v748 = vpop.f32.mrf.mxu0
    %v749 = vadd.f32 %v731, %v748
    %v750 = vpop.f32.mrf.mxu0
    %751 = vdwg.mxu0
    %752 = vmatpush.bf16.msra.mxu0 %v591
    %753 = vmatpush.bf16.msra.mxu0 %v590
    %754 = vmatpush.bf16.msra.mxu0 %v589
    %755 = vmatpush.bf16.msra.mxu0 %v588
    %756 = vmatpush.bf16.msra.mxu0 %v587
    %757 = vmatpush.bf16.msra.mxu0 %v586
    %758 = vmatpush.bf16.msra.mxu0 %v585
    %759 = vmatpush.bf16.msra.mxu0 %v584
    %760 = vmatmul.bf16.gmra.mxu0 %v268
    %v761 = vpop.f32.mrf.mxu0
    %v762 = vadd.f32 %v744, %v761
    %v763 = vpop.f32.mrf.mxu0
    %v764 = vadd.f32 %v746, %v763
    %765 = vmatmul.bf16.gmra.mxu0 %v276
    %v766 = vpop.f32.mrf.mxu0
    %v767 = vadd.f32 %v749, %v766
    %v768 = vpop.f32.mrf.mxu0
    %769 = vdwg.mxu0
    %770 = vmatpush.bf16.msra.mxu0 %v599
    %771 = vmatpush.bf16.msra.mxu0 %v598
    %772 = vmatpush.bf16.msra.mxu0 %v597
    %773 = vmatpush.bf16.msra.mxu0 %v596
    %774 = vmatpush.bf16.msra.mxu0 %v595
    %775 = vmatpush.bf16.msra.mxu0 %v594
    %776 = vmatpush.bf16.msra.mxu0 %v593
    %777 = vmatpush.bf16.msra.mxu0 %v592
    %778 = vmatmul.bf16.gmra.mxu0 %v269
    %v779 = vpop.f32.mrf.mxu0
    %v780 = vadd.f32 %v762, %v779
    %v781 = vpop.f32.mrf.mxu0
    %v782 = vadd.f32 %v764, %v781
    %783 = vmatmul.bf16.gmra.mxu0 %v277
    %v784 = vpop.f32.mrf.mxu0
    %v785 = vadd.f32 %v767, %v784
    %v786 = vpop.f32.mrf.mxu0
    %787 = vdwg.mxu0
    %788 = vmatpush.bf16.msra.mxu0 %v607
    %789 = vmatpush.bf16.msra.mxu0 %v606
    %790 = vmatpush.bf16.msra.mxu0 %v605
    %791 = vmatpush.bf16.msra.mxu0 %v604
    %792 = vmatpush.bf16.msra.mxu0 %v603
    %793 = vmatpush.bf16.msra.mxu0 %v602
    %794 = vmatpush.bf16.msra.mxu0 %v601
    %795 = vmatpush.bf16.msra.mxu0 %v600
    %796 = vmatmul.bf16.gmra.mxu0 %v270
    %v797 = vpop.f32.mrf.mxu0
    %v798 = vadd.f32 %v780, %v797
    %v799 = vpop.f32.mrf.mxu0
    %v800 = vadd.f32 %v782, %v799
    %801 = vmatmul.bf16.gmra.mxu0 %v278
    %v802 = vpop.f32.mrf.mxu0
    %v803 = vadd.f32 %v785, %v802
    %v804 = vpop.f32.mrf.mxu0
    %805 = vdwg.mxu0
    %806 = vmatpush.bf16.msra.mxu0 %v615
    %807 = vmatpush.bf16.msra.mxu0 %v614
    %808 = vmatpush.bf16.msra.mxu0 %v613
    %809 = vmatpush.bf16.msra.mxu0 %v612
    %810 = vmatpush.bf16.msra.mxu0 %v611
    %811 = vmatpush.bf16.msra.mxu0 %v610
    %812 = vmatpush.bf16.msra.mxu0 %v609
    %813 = vmatpush.bf16.msra.mxu0 %v608
    %814 = vmatmul.bf16.gmra.mxu0 %v271
    %v815 = vpop.f32.mrf.mxu0
    %v816 = vadd.f32 %v798, %v815
    %v817 = vpop.f32.mrf.mxu0
    %v818 = vadd.f32 %v800, %v817
    %819 = vmatmul.bf16.gmra.mxu0 %v279
    %v820 = vpop.f32.mrf.mxu0
    %v821 = vadd.f32 %v803, %v820
    %v822 = vpop.f32.mrf.mxu0
    %823 = vdwg.mxu0
    %v824 = vmax.f32 %v816, 0.0
    %v825 = vmax.f32 %v818, 0.0
    %v826 = vmax.f32 %v821, 0.0
    %v827 = vpack.c.bf16 %v824, %v824
    %v828 = vpack.c.bf16 %v825, %v825
    %v829 = vpack.c.bf16 %v826, %v826
    %v830 = vld [vmem:[#allocation2] sm:$0xff]
    %v831 = vld [vmem:[#allocation2 + $0x8] sm:$0xff]
    %v832 = vld [vmem:[#allocation2 + $0x10] sm:$0xff]
    %v833 = vld [vmem:[#allocation2 + $0x18] sm:$0xff]
    %v834 = vld [vmem:[#allocation2 + $0x20] sm:$0xff]
    %v835 = vld [vmem:[#allocation2 + $0x28] sm:$0xff]
    %v836 = vld [vmem:[#allocation2 + $0x30] sm:$0xff]
    %v837 = vld [vmem:[#allocation2 + $0x38] sm:$0xff]
    %v838 = vld [vmem:[#allocation5] sm:$0xff]
    %v839 = vld [vmem:[#allocation5 + $0x8] sm:$0xff]
    %v840 = vld [vmem:[#allocation5 + $0x10] sm:$0xff]
    %v841 = vld [vmem:[#allocation5 + $0x18] sm:$0xff]
    %v842 = vld [vmem:[#allocation5 + $0x20] sm:$0xff]
    %v843 = vld [vmem:[#allocation5 + $0x28] sm:$0xff]
    %v844 = vld [vmem:[#allocation5 + $0x30] sm:$0xff]
    %v845 = vld [vmem:[#allocation5 + $0x38] sm:$0xff]
    %v846 = vld [vmem:[%s5] sm:$0xf]
    %v855 = vunpack.c.l.b16 %v830
    %v856 = vunpack.c.h.b16 %v830
    %v857 = vunpack.c.l.b16 %v831
    %v858 = vunpack.c.h.b16 %v831
    %v859 = vunpack.c.l.b16 %v832
    %v860 = vunpack.c.h.b16 %v832
    %v861 = vunpack.c.l.b16 %v833
    %v862 = vunpack.c.h.b16 %v833
    %v863 = vunpack.c.l.b16 %v834
    %v864 = vunpack.c.h.b16 %v834
    %v865 = vunpack.c.l.b16 %v835
    %v866 = vunpack.c.h.b16 %v835
    %v867 = vunpack.c.l.b16 %v836
    %v868 = vunpack.c.h.b16 %v836
    %v869 = vunpack.c.l.b16 %v837
    %v870 = vunpack.c.h.b16 %v837
    %v871 = vpack.c.b16 %v859, %v855
    %v872 = vpack.c.b16 %v860, %v856
    %v873 = vpack.c.b16 %v861, %v857
    %v874 = vpack.c.b16 %v862, %v858
    %v875 = vpack.c.b16 %v867, %v863
    %v876 = vpack.c.b16 %v868, %v864
    %v877 = vpack.c.b16 %v869, %v865
    %v878 = vpack.c.b16 %v870, %v866
    %vm887 = vcmask 261120
    %v889 = vsel %vm887, %v827, 0
    %891 = vmatpush.bf16.msra.mxu0 0
    %892 = vmatpush.bf16.msra.mxu0 0
    %893 = vmatpush.bf16.msra.mxu0 0
    %894 = vmatpush.bf16.msra.mxu0 0
    %895 = vmatpush.bf16.msra.mxu0 0
    %896 = vmatpush.bf16.msra.mxu0 0
    %897 = vmatpush.bf16.msra.mxu0 %v875
    %898 = vmatpush.bf16.msra.mxu0 %v871
    %899 = vmatmul.bf16.gmra.mxu0 %v889
    %v900 = vpop.f32.mrf.mxu0
    %v901 = vadd.f32 0.0, %v900
    %v902 = vpop.f32.mrf.mxu0
    %903 = vdwg.mxu0
    %904 = vmatpush.bf16.msra.mxu0 0
    %905 = vmatpush.bf16.msra.mxu0 0
    %906 = vmatpush.bf16.msra.mxu0 0
    %907 = vmatpush.bf16.msra.mxu0 0
    %908 = vmatpush.bf16.msra.mxu0 0
    %909 = vmatpush.bf16.msra.mxu0 0
    %910 = vmatpush.bf16.msra.mxu0 %v876
    %911 = vmatpush.bf16.msra.mxu0 %v872
    %912 = vmatmul.bf16.gmra.mxu0 %v889
    %v913 = vpop.f32.mrf.mxu0
    %v914 = vadd.f32 0.0, %v913
    %v915 = vpop.f32.mrf.mxu0
    %916 = vdwg.mxu0
    %917 = vmatpush.bf16.msra.mxu0 0
    %918 = vmatpush.bf16.msra.mxu0 0
    %919 = vmatpush.bf16.msra.mxu0 0
    %920 = vmatpush.bf16.msra.mxu0 0
    %921 = vmatpush.bf16.msra.mxu0 0
    %922 = vmatpush.bf16.msra.mxu0 0
    %923 = vmatpush.bf16.msra.mxu0 %v877
    %924 = vmatpush.bf16.msra.mxu0 %v873
    %925 = vmatmul.bf16.gmra.mxu0 %v889
    %v926 = vpop.f32.mrf.mxu0
    %v927 = vadd.f32 0.0, %v926
    %v928 = vpop.f32.mrf.mxu0
    %929 = vdwg.mxu0
    %930 = vmatpush.bf16.msra.mxu0 0
    %931 = vmatpush.bf16.msra.mxu0 0
    %932 = vmatpush.bf16.msra.mxu0 0
    %933 = vmatpush.bf16.msra.mxu0 0
    %934 = vmatpush.bf16.msra.mxu0 0
    %935 = vmatpush.bf16.msra.mxu0 0
    %936 = vmatpush.bf16.msra.mxu0 %v878
    %937 = vmatpush.bf16.msra.mxu0 %v874
    %938 = vmatmul.bf16.gmra.mxu0 %v889
    %v939 = vpop.f32.mrf.mxu0
    %v940 = vadd.f32 0.0, %v939
    %v941 = vpop.f32.mrf.mxu0
    %942 = vdwg.mxu0
    %v951 = vunpack.c.l.b16 %v838
    %v952 = vunpack.c.h.b16 %v838
    %v953 = vunpack.c.l.b16 %v839
    %v954 = vunpack.c.h.b16 %v839
    %v955 = vunpack.c.l.b16 %v840
    %v956 = vunpack.c.h.b16 %v840
    %v957 = vunpack.c.l.b16 %v841
    %v958 = vunpack.c.h.b16 %v841
    %v959 = vunpack.c.l.b16 %v842
    %v960 = vunpack.c.h.b16 %v842
    %v961 = vunpack.c.l.b16 %v843
    %v962 = vunpack.c.h.b16 %v843
    %v963 = vunpack.c.l.b16 %v844
    %v964 = vunpack.c.h.b16 %v844
    %v965 = vunpack.c.l.b16 %v845
    %v966 = vunpack.c.h.b16 %v845
    %v967 = vpack.c.b16 %v955, %v951
    %v968 = vpack.c.b16 %v956, %v952
    %v969 = vpack.c.b16 %v957, %v953
    %v970 = vpack.c.b16 %v958, %v954
    %v971 = vpack.c.b16 %v963, %v959
    %v972 = vpack.c.b16 %v964, %v960
    %v973 = vpack.c.b16 %v965, %v961
    %v974 = vpack.c.b16 %v966, %v962
    %v984 = vsel %vm887, %v828, 0
    %986 = vmatpush.bf16.msra.mxu0 0
    %987 = vmatpush.bf16.msra.mxu0 0
    %988 = vmatpush.bf16.msra.mxu0 0
    %989 = vmatpush.bf16.msra.mxu0 0
    %990 = vmatpush.bf16.msra.mxu0 0
    %991 = vmatpush.bf16.msra.mxu0 0
    %992 = vmatpush.bf16.msra.mxu0 %v971
    %993 = vmatpush.bf16.msra.mxu0 %v967
    %994 = vmatmul.bf16.gmra.mxu0 %v984
    %v995 = vpop.f32.mrf.mxu0
    %v996 = vadd.f32 0.0, %v995
    %v997 = vpop.f32.mrf.mxu0
    %998 = vdwg.mxu0
    %999 = vmatpush.bf16.msra.mxu0 0
    %1000 = vmatpush.bf16.msra.mxu0 0
    %1001 = vmatpush.bf16.msra.mxu0 0
    %1002 = vmatpush.bf16.msra.mxu0 0
    %1003 = vmatpush.bf16.msra.mxu0 0
    %1004 = vmatpush.bf16.msra.mxu0 0
    %1005 = vmatpush.bf16.msra.mxu0 %v972
    %1006 = vmatpush.bf16.msra.mxu0 %v968
    %1007 = vmatmul.bf16.gmra.mxu0 %v984
    %v1008 = vpop.f32.mrf.mxu0
    %v1009 = vadd.f32 0.0, %v1008
    %v1010 = vpop.f32.mrf.mxu0
    %1011 = vdwg.mxu0
    %1012 = vmatpush.bf16.msra.mxu0 0
    %1013 = vmatpush.bf16.msra.mxu0 0
    %1014 = vmatpush.bf16.msra.mxu0 0
    %1015 = vmatpush.bf16.msra.mxu0 0
    %1016 = vmatpush.bf16.msra.mxu0 0
    %1017 = vmatpush.bf16.msra.mxu0 0
    %1018 = vmatpush.bf16.msra.mxu0 %v973
    %1019 = vmatpush.bf16.msra.mxu0 %v969
    %1020 = vmatmul.bf16.gmra.mxu0 %v984
    %v1021 = vpop.f32.mrf.mxu0
    %v1022 = vadd.f32 0.0, %v1021
    %v1023 = vpop.f32.mrf.mxu0
    %1024 = vdwg.mxu0
    %1025 = vmatpush.bf16.msra.mxu0 0
    %1026 = vmatpush.bf16.msra.mxu0 0
    %1027 = vmatpush.bf16.msra.mxu0 0
    %1028 = vmatpush.bf16.msra.mxu0 0
    %1029 = vmatpush.bf16.msra.mxu0 0
    %1030 = vmatpush.bf16.msra.mxu0 0
    %1031 = vmatpush.bf16.msra.mxu0 %v974
    %1032 = vmatpush.bf16.msra.mxu0 %v970
    %1033 = vmatmul.bf16.gmra.mxu0 %v984
    %v1034 = vpop.f32.mrf.mxu0
    %v1035 = vadd.f32 0.0, %v1034
    %v1036 = vpop.f32.mrf.mxu0
    %1037 = vdwg.mxu0
    %v1039 = vsel %vm887, %v829, 0
    %1041 = vmatpush.bf16.msra.mxu0 0
    %1042 = vmatpush.bf16.msra.mxu0 0
    %1043 = vmatpush.bf16.msra.mxu0 0
    %1044 = vmatpush.bf16.msra.mxu0 0
    %1045 = vmatpush.bf16.msra.mxu0 0
    %1046 = vmatpush.bf16.msra.mxu0 0
    %1047 = vmatpush.bf16.msra.mxu0 %v971
    %1048 = vmatpush.bf16.msra.mxu0 %v967
    %1049 = vmatmul.bf16.gmra.mxu0 %v1039
    %v1050 = vpop.f32.mrf.mxu0
    %v1051 = vadd.f32 0.0, %v1050
    %v1052 = vpop.f32.mrf.mxu0
    %1053 = vdwg.mxu0
    %1054 = vmatpush.bf16.msra.mxu0 0
    %1055 = vmatpush.bf16.msra.mxu0 0
    %1056 = vmatpush.bf16.msra.mxu0 0
    %1057 = vmatpush.bf16.msra.mxu0 0
    %1058 = vmatpush.bf16.msra.mxu0 0
    %1059 = vmatpush.bf16.msra.mxu0 0
    %1060 = vmatpush.bf16.msra.mxu0 %v972
    %1061 = vmatpush.bf16.msra.mxu0 %v968
    %1062 = vmatmul.bf16.gmra.mxu0 %v1039
    %v1063 = vpop.f32.mrf.mxu0
    %v1064 = vadd.f32 0.0, %v1063
    %v1065 = vpop.f32.mrf.mxu0
    %1066 = vdwg.mxu0
    %1067 = vmatpush.bf16.msra.mxu0 0
    %1068 = vmatpush.bf16.msra.mxu0 0
    %1069 = vmatpush.bf16.msra.mxu0 0
    %1070 = vmatpush.bf16.msra.mxu0 0
    %1071 = vmatpush.bf16.msra.mxu0 0
    %1072 = vmatpush.bf16.msra.mxu0 0
    %1073 = vmatpush.bf16.msra.mxu0 %v973
    %1074 = vmatpush.bf16.msra.mxu0 %v969
    %1075 = vmatmul.bf16.gmra.mxu0 %v1039
    %v1076 = vpop.f32.mrf.mxu0
    %v1077 = vadd.f32 0.0, %v1076
    %v1078 = vpop.f32.mrf.mxu0
    %1079 = vdwg.mxu0
    %1080 = vmatpush.bf16.msra.mxu0 0
    %1081 = vmatpush.bf16.msra.mxu0 0
    %1082 = vmatpush.bf16.msra.mxu0 0
    %1083 = vmatpush.bf16.msra.mxu0 0
    %1084 = vmatpush.bf16.msra.mxu0 0
    %1085 = vmatpush.bf16.msra.mxu0 0
    %1086 = vmatpush.bf16.msra.mxu0 %v974
    %1087 = vmatpush.bf16.msra.mxu0 %v970
    %1088 = vmatmul.bf16.gmra.mxu0 %v1039
    %v1089 = vpop.f32.mrf.mxu0
    %v1090 = vadd.f32 0.0, %v1089
    %v1091 = vpop.f32.mrf.mxu0
    %1092 = vdwg.mxu0
    %v1093 = vadd.f32 %v901, %v996
    %v1094 = vadd.f32 %v914, %v1009
    %v1095 = vadd.f32 %v927, %v1022
    %v1096 = vadd.f32 %v940, %v1035
    %v1098 = vperm.slane %v846, 0
    %v1099 = vperm.slane %v846, 1
    %v1100 = vperm.slane %v846, 2
    %v1101 = vperm.slane %v846, 3
    %v1106 = vadd.f32 %v1093, %v1098
    %v1107 = vadd.f32 %v1094, %v1099
    %v1108 = vadd.f32 %v1095, %v1100
    %v1109 = vadd.f32 %v1096, %v1101
    %v1110 = vmax.f32 %v1106, 0.0
    %v1111 = vmax.f32 %v1107, 0.0
    %v1112 = vmax.f32 %v1108, 0.0
    %v1113 = vmax.f32 %v1109, 0.0
    %v1114 = vpack.c.bf16 %v1110, %v1110
    %v1115 = vpack.c.bf16 %v1111, %v1111
    %v1116 = vpack.c.bf16 %v1112, %v1112
    %v1117 = vpack.c.bf16 %v1113, %v1113
    %v1118 = vadd.f32 %v901, %v1051
    %v1119 = vadd.f32 %v914, %v1064
    %v1120 = vadd.f32 %v927, %v1077
    %v1121 = vadd.f32 %v940, %v1090
    %v1122 = vadd.f32 %v1118, %v1098
    %v1123 = vadd.f32 %v1119, %v1099
    %v1124 = vadd.f32 %v1120, %v1100
    %v1125 = vadd.f32 %v1121, %v1101
    %v1126 = vmax.f32 %v1122, 0.0
    %v1127 = vmax.f32 %v1123, 0.0
    %v1128 = vmax.f32 %v1124, 0.0
    %v1129 = vmax.f32 %v1125, 0.0
    %v1130 = vpack.c.bf16 %v1126, %v1126
    %v1131 = vpack.c.bf16 %v1127, %v1127
    %v1132 = vpack.c.bf16 %v1128, %v1128
    %v1133 = vpack.c.bf16 %v1129, %v1129
    %1134 = vmatpush.bf16.msra.mxu0 0
    %1135 = vmatpush.bf16.msra.mxu0 0
    %1136 = vmatpush.bf16.msra.mxu0 0
    %1137 = vmatpush.bf16.msra.mxu0 0
    %1138 = vmatpush.bf16.msra.mxu0 0
    %1139 = vmatpush.bf16.msra.mxu0 0
    %1140 = vmatpush.bf16.msra.mxu0 %v875
    %1141 = vmatpush.bf16.msra.mxu0 %v871
    %1142 = vmatmul.bf16.gmra.mxu0 %v984
    %v1143 = vpop.f32.mrf.mxu0
    %v1144 = vadd.f32 %v1051, %v1143
    %v1145 = vpop.f32.mrf.mxu0
    %1146 = vdwg.mxu0
    %1147 = vmatpush.bf16.msra.mxu0 0
    %1148 = vmatpush.bf16.msra.mxu0 0
    %1149 = vmatpush.bf16.msra.mxu0 0
    %1150 = vmatpush.bf16.msra.mxu0 0
    %1151 = vmatpush.bf16.msra.mxu0 0
    %1152 = vmatpush.bf16.msra.mxu0 0
    %1153 = vmatpush.bf16.msra.mxu0 %v876
    %1154 = vmatpush.bf16.msra.mxu0 %v872
    %1155 = vmatmul.bf16.gmra.mxu0 %v984
    %v1156 = vpop.f32.mrf.mxu0
    %v1157 = vadd.f32 %v1064, %v1156
    %v1158 = vpop.f32.mrf.mxu0
    %1159 = vdwg.mxu0
    %1160 = vmatpush.bf16.msra.mxu0 0
    %1161 = vmatpush.bf16.msra.mxu0 0
    %1162 = vmatpush.bf16.msra.mxu0 0
    %1163 = vmatpush.bf16.msra.mxu0 0
    %1164 = vmatpush.bf16.msra.mxu0 0
    %1165 = vmatpush.bf16.msra.mxu0 0
    %1166 = vmatpush.bf16.msra.mxu0 %v877
    %1167 = vmatpush.bf16.msra.mxu0 %v873
    %1168 = vmatmul.bf16.gmra.mxu0 %v984
    %v1169 = vpop.f32.mrf.mxu0
    %v1170 = vadd.f32 %v1077, %v1169
    %v1171 = vpop.f32.mrf.mxu0
    %1172 = vdwg.mxu0
    %1173 = vmatpush.bf16.msra.mxu0 0
    %1174 = vmatpush.bf16.msra.mxu0 0
    %1175 = vmatpush.bf16.msra.mxu0 0
    %1176 = vmatpush.bf16.msra.mxu0 0
    %1177 = vmatpush.bf16.msra.mxu0 0
    %1178 = vmatpush.bf16.msra.mxu0 0
    %1179 = vmatpush.bf16.msra.mxu0 %v878
    %1180 = vmatpush.bf16.msra.mxu0 %v874
    %1181 = vmatmul.bf16.gmra.mxu0 %v984
    %v1182 = vpop.f32.mrf.mxu0
    %v1183 = vadd.f32 %v1090, %v1182
    %v1184 = vpop.f32.mrf.mxu0
    %1185 = vdwg.mxu0
    %v1186 = vadd.f32 %v1144, %v1098
    %v1187 = vadd.f32 %v1157, %v1099
    %v1188 = vadd.f32 %v1170, %v1100
    %v1189 = vadd.f32 %v1183, %v1101
    %v1190 = vmax.f32 %v1186, 0.0
    %v1191 = vmax.f32 %v1187, 0.0
    %v1192 = vmax.f32 %v1188, 0.0
    %v1193 = vmax.f32 %v1189, 0.0
    %v1194 = vpack.c.bf16 %v1190, %v1190
    %v1195 = vpack.c.bf16 %v1191, %v1191
    %v1196 = vpack.c.bf16 %v1192, %v1192
    %v1197 = vpack.c.bf16 %v1193, %v1193
    %v1198 = vld [vmem:[%s6] sm:$0xf]
    %v1199 = vld [vmem:[%s6 + $0x4] sm:$0xf]
    %v1200 = vld [vmem:[%s6 + $0x8] sm:$0xf]
    %v1201 = vld [vmem:[%s6 + $0xc] sm:$0xf]
    %v1202 = vld [vmem:[%s6 + $0x10] sm:$0xf]
    %v1203 = vld [vmem:[%s6 + $0x14] sm:$0xf]
    %v1204 = vld [vmem:[%s6 + $0x18] sm:$0xf]
    %v1205 = vld [vmem:[%s6 + $0x1c] sm:$0xf]
    %v1206 = vld [vmem:[%s6 + $0x20] sm:$0xf]
    %v1207 = vld [vmem:[%s6 + $0x24] sm:$0xf]
    %v1208 = vld [vmem:[%s6 + $0x28] sm:$0xf]
    %v1209 = vld [vmem:[%s6 + $0x2c] sm:$0xf]
    %v1210 = vld [vmem:[%s6 + $0x30] sm:$0xf]
    %v1211 = vld [vmem:[%s6 + $0x34] sm:$0xf]
    %v1212 = vld [vmem:[%s6 + $0x38] sm:$0xf]
    %v1213 = vld [vmem:[%s6 + $0x3c] sm:$0xf]
    %v1214 = vld [vmem:[%s6 + $0x40] sm:$0xf]
    %v1215 = vld [vmem:[%s6 + $0x44] sm:$0xf]
    %v1216 = vld [vmem:[%s6 + $0x48] sm:$0xf]
    %v1217 = vld [vmem:[%s6 + $0x4c] sm:$0xf]
    %v1218 = vld [vmem:[%s6 + $0x50] sm:$0xf]
    %v1219 = vld [vmem:[%s6 + $0x54] sm:$0xf]
    %v1220 = vld [vmem:[%s6 + $0x58] sm:$0xf]
    %v1221 = vld [vmem:[%s6 + $0x5c] sm:$0xf]
    %v1222 = vld [vmem:[%s6 + $0x60] sm:$0xf]
    %v1223 = vld [vmem:[%s6 + $0x64] sm:$0xf]
    %v1224 = vld [vmem:[%s6 + $0x68] sm:$0xf]
    %v1225 = vld [vmem:[%s6 + $0x6c] sm:$0xf]
    %v1226 = vld [vmem:[%s6 + $0x70] sm:$0xf]
    %v1227 = vld [vmem:[%s6 + $0x74] sm:$0xf]
    %v1228 = vld [vmem:[%s6 + $0x78] sm:$0xf]
    %v1229 = vld [vmem:[%s6 + $0x7c] sm:$0xf]
    %v1230 = vld [vmem:[%s6 + $0x80] sm:$0xf]
    %v1231 = vld [vmem:[%s6 + $0x84] sm:$0xf]
    %v1232 = vld [vmem:[%s6 + $0x88] sm:$0xf]
    %v1233 = vld [vmem:[%s6 + $0x8c] sm:$0xf]
    %v1234 = vld [vmem:[%s6 + $0x90] sm:$0xf]
    %v1235 = vld [vmem:[%s6 + $0x94] sm:$0xf]
    %v1236 = vld [vmem:[%s6 + $0x98] sm:$0xf]
    %v1237 = vld [vmem:[%s6 + $0x9c] sm:$0xf]
    %v1238 = vld [vmem:[%s6 + $0xa0] sm:$0xf]
    %v1239 = vld [vmem:[%s6 + $0xa4] sm:$0xf]
    %v1240 = vld [vmem:[%s6 + $0xa8] sm:$0xf]
    %v1241 = vld [vmem:[%s6 + $0xac] sm:$0xf]
    %v1242 = vld [vmem:[%s6 + $0xb0] sm:$0xf]
    %v1243 = vld [vmem:[%s6 + $0xb4] sm:$0xf]
    %v1244 = vld [vmem:[%s6 + $0xb8] sm:$0xf]
    %v1245 = vld [vmem:[%s6 + $0xbc] sm:$0xf]
    %v1246 = vld [vmem:[%s6 + $0xc0] sm:$0xf]
    %v1247 = vld [vmem:[%s6 + $0xc4] sm:$0xf]
    %v1248 = vld [vmem:[%s6 + $0xc8] sm:$0xf]
    %v1249 = vld [vmem:[%s6 + $0xcc] sm:$0xf]
    %v1250 = vld [vmem:[%s6 + $0xd0] sm:$0xf]
    %v1251 = vld [vmem:[%s6 + $0xd4] sm:$0xf]
    %v1252 = vld [vmem:[%s6 + $0xd8] sm:$0xf]
    %v1253 = vld [vmem:[%s6 + $0xdc] sm:$0xf]
    %v1254 = vld [vmem:[%s6 + $0xe0] sm:$0xf]
    %v1255 = vld [vmem:[%s6 + $0xe4] sm:$0xf]
    %v1256 = vld [vmem:[%s6 + $0xe8] sm:$0xf]
    %v1257 = vld [vmem:[%s6 + $0xec] sm:$0xf]
    %v1258 = vld [vmem:[%s6 + $0xf0] sm:$0xf]
    %v1259 = vld [vmem:[%s6 + $0xf4] sm:$0xf]
    %v1260 = vld [vmem:[%s6 + $0xf8] sm:$0xf]
    %v1261 = vld [vmem:[%s6 + $0xfc] sm:$0xf]
    %v1262 = vld [vmem:[%s7] sm:$0xf]
    %v1263 = vld [vmem:[%s7 + $0x4] sm:$0xf]
    %v1264 = vld [vmem:[%s7 + $0x8] sm:$0xf]
    %v1265 = vld [vmem:[%s7 + $0xc] sm:$0xf]
    %v1266 = vld [vmem:[%s7 + $0x10] sm:$0xf]
    %v1267 = vld [vmem:[%s7 + $0x14] sm:$0xf]
    %v1268 = vld [vmem:[%s7 + $0x18] sm:$0xf]
    %v1269 = vld [vmem:[%s7 + $0x1c] sm:$0xf]
    %v1270 = vld [vmem:[%s7 + $0x20] sm:$0xf]
    %v1271 = vld [vmem:[%s7 + $0x24] sm:$0xf]
    %v1272 = vld [vmem:[%s7 + $0x28] sm:$0xf]
    %v1273 = vld [vmem:[%s7 + $0x2c] sm:$0xf]
    %v1274 = vld [vmem:[%s7 + $0x30] sm:$0xf]
    %v1275 = vld [vmem:[%s7 + $0x34] sm:$0xf]
    %v1276 = vld [vmem:[%s7 + $0x38] sm:$0xf]
    %v1277 = vld [vmem:[%s7 + $0x3c] sm:$0xf]
    %v1278 = vld [vmem:[%s7 + $0x40] sm:$0xf]
    %v1279 = vld [vmem:[%s7 + $0x44] sm:$0xf]
    %v1280 = vld [vmem:[%s7 + $0x48] sm:$0xf]
    %v1281 = vld [vmem:[%s7 + $0x4c] sm:$0xf]
    %v1282 = vld [vmem:[%s7 + $0x50] sm:$0xf]
    %v1283 = vld [vmem:[%s7 + $0x54] sm:$0xf]
    %v1284 = vld [vmem:[%s7 + $0x58] sm:$0xf]
    %v1285 = vld [vmem:[%s7 + $0x5c] sm:$0xf]
    %v1286 = vld [vmem:[%s7 + $0x60] sm:$0xf]
    %v1287 = vld [vmem:[%s7 + $0x64] sm:$0xf]
    %v1288 = vld [vmem:[%s7 + $0x68] sm:$0xf]
    %v1289 = vld [vmem:[%s7 + $0x6c] sm:$0xf]
    %v1290 = vld [vmem:[%s7 + $0x70] sm:$0xf]
    %v1291 = vld [vmem:[%s7 + $0x74] sm:$0xf]
    %v1292 = vld [vmem:[%s7 + $0x78] sm:$0xf]
    %v1293 = vld [vmem:[%s7 + $0x7c] sm:$0xf]
    %v1294 = vld [vmem:[%s7 + $0x80] sm:$0xf]
    %v1295 = vld [vmem:[%s7 + $0x84] sm:$0xf]
    %v1296 = vld [vmem:[%s7 + $0x88] sm:$0xf]
    %v1297 = vld [vmem:[%s7 + $0x8c] sm:$0xf]
    %v1298 = vld [vmem:[%s7 + $0x90] sm:$0xf]
    %v1299 = vld [vmem:[%s7 + $0x94] sm:$0xf]
    %v1300 = vld [vmem:[%s7 + $0x98] sm:$0xf]
    %v1301 = vld [vmem:[%s7 + $0x9c] sm:$0xf]
    %v1302 = vld [vmem:[%s7 + $0xa0] sm:$0xf]
    %v1303 = vld [vmem:[%s7 + $0xa4] sm:$0xf]
    %v1304 = vld [vmem:[%s7 + $0xa8] sm:$0xf]
    %v1305 = vld [vmem:[%s7 + $0xac] sm:$0xf]
    %v1306 = vld [vmem:[%s7 + $0xb0] sm:$0xf]
    %v1307 = vld [vmem:[%s7 + $0xb4] sm:$0xf]
    %v1308 = vld [vmem:[%s7 + $0xb8] sm:$0xf]
    %v1309 = vld [vmem:[%s7 + $0xbc] sm:$0xf]
    %v1310 = vld [vmem:[%s7 + $0xc0] sm:$0xf]
    %v1311 = vld [vmem:[%s7 + $0xc4] sm:$0xf]
    %v1312 = vld [vmem:[%s7 + $0xc8] sm:$0xf]
    %v1313 = vld [vmem:[%s7 + $0xcc] sm:$0xf]
    %v1314 = vld [vmem:[%s7 + $0xd0] sm:$0xf]
    %v1315 = vld [vmem:[%s7 + $0xd4] sm:$0xf]
    %v1316 = vld [vmem:[%s7 + $0xd8] sm:$0xf]
    %v1317 = vld [vmem:[%s7 + $0xdc] sm:$0xf]
    %v1318 = vld [vmem:[%s7 + $0xe0] sm:$0xf]
    %v1319 = vld [vmem:[%s7 + $0xe4] sm:$0xf]
    %v1320 = vld [vmem:[%s7 + $0xe8] sm:$0xf]
    %v1321 = vld [vmem:[%s7 + $0xec] sm:$0xf]
    %v1322 = vld [vmem:[%s7 + $0xf0] sm:$0xf]
    %v1323 = vld [vmem:[%s7 + $0xf4] sm:$0xf]
    %v1324 = vld [vmem:[%s7 + $0xf8] sm:$0xf]
    %v1325 = vld [vmem:[%s7 + $0xfc] sm:$0xf]
    %v1390 = vunpack.c.l.b16 %v1262
    %v1391 = vunpack.c.l.b16 %v1263
    %v1392 = vunpack.c.l.b16 %v1264
    %v1393 = vunpack.c.l.b16 %v1265
    %v1394 = vunpack.c.l.b16 %v1266
    %v1395 = vunpack.c.l.b16 %v1267
    %v1396 = vunpack.c.l.b16 %v1268
    %v1397 = vunpack.c.l.b16 %v1269
    %v1398 = vunpack.c.l.b16 %v1270
    %v1399 = vunpack.c.l.b16 %v1271
    %v1400 = vunpack.c.l.b16 %v1272
    %v1401 = vunpack.c.l.b16 %v1273
    %v1402 = vunpack.c.l.b16 %v1274
    %v1403 = vunpack.c.l.b16 %v1275
    %v1404 = vunpack.c.l.b16 %v1276
    %v1405 = vunpack.c.l.b16 %v1277
    %v1406 = vunpack.c.l.b16 %v1278
    %v1407 = vunpack.c.l.b16 %v1279
    %v1408 = vunpack.c.l.b16 %v1280
    %v1409 = vunpack.c.l.b16 %v1281
    %v1410 = vunpack.c.l.b16 %v1282
    %v1411 = vunpack.c.l.b16 %v1283
    %v1412 = vunpack.c.l.b16 %v1284
    %v1413 = vunpack.c.l.b16 %v1285
    %v1414 = vunpack.c.l.b16 %v1286
    %v1415 = vunpack.c.l.b16 %v1287
    %v1416 = vunpack.c.l.b16 %v1288
    %v1417 = vunpack.c.l.b16 %v1289
    %v1418 = vunpack.c.l.b16 %v1290
    %v1419 = vunpack.c.l.b16 %v1291
    %v1420 = vunpack.c.l.b16 %v1292
    %v1421 = vunpack.c.l.b16 %v1293
    %v1422 = vunpack.c.l.b16 %v1294
    %v1423 = vunpack.c.l.b16 %v1295
    %v1424 = vunpack.c.l.b16 %v1296
    %v1425 = vunpack.c.l.b16 %v1297
    %v1426 = vunpack.c.l.b16 %v1298
    %v1427 = vunpack.c.l.b16 %v1299
    %v1428 = vunpack.c.l.b16 %v1300
    %v1429 = vunpack.c.l.b16 %v1301
    %v1430 = vunpack.c.l.b16 %v1302
    %v1431 = vunpack.c.l.b16 %v1303
    %v1432 = vunpack.c.l.b16 %v1304
    %v1433 = vunpack.c.l.b16 %v1305
    %v1434 = vunpack.c.l.b16 %v1306
    %v1435 = vunpack.c.l.b16 %v1307
    %v1436 = vunpack.c.l.b16 %v1308
    %v1437 = vunpack.c.l.b16 %v1309
    %v1438 = vunpack.c.l.b16 %v1310
    %v1439 = vunpack.c.l.b16 %v1311
    %v1440 = vunpack.c.l.b16 %v1312
    %v1441 = vunpack.c.l.b16 %v1313
    %v1442 = vunpack.c.l.b16 %v1314
    %v1443 = vunpack.c.l.b16 %v1315
    %v1444 = vunpack.c.l.b16 %v1316
    %v1445 = vunpack.c.l.b16 %v1317
    %v1446 = vunpack.c.l.b16 %v1318
    %v1447 = vunpack.c.l.b16 %v1319
    %v1448 = vunpack.c.l.b16 %v1320
    %v1449 = vunpack.c.l.b16 %v1321
    %v1450 = vunpack.c.l.b16 %v1322
    %v1451 = vunpack.c.l.b16 %v1323
    %v1452 = vunpack.c.l.b16 %v1324
    %v1453 = vunpack.c.l.b16 %v1325
    %v1454 = vpack.c.b16 %v1391, %v1390
    %v1455 = vpack.c.b16 %v1393, %v1392
    %v1456 = vpack.c.b16 %v1395, %v1394
    %v1457 = vpack.c.b16 %v1397, %v1396
    %v1458 = vpack.c.b16 %v1399, %v1398
    %v1459 = vpack.c.b16 %v1401, %v1400
    %v1460 = vpack.c.b16 %v1403, %v1402
    %v1461 = vpack.c.b16 %v1405, %v1404
    %v1462 = vpack.c.b16 %v1407, %v1406
    %v1463 = vpack.c.b16 %v1409, %v1408
    %v1464 = vpack.c.b16 %v1411, %v1410
    %v1465 = vpack.c.b16 %v1413, %v1412
    %v1466 = vpack.c.b16 %v1415, %v1414
    %v1467 = vpack.c.b16 %v1417, %v1416
    %v1468 = vpack.c.b16 %v1419, %v1418
    %v1469 = vpack.c.b16 %v1421, %v1420
    %v1470 = vpack.c.b16 %v1423, %v1422
    %v1471 = vpack.c.b16 %v1425, %v1424
    %v1472 = vpack.c.b16 %v1427, %v1426
    %v1473 = vpack.c.b16 %v1429, %v1428
    %v1474 = vpack.c.b16 %v1431, %v1430
    %v1475 = vpack.c.b16 %v1433, %v1432
    %v1476 = vpack.c.b16 %v1435, %v1434
    %v1477 = vpack.c.b16 %v1437, %v1436
    %v1478 = vpack.c.b16 %v1439, %v1438
    %v1479 = vpack.c.b16 %v1441, %v1440
    %v1480 = vpack.c.b16 %v1443, %v1442
    %v1481 = vpack.c.b16 %v1445, %v1444
    %v1482 = vpack.c.b16 %v1447, %v1446
    %v1483 = vpack.c.b16 %v1449, %v1448
    %v1484 = vpack.c.b16 %v1451, %v1450
    %v1485 = vpack.c.b16 %v1453, %v1452
    %1518 = vmatpush.bf16.msra.mxu0 %v1461
    %1519 = vmatpush.bf16.msra.mxu0 %v1460
    %1520 = vmatpush.bf16.msra.mxu0 %v1459
    %1521 = vmatpush.bf16.msra.mxu0 %v1458
    %1522 = vmatpush.bf16.msra.mxu0 %v1457
    %1523 = vmatpush.bf16.msra.mxu0 %v1456
    %1524 = vmatpush.bf16.msra.mxu0 %v1455
    %1525 = vmatpush.bf16.msra.mxu0 %v1454
    %1526 = vmatmul.bf16.gmra.mxu0 %v1130
    %v1527 = vpop.f32.mrf.mxu0
    %v1528 = vadd.f32 0.0, %v1527
    %v1529 = vpop.f32.mrf.mxu0
    %1530 = vdwg.mxu0
    %1531 = vmatpush.bf16.msra.mxu0 %v1469
    %1532 = vmatpush.bf16.msra.mxu0 %v1468
    %1533 = vmatpush.bf16.msra.mxu0 %v1467
    %1534 = vmatpush.bf16.msra.mxu0 %v1466
    %1535 = vmatpush.bf16.msra.mxu0 %v1465
    %1536 = vmatpush.bf16.msra.mxu0 %v1464
    %1537 = vmatpush.bf16.msra.mxu0 %v1463
    %1538 = vmatpush.bf16.msra.mxu0 %v1462
    %1539 = vmatmul.bf16.gmra.mxu0 %v1131
    %v1540 = vpop.f32.mrf.mxu0
    %v1541 = vadd.f32 %v1528, %v1540
    %v1542 = vpop.f32.mrf.mxu0
    %1543 = vdwg.mxu0
    %1544 = vmatpush.bf16.msra.mxu0 %v1477
    %1545 = vmatpush.bf16.msra.mxu0 %v1476
    %1546 = vmatpush.bf16.msra.mxu0 %v1475
    %1547 = vmatpush.bf16.msra.mxu0 %v1474
    %1548 = vmatpush.bf16.msra.mxu0 %v1473
    %1549 = vmatpush.bf16.msra.mxu0 %v1472
    %1550 = vmatpush.bf16.msra.mxu0 %v1471
    %1551 = vmatpush.bf16.msra.mxu0 %v1470
    %1552 = vmatmul.bf16.gmra.mxu0 %v1132
    %v1553 = vpop.f32.mrf.mxu0
    %v1554 = vadd.f32 %v1541, %v1553
    %v1555 = vpop.f32.mrf.mxu0
    %1556 = vdwg.mxu0
    %1557 = vmatpush.bf16.msra.mxu0 %v1485
    %1558 = vmatpush.bf16.msra.mxu0 %v1484
    %1559 = vmatpush.bf16.msra.mxu0 %v1483
    %1560 = vmatpush.bf16.msra.mxu0 %v1482
    %1561 = vmatpush.bf16.msra.mxu0 %v1481
    %1562 = vmatpush.bf16.msra.mxu0 %v1480
    %1563 = vmatpush.bf16.msra.mxu0 %v1479
    %1564 = vmatpush.bf16.msra.mxu0 %v1478
    %1565 = vmatmul.bf16.gmra.mxu0 %v1133
    %v1566 = vpop.f32.mrf.mxu0
    %v1567 = vadd.f32 %v1554, %v1566
    %v1568 = vpop.f32.mrf.mxu0
    %1569 = vdwg.mxu0
    %v1634 = vunpack.c.l.b16 %v1198
    %v1635 = vunpack.c.l.b16 %v1199
    %v1636 = vunpack.c.l.b16 %v1200
    %v1637 = vunpack.c.l.b16 %v1201
    %v1638 = vunpack.c.l.b16 %v1202
    %v1639 = vunpack.c.l.b16 %v1203
    %v1640 = vunpack.c.l.b16 %v1204
    %v1641 = vunpack.c.l.b16 %v1205
    %v1642 = vunpack.c.l.b16 %v1206
    %v1643 = vunpack.c.l.b16 %v1207
    %v1644 = vunpack.c.l.b16 %v1208
    %v1645 = vunpack.c.l.b16 %v1209
    %v1646 = vunpack.c.l.b16 %v1210
    %v1647 = vunpack.c.l.b16 %v1211
    %v1648 = vunpack.c.l.b16 %v1212
    %v1649 = vunpack.c.l.b16 %v1213
    %v1650 = vunpack.c.l.b16 %v1214
    %v1651 = vunpack.c.l.b16 %v1215
    %v1652 = vunpack.c.l.b16 %v1216
    %v1653 = vunpack.c.l.b16 %v1217
    %v1654 = vunpack.c.l.b16 %v1218
    %v1655 = vunpack.c.l.b16 %v1219
    %v1656 = vunpack.c.l.b16 %v1220
    %v1657 = vunpack.c.l.b16 %v1221
    %v1658 = vunpack.c.l.b16 %v1222
    %v1659 = vunpack.c.l.b16 %v1223
    %v1660 = vunpack.c.l.b16 %v1224
    %v1661 = vunpack.c.l.b16 %v1225
    %v1662 = vunpack.c.l.b16 %v1226
    %v1663 = vunpack.c.l.b16 %v1227
    %v1664 = vunpack.c.l.b16 %v1228
    %v1665 = vunpack.c.l.b16 %v1229
    %v1666 = vunpack.c.l.b16 %v1230
    %v1667 = vunpack.c.l.b16 %v1231
    %v1668 = vunpack.c.l.b16 %v1232
    %v1669 = vunpack.c.l.b16 %v1233
    %v1670 = vunpack.c.l.b16 %v1234
    %v1671 = vunpack.c.l.b16 %v1235
    %v1672 = vunpack.c.l.b16 %v1236
    %v1673 = vunpack.c.l.b16 %v1237
    %v1674 = vunpack.c.l.b16 %v1238
    %v1675 = vunpack.c.l.b16 %v1239
    %v1676 = vunpack.c.l.b16 %v1240
    %v1677 = vunpack.c.l.b16 %v1241
    %v1678 = vunpack.c.l.b16 %v1242
    %v1679 = vunpack.c.l.b16 %v1243
    %v1680 = vunpack.c.l.b16 %v1244
    %v1681 = vunpack.c.l.b16 %v1245
    %v1682 = vunpack.c.l.b16 %v1246
    %v1683 = vunpack.c.l.b16 %v1247
    %v1684 = vunpack.c.l.b16 %v1248
    %v1685 = vunpack.c.l.b16 %v1249
    %v1686 = vunpack.c.l.b16 %v1250
    %v1687 = vunpack.c.l.b16 %v1251
    %v1688 = vunpack.c.l.b16 %v1252
    %v1689 = vunpack.c.l.b16 %v1253
    %v1690 = vunpack.c.l.b16 %v1254
    %v1691 = vunpack.c.l.b16 %v1255
    %v1692 = vunpack.c.l.b16 %v1256
    %v1693 = vunpack.c.l.b16 %v1257
    %v1694 = vunpack.c.l.b16 %v1258
    %v1695 = vunpack.c.l.b16 %v1259
    %v1696 = vunpack.c.l.b16 %v1260
    %v1697 = vunpack.c.l.b16 %v1261
    %v1698 = vpack.c.b16 %v1635, %v1634
    %v1699 = vpack.c.b16 %v1637, %v1636
    %v1700 = vpack.c.b16 %v1639, %v1638
    %v1701 = vpack.c.b16 %v1641, %v1640
    %v1702 = vpack.c.b16 %v1643, %v1642
    %v1703 = vpack.c.b16 %v1645, %v1644
    %v1704 = vpack.c.b16 %v1647, %v1646
    %v1705 = vpack.c.b16 %v1649, %v1648
    %v1706 = vpack.c.b16 %v1651, %v1650
    %v1707 = vpack.c.b16 %v1653, %v1652
    %v1708 = vpack.c.b16 %v1655, %v1654
    %v1709 = vpack.c.b16 %v1657, %v1656
    %v1710 = vpack.c.b16 %v1659, %v1658
    %v1711 = vpack.c.b16 %v1661, %v1660
    %v1712 = vpack.c.b16 %v1663, %v1662
    %v1713 = vpack.c.b16 %v1665, %v1664
    %v1714 = vpack.c.b16 %v1667, %v1666
    %v1715 = vpack.c.b16 %v1669, %v1668
    %v1716 = vpack.c.b16 %v1671, %v1670
    %v1717 = vpack.c.b16 %v1673, %v1672
    %v1718 = vpack.c.b16 %v1675, %v1674
    %v1719 = vpack.c.b16 %v1677, %v1676
    %v1720 = vpack.c.b16 %v1679, %v1678
    %v1721 = vpack.c.b16 %v1681, %v1680
    %v1722 = vpack.c.b16 %v1683, %v1682
    %v1723 = vpack.c.b16 %v1685, %v1684
    %v1724 = vpack.c.b16 %v1687, %v1686
    %v1725 = vpack.c.b16 %v1689, %v1688
    %v1726 = vpack.c.b16 %v1691, %v1690
    %v1727 = vpack.c.b16 %v1693, %v1692
    %v1728 = vpack.c.b16 %v1695, %v1694
    %v1729 = vpack.c.b16 %v1697, %v1696
    %1762 = vmatpush.bf16.msra.mxu0 %v1705
    %1763 = vmatpush.bf16.msra.mxu0 %v1704
    %1764 = vmatpush.bf16.msra.mxu0 %v1703
    %1765 = vmatpush.bf16.msra.mxu0 %v1702
    %1766 = vmatpush.bf16.msra.mxu0 %v1701
    %1767 = vmatpush.bf16.msra.mxu0 %v1700
    %1768 = vmatpush.bf16.msra.mxu0 %v1699
    %1769 = vmatpush.bf16.msra.mxu0 %v1698
    %1770 = vmatmul.bf16.gmra.mxu0 %v1114
    %v1771 = vpop.f32.mrf.mxu0
    %v1772 = vadd.f32 %v1567, %v1771
    %v1773 = vpop.f32.mrf.mxu0
    %1774 = vdwg.mxu0
    %1775 = vmatpush.bf16.msra.mxu0 %v1713
    %1776 = vmatpush.bf16.msra.mxu0 %v1712
    %1777 = vmatpush.bf16.msra.mxu0 %v1711
    %1778 = vmatpush.bf16.msra.mxu0 %v1710
    %1779 = vmatpush.bf16.msra.mxu0 %v1709
    %1780 = vmatpush.bf16.msra.mxu0 %v1708
    %1781 = vmatpush.bf16.msra.mxu0 %v1707
    %1782 = vmatpush.bf16.msra.mxu0 %v1706
    %1783 = vmatmul.bf16.gmra.mxu0 %v1115
    %v1784 = vpop.f32.mrf.mxu0
    %v1785 = vadd.f32 %v1772, %v1784
    %v1786 = vpop.f32.mrf.mxu0
    %1787 = vdwg.mxu0
    %1788 = vmatpush.bf16.msra.mxu0 %v1721
    %1789 = vmatpush.bf16.msra.mxu0 %v1720
    %1790 = vmatpush.bf16.msra.mxu0 %v1719
    %1791 = vmatpush.bf16.msra.mxu0 %v1718
    %1792 = vmatpush.bf16.msra.mxu0 %v1717
    %1793 = vmatpush.bf16.msra.mxu0 %v1716
    %1794 = vmatpush.bf16.msra.mxu0 %v1715
    %1795 = vmatpush.bf16.msra.mxu0 %v1714
    %1796 = vmatmul.bf16.gmra.mxu0 %v1116
    %v1797 = vpop.f32.mrf.mxu0
    %v1798 = vadd.f32 %v1785, %v1797
    %v1799 = vpop.f32.mrf.mxu0
    %1800 = vdwg.mxu0
    %1801 = vmatpush.bf16.msra.mxu0 %v1729
    %1802 = vmatpush.bf16.msra.mxu0 %v1728
    %1803 = vmatpush.bf16.msra.mxu0 %v1727
    %1804 = vmatpush.bf16.msra.mxu0 %v1726
    %1805 = vmatpush.bf16.msra.mxu0 %v1725
    %1806 = vmatpush.bf16.msra.mxu0 %v1724
    %1807 = vmatpush.bf16.msra.mxu0 %v1723
    %1808 = vmatpush.bf16.msra.mxu0 %v1722
    %1809 = vmatmul.bf16.gmra.mxu0 %v1117
    %v1810 = vpop.f32.mrf.mxu0
    %v1811 = vadd.f32 %v1798, %v1810
    %v1812 = vpop.f32.mrf.mxu0
    %1813 = vdwg.mxu0
    %v1814 = vld [vmem:[#allocation7] sm:$0xf]
    %v1815 = vld [vmem:[#allocation7 + $0x4] sm:$0xf]
    %v1816 = vld [vmem:[#allocation7 + $0x8] sm:$0xf]
    %v1817 = vld [vmem:[#allocation7 + $0xc] sm:$0xf]
    %v1818 = vld [vmem:[#allocation7 + $0x10] sm:$0xf]
    %v1819 = vld [vmem:[#allocation7 + $0x14] sm:$0xf]
    %v1820 = vld [vmem:[#allocation7 + $0x18] sm:$0xf]
    %v1821 = vld [vmem:[#allocation7 + $0x1c] sm:$0xf]
    %v1822 = vld [vmem:[#allocation7 + $0x20] sm:$0xf]
    %v1823 = vld [vmem:[#allocation7 + $0x24] sm:$0xf]
    %v1824 = vld [vmem:[#allocation7 + $0x28] sm:$0xf]
    %v1825 = vld [vmem:[#allocation7 + $0x2c] sm:$0xf]
    %v1826 = vld [vmem:[#allocation7 + $0x30] sm:$0xf]
    %v1827 = vld [vmem:[#allocation7 + $0x34] sm:$0xf]
    %v1828 = vld [vmem:[#allocation7 + $0x38] sm:$0xf]
    %v1829 = vld [vmem:[#allocation7 + $0x3c] sm:$0xf]
    %v1830 = vld [vmem:[#allocation7 + $0x40] sm:$0xf]
    %v1831 = vld [vmem:[#allocation7 + $0x44] sm:$0xf]
    %v1832 = vld [vmem:[#allocation7 + $0x48] sm:$0xf]
    %v1833 = vld [vmem:[#allocation7 + $0x4c] sm:$0xf]
    %v1834 = vld [vmem:[#allocation7 + $0x50] sm:$0xf]
    %v1835 = vld [vmem:[#allocation7 + $0x54] sm:$0xf]
    %v1836 = vld [vmem:[#allocation7 + $0x58] sm:$0xf]
    %v1837 = vld [vmem:[#allocation7 + $0x5c] sm:$0xf]
    %v1838 = vld [vmem:[#allocation7 + $0x60] sm:$0xf]
    %v1839 = vld [vmem:[#allocation7 + $0x64] sm:$0xf]
    %v1840 = vld [vmem:[#allocation7 + $0x68] sm:$0xf]
    %v1841 = vld [vmem:[#allocation7 + $0x6c] sm:$0xf]
    %v1842 = vld [vmem:[#allocation7 + $0x70] sm:$0xf]
    %v1843 = vld [vmem:[#allocation7 + $0x74] sm:$0xf]
    %v1844 = vld [vmem:[#allocation7 + $0x78] sm:$0xf]
    %v1845 = vld [vmem:[#allocation7 + $0x7c] sm:$0xf]
    %v1846 = vld [vmem:[#allocation7 + $0x80] sm:$0xf]
    %v1847 = vld [vmem:[#allocation7 + $0x84] sm:$0xf]
    %v1848 = vld [vmem:[#allocation7 + $0x88] sm:$0xf]
    %v1849 = vld [vmem:[#allocation7 + $0x8c] sm:$0xf]
    %v1850 = vld [vmem:[#allocation7 + $0x90] sm:$0xf]
    %v1851 = vld [vmem:[#allocation7 + $0x94] sm:$0xf]
    %v1852 = vld [vmem:[#allocation7 + $0x98] sm:$0xf]
    %v1853 = vld [vmem:[#allocation7 + $0x9c] sm:$0xf]
    %v1854 = vld [vmem:[#allocation7 + $0xa0] sm:$0xf]
    %v1855 = vld [vmem:[#allocation7 + $0xa4] sm:$0xf]
    %v1856 = vld [vmem:[#allocation7 + $0xa8] sm:$0xf]
    %v1857 = vld [vmem:[#allocation7 + $0xac] sm:$0xf]
    %v1858 = vld [vmem:[#allocation7 + $0xb0] sm:$0xf]
    %v1859 = vld [vmem:[#allocation7 + $0xb4] sm:$0xf]
    %v1860 = vld [vmem:[#allocation7 + $0xb8] sm:$0xf]
    %v1861 = vld [vmem:[#allocation7 + $0xbc] sm:$0xf]
    %v1862 = vld [vmem:[#allocation7 + $0xc0] sm:$0xf]
    %v1863 = vld [vmem:[#allocation7 + $0xc4] sm:$0xf]
    %v1864 = vld [vmem:[#allocation7 + $0xc8] sm:$0xf]
    %v1865 = vld [vmem:[#allocation7 + $0xcc] sm:$0xf]
    %v1866 = vld [vmem:[#allocation7 + $0xd0] sm:$0xf]
    %v1867 = vld [vmem:[#allocation7 + $0xd4] sm:$0xf]
    %v1868 = vld [vmem:[#allocation7 + $0xd8] sm:$0xf]
    %v1869 = vld [vmem:[#allocation7 + $0xdc] sm:$0xf]
    %v1870 = vld [vmem:[#allocation7 + $0xe0] sm:$0xf]
    %v1871 = vld [vmem:[#allocation7 + $0xe4] sm:$0xf]
    %v1872 = vld [vmem:[#allocation7 + $0xe8] sm:$0xf]
    %v1873 = vld [vmem:[#allocation7 + $0xec] sm:$0xf]
    %v1874 = vld [vmem:[#allocation7 + $0xf0] sm:$0xf]
    %v1875 = vld [vmem:[#allocation7 + $0xf4] sm:$0xf]
    %v1876 = vld [vmem:[#allocation7 + $0xf8] sm:$0xf]
    %v1877 = vld [vmem:[#allocation7 + $0xfc] sm:$0xf]
    %v1942 = vunpack.c.l.b16 %v1814
    %v1943 = vunpack.c.l.b16 %v1815
    %v1944 = vunpack.c.l.b16 %v1816
    %v1945 = vunpack.c.l.b16 %v1817
    %v1946 = vunpack.c.l.b16 %v1818
    %v1947 = vunpack.c.l.b16 %v1819
    %v1948 = vunpack.c.l.b16 %v1820
    %v1949 = vunpack.c.l.b16 %v1821
    %v1950 = vunpack.c.l.b16 %v1822
    %v1951 = vunpack.c.l.b16 %v1823
    %v1952 = vunpack.c.l.b16 %v1824
    %v1953 = vunpack.c.l.b16 %v1825
    %v1954 = vunpack.c.l.b16 %v1826
    %v1955 = vunpack.c.l.b16 %v1827
    %v1956 = vunpack.c.l.b16 %v1828
    %v1957 = vunpack.c.l.b16 %v1829
    %v1958 = vunpack.c.l.b16 %v1830
    %v1959 = vunpack.c.l.b16 %v1831
    %v1960 = vunpack.c.l.b16 %v1832
    %v1961 = vunpack.c.l.b16 %v1833
    %v1962 = vunpack.c.l.b16 %v1834
    %v1963 = vunpack.c.l.b16 %v1835
    %v1964 = vunpack.c.l.b16 %v1836
    %v1965 = vunpack.c.l.b16 %v1837
    %v1966 = vunpack.c.l.b16 %v1838
    %v1967 = vunpack.c.l.b16 %v1839
    %v1968 = vunpack.c.l.b16 %v1840
    %v1969 = vunpack.c.l.b16 %v1841
    %v1970 = vunpack.c.l.b16 %v1842
    %v1971 = vunpack.c.l.b16 %v1843
    %v1972 = vunpack.c.l.b16 %v1844
    %v1973 = vunpack.c.l.b16 %v1845
    %v1974 = vunpack.c.l.b16 %v1846
    %v1975 = vunpack.c.l.b16 %v1847
    %v1976 = vunpack.c.l.b16 %v1848
    %v1977 = vunpack.c.l.b16 %v1849
    %v1978 = vunpack.c.l.b16 %v1850
    %v1979 = vunpack.c.l.b16 %v1851
    %v1980 = vunpack.c.l.b16 %v1852
    %v1981 = vunpack.c.l.b16 %v1853
    %v1982 = vunpack.c.l.b16 %v1854
    %v1983 = vunpack.c.l.b16 %v1855
    %v1984 = vunpack.c.l.b16 %v1856
    %v1985 = vunpack.c.l.b16 %v1857
    %v1986 = vunpack.c.l.b16 %v1858
    %v1987 = vunpack.c.l.b16 %v1859
    %v1988 = vunpack.c.l.b16 %v1860
    %v1989 = vunpack.c.l.b16 %v1861
    %v1990 = vunpack.c.l.b16 %v1862
    %v1991 = vunpack.c.l.b16 %v1863
    %v1992 = vunpack.c.l.b16 %v1864
    %v1993 = vunpack.c.l.b16 %v1865
    %v1994 = vunpack.c.l.b16 %v1866
    %v1995 = vunpack.c.l.b16 %v1867
    %v1996 = vunpack.c.l.b16 %v1868
    %v1997 = vunpack.c.l.b16 %v1869
    %v1998 = vunpack.c.l.b16 %v1870
    %v1999 = vunpack.c.l.b16 %v1871
    %v2000 = vunpack.c.l.b16 %v1872
    %v2001 = vunpack.c.l.b16 %v1873
    %v2002 = vunpack.c.l.b16 %v1874
    %v2003 = vunpack.c.l.b16 %v1875
    %v2004 = vunpack.c.l.b16 %v1876
    %v2005 = vunpack.c.l.b16 %v1877
    %v2006 = vpack.c.b16 %v1943, %v1942
    %v2007 = vpack.c.b16 %v1945, %v1944
    %v2008 = vpack.c.b16 %v1947, %v1946
    %v2009 = vpack.c.b16 %v1949, %v1948
    %v2010 = vpack.c.b16 %v1951, %v1950
    %v2011 = vpack.c.b16 %v1953, %v1952
    %v2012 = vpack.c.b16 %v1955, %v1954
    %v2013 = vpack.c.b16 %v1957, %v1956
    %v2014 = vpack.c.b16 %v1959, %v1958
    %v2015 = vpack.c.b16 %v1961, %v1960
    %v2016 = vpack.c.b16 %v1963, %v1962
    %v2017 = vpack.c.b16 %v1965, %v1964
    %v2018 = vpack.c.b16 %v1967, %v1966
    %v2019 = vpack.c.b16 %v1969, %v1968
    %v2020 = vpack.c.b16 %v1971, %v1970
    %v2021 = vpack.c.b16 %v1973, %v1972
    %v2022 = vpack.c.b16 %v1975, %v1974
    %v2023 = vpack.c.b16 %v1977, %v1976
    %v2024 = vpack.c.b16 %v1979, %v1978
    %v2025 = vpack.c.b16 %v1981, %v1980
    %v2026 = vpack.c.b16 %v1983, %v1982
    %v2027 = vpack.c.b16 %v1985, %v1984
    %v2028 = vpack.c.b16 %v1987, %v1986
    %v2029 = vpack.c.b16 %v1989, %v1988
    %v2030 = vpack.c.b16 %v1991, %v1990
    %v2031 = vpack.c.b16 %v1993, %v1992
    %v2032 = vpack.c.b16 %v1995, %v1994
    %v2033 = vpack.c.b16 %v1997, %v1996
    %v2034 = vpack.c.b16 %v1999, %v1998
    %v2035 = vpack.c.b16 %v2001, %v2000
    %v2036 = vpack.c.b16 %v2003, %v2002
    %v2037 = vpack.c.b16 %v2005, %v2004
    %2070 = vmatpush.bf16.msra.mxu0 %v2013
    %2071 = vmatpush.bf16.msra.mxu0 %v2012
    %2072 = vmatpush.bf16.msra.mxu0 %v2011
    %2073 = vmatpush.bf16.msra.mxu0 %v2010
    %2074 = vmatpush.bf16.msra.mxu0 %v2009
    %2075 = vmatpush.bf16.msra.mxu0 %v2008
    %2076 = vmatpush.bf16.msra.mxu0 %v2007
    %2077 = vmatpush.bf16.msra.mxu0 %v2006
    %2078 = vmatmul.bf16.gmra.mxu0 %v1194
    %v2079 = vpop.f32.mrf.mxu0
    %v2080 = vadd.f32 0.0, %v2079
    %v2081 = vpop.f32.mrf.mxu0
    %2082 = vdwg.mxu0
    %2083 = vmatpush.bf16.msra.mxu0 %v2021
    %2084 = vmatpush.bf16.msra.mxu0 %v2020
    %2085 = vmatpush.bf16.msra.mxu0 %v2019
    %2086 = vmatpush.bf16.msra.mxu0 %v2018
    %2087 = vmatpush.bf16.msra.mxu0 %v2017
    %2088 = vmatpush.bf16.msra.mxu0 %v2016
    %2089 = vmatpush.bf16.msra.mxu0 %v2015
    %2090 = vmatpush.bf16.msra.mxu0 %v2014
    %2091 = vmatmul.bf16.gmra.mxu0 %v1195
    %v2092 = vpop.f32.mrf.mxu0
    %v2093 = vadd.f32 %v2080, %v2092
    %v2094 = vpop.f32.mrf.mxu0
    %2095 = vdwg.mxu0
    %2096 = vmatpush.bf16.msra.mxu0 %v2029
    %2097 = vmatpush.bf16.msra.mxu0 %v2028
    %2098 = vmatpush.bf16.msra.mxu0 %v2027
    %2099 = vmatpush.bf16.msra.mxu0 %v2026
    %2100 = vmatpush.bf16.msra.mxu0 %v2025
    %2101 = vmatpush.bf16.msra.mxu0 %v2024
    %2102 = vmatpush.bf16.msra.mxu0 %v2023
    %2103 = vmatpush.bf16.msra.mxu0 %v2022
    %2104 = vmatmul.bf16.gmra.mxu0 %v1196
    %v2105 = vpop.f32.mrf.mxu0
    %v2106 = vadd.f32 %v2093, %v2105
    %v2107 = vpop.f32.mrf.mxu0
    %2108 = vdwg.mxu0
    %2109 = vmatpush.bf16.msra.mxu0 %v2037
    %2110 = vmatpush.bf16.msra.mxu0 %v2036
    %2111 = vmatpush.bf16.msra.mxu0 %v2035
    %2112 = vmatpush.bf16.msra.mxu0 %v2034
    %2113 = vmatpush.bf16.msra.mxu0 %v2033
    %2114 = vmatpush.bf16.msra.mxu0 %v2032
    %2115 = vmatpush.bf16.msra.mxu0 %v2031
    %2116 = vmatpush.bf16.msra.mxu0 %v2030
    %2117 = vmatmul.bf16.gmra.mxu0 %v1197
    %v2118 = vpop.f32.mrf.mxu0
    %v2119 = vadd.f32 %v2106, %v2118
    %v2120 = vpop.f32.mrf.mxu0
    %2121 = vdwg.mxu0
    %v2122 = vadd.f32 %v1811, %v2119
    %v2123 = vld [vmem:[%s9] sm:$0x1]
    %v2125 = vperm.slane %v2123, 0
    %v2127 = vadd.f32 %v2122, %v2125
    %2128 = vst [vmem:[#allocation8] sm:$0xff] %v2127
    // Predicated region
    $region54: #{tpu_custom_call.1} parent=1 // pred_check
      _
    $region55: #{tpu_custom_call.1} parent=1 // pred_check_branch
      %2130 = sbr.rel (0) target = $region57
    $region56: #{tpu_custom_call.1} parent=1 // pred_region
      %2132 = vsyncadd [#allocation4], 0
      %s2134 = sshll.u32 [#allocation8], 4
      %s2135 = int_to_ptr.vmem [resolvable:$true] %s2134
      %s2136 = sshll.u32 %s10, 4
      %s2137 = int_to_ptr.hbm [resolvable:$true] %s2136
      %2139 = dma.vmem_to_hbm [thread:$0]  %s2135, 128, %s2137, [#allocation4]
    $region57: #{tpu_custom_call.1} parent=1 // pred_fallthru
      _
    // Predicated region
    $region58: #{tpu_custom_call.1} parent=1 // pred_check
      _
    $region59: #{tpu_custom_call.1} parent=1 // pred_check_branch
      %2141 = sbr.rel (0) target = $region61
    $region60: #{tpu_custom_call.1} parent=1 // pred_region
      %2143 = dma.done [#allocation4], 128
    $region61: #{tpu_custom_call.1} parent=1 // pred_fallthru
      _
    %2144 = vsyncpa [#allocation3], 1
    %2145 = vsyncpa [#allocation6], 1
    %2146 = vsyncpa [#allocation4], 1

</llo_original>
